<compile_context>
chip_gen: v5e
topology: v5e:2x2
jax: 0.10.0
libtpu: 0.0.40
codegen_flags: <defaults>
</compile_context>

<pallas_src>
import functools

import jax
import jax.numpy as jnp
from jax import lax
from jax.experimental import pallas as pl
from jax.experimental.pallas import tpu as pltpu

LEAKY_SLOPE = 0.01   # nn.LeakyReLU default negative_slope
LN_EPS = 1e-5        # nn.LayerNorm default eps


def _round_up(x, m):
    return (x + m - 1) // m * m


def _layer(h, w_ref, b_ref, g_ref, beta_ref, inv_n):
    """One Linear -> LayerNorm -> LeakyReLU stage on a (tm, *) row tile.

    Matmul runs on the MXU with bf16 operands and f32 accumulation.  LayerNorm
    uses the two-reduction E[x^2]-mean^2 form; pad lanes (zero W columns, zero
    b/gamma/beta) contribute 0 to both sums, so dividing by the true feature
    count `1/inv_n` is exact and pad lanes of the result are exactly 0.
    """
    acc = jnp.dot(h, w_ref[...], preferred_element_type=jnp.float32)
    acc = acc + b_ref[...]                               # (tm, Np) + (1, Np)

    s1 = jnp.sum(acc, axis=-1, keepdims=True)
    s2 = jnp.sum(acc * acc, axis=-1, keepdims=True)
    mean = s1 * inv_n
    var = s2 * inv_n - mean * mean
    y = (acc - mean) * lax.rsqrt(var + LN_EPS) * g_ref[...] + beta_ref[...]

    # LeakyReLU (slope < 1 => max form). Dropout is identity in eval mode.
    # TODO(synk): training-mode dropout (pltpu.prng_random_bits mask) not implemented.
    return jnp.maximum(y, LEAKY_SLOPE * y)


def _make_mlp_kernel(inv_dims):
    n_layers = len(inv_dims)

    def kernel(*refs):
        x_ref, o_ref = refs[0], refs[-1]
        h = x_ref[...].astype(jnp.bfloat16)              # cast row tile in-kernel
        for l in range(n_layers):
            w, b, g, beta = refs[1 + 4 * l: 1 + 4 * (l + 1)]
            y = _layer(h, w, b, g, beta, inv_dims[l])
            if l < n_layers - 1:
                h = y.astype(jnp.bfloat16)               # bf16 inter-layer hand-off
            else:
                o_ref[...] = y.astype(o_ref.dtype)
    return kernel


def prepare_params(params):
    """One-time parameter prep (do this OUTSIDE the per-call forward path).

    Casts weights to bf16, reshapes bias/gamma/beta to (1, n), and zero-pads
    every feature dimension up to a multiple of 128 so the kernel always sees
    lane-dense tiles.  Returns (prepared_pytree, true_output_dims).
    """
    prepared = []
    true_dims = []
    prev_pad = _round_up(params[0][0].shape[0], 128)     # padded input width
    for (w, b, g, beta) in params:
        d_in, d_out = w.shape
        d_out_pad = _round_up(d_out, 128)
        wp = jnp.pad(w.astype(jnp.bfloat16),
                     ((0, prev_pad - d_in), (0, d_out_pad - d_out)))
        bp = jnp.pad(b.astype(jnp.float32), (0, d_out_pad - d_out)).reshape(1, d_out_pad)
        gp = jnp.pad(g.astype(jnp.float32), (0, d_out_pad - d_out)).reshape(1, d_out_pad)
        betap = jnp.pad(beta.astype(jnp.float32), (0, d_out_pad - d_out)).reshape(1, d_out_pad)
        prepared.append((wp, bp, gp, betap))
        true_dims.append(d_out)
        prev_pad = d_out_pad
    return prepared, tuple(true_dims)


@functools.partial(jax.jit, static_argnames=("true_dims", "tm", "out_dtype"))
def mlp_forward(x, prepared_params, *, true_dims, tm=256, out_dtype=jnp.float32):
    """x: (M, input_dim) f32; prepared_params/true_dims from prepare_params().

    Returns (M, output_dim) in out_dtype.  tm=256 is a good default on
    v6e/v7x at large batch; the tile automatically shrinks so that the grid
    has >= 2 steps (keeps both v7x TensorCores busy at small batch).
    """
    M, K = x.shape
    n_layers = len(prepared_params)
    Kp = prepared_params[0][0].shape[0]
    out_pad = prepared_params[-1][0].shape[1]
    out_true = true_dims[-1]

    # Row tile: multiple of 16 (bf16 sublane packing), capped so the grid has
    # at least two steps whenever M allows (v7x megacore sharding).
    tm_req = max(16, _round_up(tm, 16))
    tm_two = max(16, _round_up(pl.cdiv(M, 2), 16))
    tm_eff = min(tm_req, tm_two)
    Mp = _round_up(M, tm_eff)

    x_p = x
    if Kp != K:
        x_p = jnp.pad(x_p, ((0, 0), (0, Kp - K)))
    if Mp != M:
        x_p = jnp.pad(x_p, ((0, Mp - M), (0, 0)))

    operands = [x_p]
    in_specs = [pl.BlockSpec((tm_eff, Kp), lambda i: (i, 0))]      # x row tile (f32)
    for (w, b, g, beta) in prepared_params:
        n = w.shape[1]
        operands += [w, b, g, beta]
        in_specs += [
            pl.BlockSpec(w.shape, lambda i: (0, 0)),   # full weight, VMEM-resident
            pl.BlockSpec((1, n), lambda i: (0, 0)),    # bias
            pl.BlockSpec((1, n), lambda i: (0, 0)),    # LN gamma
            pl.BlockSpec((1, n), lambda i: (0, 0)),    # LN beta
        ]

    inv_dims = tuple(1.0 / float(d) for d in true_dims)

    out = pl.pallas_call(
        _make_mlp_kernel(inv_dims),
        out_shape=jax.ShapeDtypeStruct((Mp, out_pad), out_dtype),
        grid_spec=pltpu.PrefetchScalarGridSpec(
            num_scalar_prefetch=0,
            grid=(Mp // tm_eff,),
            in_specs=in_specs,
            out_specs=pl.BlockSpec((tm_eff, out_pad), lambda i: (i, 0)),
        ),
        compiler_params=pltpu.CompilerParams(
            dimension_semantics=("parallel",),          # megacore-shardable
            vmem_limit_bytes=48 * 1024 * 1024,          # headroom for big tm; < v7x 64 MiB
        ),
    )(*operands)

    if Mp != M or out_pad != out_true:
        out = out[:M, :out_true]
    return out


def init_mlp_params(key, input_dim=128, hidden_dims=(256, 512), output_dim=978):
    """Deterministic synthetic params matching the PyTorch module's shapes."""
    dims = [input_dim] + list(hidden_dims) + [output_dim]
    params = []
    for i in range(len(dims) - 1):
        d_in, d_out = dims[i], dims[i + 1]
        key, kw, kb = jax.random.split(key, 3)
        bound = 1.0 / jnp.sqrt(d_in)
        w = jax.random.uniform(kw, (d_in, d_out), jnp.float32, -bound, bound)
        b = jax.random.uniform(kb, (d_out,), jnp.float32, -bound, bound)
        gamma = jnp.ones((d_out,), jnp.float32)
        beta = jnp.zeros((d_out,), jnp.float32)
        params.append((w, b, gamma, beta))
    return params


def mlp_forward_ref(x, params):
    """Pure-JAX reference mirroring the kernel's numeric path
    (bf16 matmul operands, f32 epilogue, bf16 inter-layer hand-off)."""
    h = x.astype(jnp.bfloat16)
    for idx, (w, b, g, beta) in enumerate(params):
        acc = jnp.dot(h, w.astype(jnp.bfloat16),
                      preferred_element_type=jnp.float32) + b
        mean = jnp.mean(acc, axis=-1, keepdims=True)
        var = jnp.mean(acc * acc, axis=-1, keepdims=True) - mean * mean
        y = (acc - mean) * lax.rsqrt(var + LN_EPS) * g + beta
        y = jnp.maximum(y, LEAKY_SLOPE * y)
        h = y.astype(jnp.bfloat16) if idx < len(params) - 1 else y
    return h


if __name__ == "__main__":
    key = jax.random.PRNGKey(0)
    key, kx, kx2 = jax.random.split(key, 3)

    input_dim, hidden_dims, output_dim = 128, (256, 512), 978
    params = init_mlp_params(key, input_dim, hidden_dims, output_dim)
    prepared, true_dims = prepare_params(params)          # one-time, outside jit path

    # Small batch (not a multiple of 16): exercises row padding, the 978->1024
    # lane padding of the last layer, and the >=2-grid-step rule (grid of 2).
    batch = 24
    x = jax.random.normal(kx, (batch, input_dim), jnp.float32)
    ref = mlp_forward_ref(x, params)

    out = jax.block_until_ready(mlp_forward(x, prepared, true_dims=true_dims))
    assert out.shape == (batch, output_dim), out.shape
    assert out.dtype == jnp.float32, out.dtype
    assert jnp.allclose(out, ref, atol=5e-3, rtol=5e-3), \
        float(jnp.max(jnp.abs(out - ref)))

    # Larger batch with a smaller tile: multi-tile grid + padded-tail rows.
    batch2 = 200
    x2 = jax.random.normal(kx2, (batch2, input_dim), jnp.float32)
    ref2 = mlp_forward_ref(x2, params)
    out2 = jax.block_until_ready(mlp_forward(x2, prepared, true_dims=true_dims, tm=64))
    assert out2.shape == (batch2, output_dim), out2.shape
    assert jnp.allclose(out2, ref2, atol=5e-3, rtol=5e-3), \
        float(jnp.max(jnp.abs(out2 - ref2)))

    # bf16 output path (optional HBM-writeback saving for large-batch v6e).
    out_bf16 = jax.block_until_ready(
        mlp_forward(x, prepared, true_dims=true_dims, out_dtype=jnp.bfloat16))
    assert out_bf16.dtype == jnp.bfloat16
    assert jnp.allclose(out_bf16.astype(jnp.float32), ref, atol=5e-2, rtol=5e-2)

    print("KERNEL_OK")
</pallas_src>

<mosaic_0001>
module attributes {stable_mosaic.version = 11 : i64} {
  func.func @kernel(%arg0: i32, %arg1: memref<16x128xf32, #tpu.memory_space<vmem>>, %arg2: memref<128x256xbf16, #tpu.memory_space<vmem>>, %arg3: memref<1x256xf32, #tpu.memory_space<vmem>>, %arg4: memref<1x256xf32, #tpu.memory_space<vmem>>, %arg5: memref<1x256xf32, #tpu.memory_space<vmem>>, %arg6: memref<256x512xbf16, #tpu.memory_space<vmem>>, %arg7: memref<1x512xf32, #tpu.memory_space<vmem>>, %arg8: memref<1x512xf32, #tpu.memory_space<vmem>>, %arg9: memref<1x512xf32, #tpu.memory_space<vmem>>, %arg10: memref<512x1024xbf16, #tpu.memory_space<vmem>>, %arg11: memref<1x1024xf32, #tpu.memory_space<vmem>>, %arg12: memref<1x1024xf32, #tpu.memory_space<vmem>>, %arg13: memref<1x1024xf32, #tpu.memory_space<vmem>>, %arg14: memref<16x1024xf32, #tpu.memory_space<vmem>>) attributes {dimension_semantics = [#tpu.dimension_semantics<parallel>], iteration_bounds = array<i64: 2>, scalar_prefetch = 0 : i64, scratch_operands = 0 : i64, tpu.core_type = #tpu.core_type<tc>, window_params = [{transform_indices = @transform_0, window_bounds = array<i64: 16, 128>}, {pipeline_mode = #tpu.pipeline_mode<synchronous>, transform_indices = @transform_1, window_bounds = array<i64: 128, 256>}, {pipeline_mode = #tpu.pipeline_mode<synchronous>, transform_indices = @transform_2, window_bounds = array<i64: 1, 256>}, {pipeline_mode = #tpu.pipeline_mode<synchronous>, transform_indices = @transform_3, window_bounds = array<i64: 1, 256>}, {pipeline_mode = #tpu.pipeline_mode<synchronous>, transform_indices = @transform_4, window_bounds = array<i64: 1, 256>}, {pipeline_mode = #tpu.pipeline_mode<synchronous>, transform_indices = @transform_5, window_bounds = array<i64: 256, 512>}, {pipeline_mode = #tpu.pipeline_mode<synchronous>, transform_indices = @transform_6, window_bounds = array<i64: 1, 512>}, {pipeline_mode = #tpu.pipeline_mode<synchronous>, transform_indices = @transform_7, window_bounds = array<i64: 1, 512>}, {pipeline_mode = #tpu.pipeline_mode<synchronous>, transform_indices = @transform_8, window_bounds = array<i64: 1, 512>}, {pipeline_mode = #tpu.pipeline_mode<synchronous>, transform_indices = @transform_9, window_bounds = array<i64: 512, 1024>}, {pipeline_mode = #tpu.pipeline_mode<synchronous>, transform_indices = @transform_10, window_bounds = array<i64: 1, 1024>}, {pipeline_mode = #tpu.pipeline_mode<synchronous>, transform_indices = @transform_11, window_bounds = array<i64: 1, 1024>}, {pipeline_mode = #tpu.pipeline_mode<synchronous>, transform_indices = @transform_12, window_bounds = array<i64: 1, 1024>}, {transform_indices = @transform_13, window_bounds = array<i64: 16, 1024>}]} {
    %c0 = arith.constant 0 : index
    %c0_0 = arith.constant 0 : index
    %0 = vector.load %arg1[%c0, %c0_0] : memref<16x128xf32, #tpu.memory_space<vmem>>, vector<16x128xf32>
    %1 = arith.truncf %0 : vector<16x128xf32> to vector<16x128xbf16>
    %c0_1 = arith.constant 0 : index
    %c0_2 = arith.constant 0 : index
    %2 = vector.load %arg2[%c0_1, %c0_2] : memref<128x256xbf16, #tpu.memory_space<vmem>>, vector<128x256xbf16>
    %cst = arith.constant dense<0.000000e+00> : vector<16x256xf32>
    %3 = tpu.matmul %1, %2, %cst {dimension_numbers = #tpu.dot_dimension_numbers<[1], [0], [0], [1], [0, 0, 1, 1], [], []>} : vector<16x128xbf16>, vector<128x256xbf16>, vector<16x256xf32> -> vector<16x256xf32>
    %c0_3 = arith.constant 0 : index
    %c0_4 = arith.constant 0 : index
    %4 = vector.load %arg3[%c0_3, %c0_4] : memref<1x256xf32, #tpu.memory_space<vmem>>, vector<1x256xf32>
    %5 = vector.broadcast %4 : vector<1x256xf32> to vector<16x256xf32>
    %6 = arith.addf %3, %5 : vector<16x256xf32>
    %cst_5 = arith.constant dense<0.000000e+00> : vector<16xf32>
    %7 = vector.multi_reduction <add>, %6, %cst_5 [1] : vector<16x256xf32> to vector<16xf32>
    %8 = vector.shape_cast %7 : vector<16xf32> to vector<16x1xf32>
    %9 = arith.mulf %6, %6 : vector<16x256xf32>
    %cst_6 = arith.constant dense<0.000000e+00> : vector<16xf32>
    %10 = vector.multi_reduction <add>, %9, %cst_6 [1] : vector<16x256xf32> to vector<16xf32>
    %11 = vector.shape_cast %10 : vector<16xf32> to vector<16x1xf32>
    %cst_7 = arith.constant 3.906250e-03 : f32
    %12 = vector.broadcast %cst_7 : f32 to vector<16x1xf32>
    %13 = arith.mulf %8, %12 : vector<16x1xf32>
    %cst_8 = arith.constant 3.906250e-03 : f32
    %14 = vector.broadcast %cst_8 : f32 to vector<16x1xf32>
    %15 = arith.mulf %11, %14 : vector<16x1xf32>
    %16 = arith.mulf %13, %13 : vector<16x1xf32>
    %17 = arith.subf %15, %16 : vector<16x1xf32>
    %18 = vector.broadcast %13 : vector<16x1xf32> to vector<16x256xf32>
    %19 = arith.subf %6, %18 : vector<16x256xf32>
    %cst_9 = arith.constant 9.99999974E-6 : f32
    %20 = vector.broadcast %cst_9 : f32 to vector<16x1xf32>
    %21 = arith.addf %17, %20 : vector<16x1xf32>
    %22 = math.rsqrt %21 : vector<16x1xf32>
    %23 = vector.broadcast %22 : vector<16x1xf32> to vector<16x256xf32>
    %24 = arith.mulf %19, %23 : vector<16x256xf32>
    %c0_10 = arith.constant 0 : index
    %c0_11 = arith.constant 0 : index
    %25 = vector.load %arg4[%c0_10, %c0_11] : memref<1x256xf32, #tpu.memory_space<vmem>>, vector<1x256xf32>
    %26 = vector.broadcast %25 : vector<1x256xf32> to vector<16x256xf32>
    %27 = arith.mulf %24, %26 : vector<16x256xf32>
    %c0_12 = arith.constant 0 : index
    %c0_13 = arith.constant 0 : index
    %28 = vector.load %arg5[%c0_12, %c0_13] : memref<1x256xf32, #tpu.memory_space<vmem>>, vector<1x256xf32>
    %29 = vector.broadcast %28 : vector<1x256xf32> to vector<16x256xf32>
    %30 = arith.addf %27, %29 : vector<16x256xf32>
    %cst_14 = arith.constant 0.00999999977 : f32
    %31 = vector.broadcast %cst_14 : f32 to vector<16x256xf32>
    %32 = arith.mulf %31, %30 : vector<16x256xf32>
    %33 = arith.maximumf %30, %32 : vector<16x256xf32>
    %34 = arith.truncf %33 : vector<16x256xf32> to vector<16x256xbf16>
    %c0_15 = arith.constant 0 : index
    %c0_16 = arith.constant 0 : index
    %35 = vector.load %arg6[%c0_15, %c0_16] : memref<256x512xbf16, #tpu.memory_space<vmem>>, vector<256x512xbf16>
    %cst_17 = arith.constant dense<0.000000e+00> : vector<16x512xf32>
    %36 = tpu.matmul %34, %35, %cst_17 {dimension_numbers = #tpu.dot_dimension_numbers<[1], [0], [0], [1], [0, 0, 1, 1], [], []>} : vector<16x256xbf16>, vector<256x512xbf16>, vector<16x512xf32> -> vector<16x512xf32>
    %c0_18 = arith.constant 0 : index
    %c0_19 = arith.constant 0 : index
    %37 = vector.load %arg7[%c0_18, %c0_19] : memref<1x512xf32, #tpu.memory_space<vmem>>, vector<1x512xf32>
    %38 = vector.broadcast %37 : vector<1x512xf32> to vector<16x512xf32>
    %39 = arith.addf %36, %38 : vector<16x512xf32>
    %cst_20 = arith.constant dense<0.000000e+00> : vector<16xf32>
    %40 = vector.multi_reduction <add>, %39, %cst_20 [1] : vector<16x512xf32> to vector<16xf32>
    %41 = vector.shape_cast %40 : vector<16xf32> to vector<16x1xf32>
    %42 = arith.mulf %39, %39 : vector<16x512xf32>
    %cst_21 = arith.constant dense<0.000000e+00> : vector<16xf32>
    %43 = vector.multi_reduction <add>, %42, %cst_21 [1] : vector<16x512xf32> to vector<16xf32>
    %44 = vector.shape_cast %43 : vector<16xf32> to vector<16x1xf32>
    %cst_22 = arith.constant 0.001953125 : f32
    %45 = vector.broadcast %cst_22 : f32 to vector<16x1xf32>
    %46 = arith.mulf %41, %45 : vector<16x1xf32>
    %cst_23 = arith.constant 0.001953125 : f32
    %47 = vector.broadcast %cst_23 : f32 to vector<16x1xf32>
    %48 = arith.mulf %44, %47 : vector<16x1xf32>
    %49 = arith.mulf %46, %46 : vector<16x1xf32>
    %50 = arith.subf %48, %49 : vector<16x1xf32>
    %51 = vector.broadcast %46 : vector<16x1xf32> to vector<16x512xf32>
    %52 = arith.subf %39, %51 : vector<16x512xf32>
    %cst_24 = arith.constant 9.99999974E-6 : f32
    %53 = vector.broadcast %cst_24 : f32 to vector<16x1xf32>
    %54 = arith.addf %50, %53 : vector<16x1xf32>
    %55 = math.rsqrt %54 : vector<16x1xf32>
    %56 = vector.broadcast %55 : vector<16x1xf32> to vector<16x512xf32>
    %57 = arith.mulf %52, %56 : vector<16x512xf32>
    %c0_25 = arith.constant 0 : index
    %c0_26 = arith.constant 0 : index
    %58 = vector.load %arg8[%c0_25, %c0_26] : memref<1x512xf32, #tpu.memory_space<vmem>>, vector<1x512xf32>
    %59 = vector.broadcast %58 : vector<1x512xf32> to vector<16x512xf32>
    %60 = arith.mulf %57, %59 : vector<16x512xf32>
    %c0_27 = arith.constant 0 : index
    %c0_28 = arith.constant 0 : index
    %61 = vector.load %arg9[%c0_27, %c0_28] : memref<1x512xf32, #tpu.memory_space<vmem>>, vector<1x512xf32>
    %62 = vector.broadcast %61 : vector<1x512xf32> to vector<16x512xf32>
    %63 = arith.addf %60, %62 : vector<16x512xf32>
    %cst_29 = arith.constant 0.00999999977 : f32
    %64 = vector.broadcast %cst_29 : f32 to vector<16x512xf32>
    %65 = arith.mulf %64, %63 : vector<16x512xf32>
    %66 = arith.maximumf %63, %65 : vector<16x512xf32>
    %67 = arith.truncf %66 : vector<16x512xf32> to vector<16x512xbf16>
    %c0_30 = arith.constant 0 : index
    %c0_31 = arith.constant 0 : index
    %68 = vector.load %arg10[%c0_30, %c0_31] : memref<512x1024xbf16, #tpu.memory_space<vmem>>, vector<512x1024xbf16>
    %cst_32 = arith.constant dense<0.000000e+00> : vector<16x1024xf32>
    %69 = tpu.matmul %67, %68, %cst_32 {dimension_numbers = #tpu.dot_dimension_numbers<[1], [0], [0], [1], [0, 0, 1, 1], [], []>} : vector<16x512xbf16>, vector<512x1024xbf16>, vector<16x1024xf32> -> vector<16x1024xf32>
    %c0_33 = arith.constant 0 : index
    %c0_34 = arith.constant 0 : index
    %70 = vector.load %arg11[%c0_33, %c0_34] : memref<1x1024xf32, #tpu.memory_space<vmem>>, vector<1x1024xf32>
    %71 = vector.broadcast %70 : vector<1x1024xf32> to vector<16x1024xf32>
    %72 = arith.addf %69, %71 : vector<16x1024xf32>
    %cst_35 = arith.constant dense<0.000000e+00> : vector<16xf32>
    %73 = vector.multi_reduction <add>, %72, %cst_35 [1] : vector<16x1024xf32> to vector<16xf32>
    %74 = vector.shape_cast %73 : vector<16xf32> to vector<16x1xf32>
    %75 = arith.mulf %72, %72 : vector<16x1024xf32>
    %cst_36 = arith.constant dense<0.000000e+00> : vector<16xf32>
    %76 = vector.multi_reduction <add>, %75, %cst_36 [1] : vector<16x1024xf32> to vector<16xf32>
    %77 = vector.shape_cast %76 : vector<16xf32> to vector<16x1xf32>
    %cst_37 = arith.constant 0.00102249486 : f32
    %78 = vector.broadcast %cst_37 : f32 to vector<16x1xf32>
    %79 = arith.mulf %74, %78 : vector<16x1xf32>
    %cst_38 = arith.constant 0.00102249486 : f32
    %80 = vector.broadcast %cst_38 : f32 to vector<16x1xf32>
    %81 = arith.mulf %77, %80 : vector<16x1xf32>
    %82 = arith.mulf %79, %79 : vector<16x1xf32>
    %83 = arith.subf %81, %82 : vector<16x1xf32>
    %84 = vector.broadcast %79 : vector<16x1xf32> to vector<16x1024xf32>
    %85 = arith.subf %72, %84 : vector<16x1024xf32>
    %cst_39 = arith.constant 9.99999974E-6 : f32
    %86 = vector.broadcast %cst_39 : f32 to vector<16x1xf32>
    %87 = arith.addf %83, %86 : vector<16x1xf32>
    %88 = math.rsqrt %87 : vector<16x1xf32>
    %89 = vector.broadcast %88 : vector<16x1xf32> to vector<16x1024xf32>
    %90 = arith.mulf %85, %89 : vector<16x1024xf32>
    %c0_40 = arith.constant 0 : index
    %c0_41 = arith.constant 0 : index
    %91 = vector.load %arg12[%c0_40, %c0_41] : memref<1x1024xf32, #tpu.memory_space<vmem>>, vector<1x1024xf32>
    %92 = vector.broadcast %91 : vector<1x1024xf32> to vector<16x1024xf32>
    %93 = arith.mulf %90, %92 : vector<16x1024xf32>
    %c0_42 = arith.constant 0 : index
    %c0_43 = arith.constant 0 : index
    %94 = vector.load %arg13[%c0_42, %c0_43] : memref<1x1024xf32, #tpu.memory_space<vmem>>, vector<1x1024xf32>
    %95 = vector.broadcast %94 : vector<1x1024xf32> to vector<16x1024xf32>
    %96 = arith.addf %93, %95 : vector<16x1024xf32>
    %cst_44 = arith.constant 0.00999999977 : f32
    %97 = vector.broadcast %cst_44 : f32 to vector<16x1024xf32>
    %98 = arith.mulf %97, %96 : vector<16x1024xf32>
    %99 = arith.maximumf %96, %98 : vector<16x1024xf32>
    %c0_45 = arith.constant 0 : index
    %c0_46 = arith.constant 0 : index
    %100 = vector.load %arg14[%c0_45, %c0_46] : memref<16x1024xf32, #tpu.memory_space<vmem>>, vector<16x1024xf32>
    tpu.vector_store %arg14[%c0_45, %c0_46], %99 {strides = array<i32>} : memref<16x1024xf32, #tpu.memory_space<vmem>>, vector<16x1024xf32>,
    return
  }
  func.func @transform_0(%arg0: i32) -> (i32, i32) {
    %c0_i32 = arith.constant 0 : i32
    %c0_i32_0 = arith.constant 0 : i32
    return %arg0, %c0_i32 : i32, i32
  }
  func.func @transform_1(%arg0: i32) -> (i32, i32) {
    %c0_i32 = arith.constant 0 : i32
    %c0_i32_0 = arith.constant 0 : i32
    %c0_i32_1 = arith.constant 0 : i32
    return %c0_i32, %c0_i32_0 : i32, i32
  }
  func.func @transform_2(%arg0: i32) -> (i32, i32) {
    %c0_i32 = arith.constant 0 : i32
    %c0_i32_0 = arith.constant 0 : i32
    %c0_i32_1 = arith.constant 0 : i32
    return %c0_i32, %c0_i32_0 : i32, i32
  }
  func.func @transform_3(%arg0: i32) -> (i32, i32) {
    %c0_i32 = arith.constant 0 : i32
    %c0_i32_0 = arith.constant 0 : i32
    %c0_i32_1 = arith.constant 0 : i32
    return %c0_i32, %c0_i32_0 : i32, i32
  }
  func.func @transform_4(%arg0: i32) -> (i32, i32) {
    %c0_i32 = arith.constant 0 : i32
    %c0_i32_0 = arith.constant 0 : i32
    %c0_i32_1 = arith.constant 0 : i32
    return %c0_i32, %c0_i32_0 : i32, i32
  }
  func.func @transform_5(%arg0: i32) -> (i32, i32) {
    %c0_i32 = arith.constant 0 : i32
    %c0_i32_0 = arith.constant 0 : i32
    %c0_i32_1 = arith.constant 0 : i32
    return %c0_i32, %c0_i32_0 : i32, i32
  }
  func.func @transform_6(%arg0: i32) -> (i32, i32) {
    %c0_i32 = arith.constant 0 : i32
    %c0_i32_0 = arith.constant 0 : i32
    %c0_i32_1 = arith.constant 0 : i32
    return %c0_i32, %c0_i32_0 : i32, i32
  }
  func.func @transform_7(%arg0: i32) -> (i32, i32) {
    %c0_i32 = arith.constant 0 : i32
    %c0_i32_0 = arith.constant 0 : i32
    %c0_i32_1 = arith.constant 0 : i32
    return %c0_i32, %c0_i32_0 : i32, i32
  }
  func.func @transform_8(%arg0: i32) -> (i32, i32) {
    %c0_i32 = arith.constant 0 : i32
    %c0_i32_0 = arith.constant 0 : i32
    %c0_i32_1 = arith.constant 0 : i32
    return %c0_i32, %c0_i32_0 : i32, i32
  }
  func.func @transform_9(%arg0: i32) -> (i32, i32) {
    %c0_i32 = arith.constant 0 : i32
    %c0_i32_0 = arith.constant 0 : i32
    %c0_i32_1 = arith.constant 0 : i32
    return %c0_i32, %c0_i32_0 : i32, i32
  }
  func.func @transform_10(%arg0: i32) -> (i32, i32) {
    %c0_i32 = arith.constant 0 : i32
    %c0_i32_0 = arith.constant 0 : i32
    %c0_i32_1 = arith.constant 0 : i32
    return %c0_i32, %c0_i32_0 : i32, i32
  }
  func.func @transform_11(%arg0: i32) -> (i32, i32) {
    %c0_i32 = arith.constant 0 : i32
    %c0_i32_0 = arith.constant 0 : i32
    %c0_i32_1 = arith.constant 0 : i32
    return %c0_i32, %c0_i32_0 : i32, i32
  }
  func.func @transform_12(%arg0: i32) -> (i32, i32) {
    %c0_i32 = arith.constant 0 : i32
    %c0_i32_0 = arith.constant 0 : i32
    %c0_i32_1 = arith.constant 0 : i32
    return %c0_i32, %c0_i32_0 : i32, i32
  }
  func.func @transform_13(%arg0: i32) -> (i32, i32) {
    %c0_i32 = arith.constant 0 : i32
    %c0_i32_0 = arith.constant 0 : i32
    return %arg0, %c0_i32 : i32, i32
  }
}

</mosaic_0001>

<llo_original>
// kernel: mlp_forward.1
$region0: #{mlp_forward.1}
  #allocation0 [shape = 'u32[]', space=smem, size = 0x4, offset = 0x4, fixed_abs, tag = 'smem constant byte address 0x4 - core index']
  #allocation1 [shape = 'u32[72,128]{1,0:T(1,128)}', space=vmem, size = 0x9000, scoped, tag = 'internal scratch']
  %s0 = inlined_call_operand.vmem [shape: f32[32,128], index: 0, kind: input, shape index: {}]
  %s1 = inlined_call_operand.hbm [shape: bf16[128,256], index: 1, kind: input, shape index: {}]
  %s2 = inlined_call_operand.vmem [shape: f32[1,256], index: 2, kind: input, shape index: {}]
  %s3 = inlined_call_operand.vmem [shape: f32[1,256], index: 3, kind: input, shape index: {}]
  %s4 = inlined_call_operand.vmem [shape: f32[1,256], index: 4, kind: input, shape index: {}]
  %s5 = inlined_call_operand.hbm [shape: bf16[256,512], index: 5, kind: input, shape index: {}]
  %s6 = inlined_call_operand.vmem [shape: f32[1,512], index: 6, kind: input, shape index: {}]
  %s7 = inlined_call_operand.vmem [shape: f32[1,512], index: 7, kind: input, shape index: {}]
  %s8 = inlined_call_operand.vmem [shape: f32[1,512], index: 8, kind: input, shape index: {}]
  %s9 = inlined_call_operand.hbm [shape: bf16[512,1024], index: 9, kind: input, shape index: {}]
  %s10 = inlined_call_operand.vmem [shape: f32[1,1024], index: 10, kind: input, shape index: {}]
  %s11 = inlined_call_operand.vmem [shape: f32[1,1024], index: 11, kind: input, shape index: {}]
  %s12 = inlined_call_operand.vmem [shape: f32[1,1024], index: 12, kind: input, shape index: {}]
  %s13 = inlined_call_operand.vmem [shape: f32[32,1024], index: 13, kind: output, shape index: {}]
  %s14 = sld [smem:[#allocation0]]
  $region97: #{mlp_forward.1} parent=0
    _
  %s16 = ssub.s32 1, %s14
  %s17 = scalar_select 0, %s16, %s14
  $region1: #{mlp_forward.1} parent=0
    #allocation2 [shape = 'u8[65536]{0}', space=vmem, size = 0x10000, scoped, tag = 'input window, operand 1, single buffered']
    #allocation3 [shape = 's32[2]{0}', space=sflag, size = 0x8, scoped, tag = 'scoped memory for mlp_forward.1']
    #allocation4 [shape = 'u8[262144]{0}', space=vmem, size = 0x40000, scoped, tag = 'input window, operand 5, single buffered']
    #allocation5 [shape = 's32[1]{0}', space=sflag, size = 0x4, scoped, tag = 'scoped memory for mlp_forward.1']
    #allocation6 [shape = 'u8[1048576]{0}', space=vmem, size = 0x100000, scoped, tag = 'input window, operand 9, single buffered']
    %18 = vsyncpa [#allocation3], 0
    %19 = vsyncpa [#allocation5], 0
    loop: start=0, step=1, limit=4
    $region2: #{mlp_forward.1} parent=1 // loop_pre_header
      _
    $region3: #{mlp_forward.1} parent=1 // loop_header
      %s21 = sphi 0, %s25
      %p22 = scmp.ge.s32.totalorder %s21, 4
      %s31 = sphi 0, %s33
      %s34 = sphi 0, %s31
      %s35 = sphi 0, %s34
      %s51 = sphi 0, %s35
      %s55 = sphi 0, %s55
      %s57 = sphi 0, %s55
      %s58 = sphi 0, %s57
      %s72 = sphi 0, %s58
      %s76 = sphi 0, %s76
      %s78 = sphi 0, %s76
      %s79 = sphi 0, %s78
      %s93 = sphi 0, %s79
      %s97 = sphi 0, %s97
      %s99 = sphi 0, %s97
      %s100 = sphi 0, %s99
      %s114 = sphi 0, %s100
      %s118 = sphi 0, %s118
      %s120 = sphi 0, %s118
      %s121 = sphi 0, %s120
      %s135 = sphi 0, %s121
      %s139 = sphi 0, %s139
      %s141 = sphi 0, %s139
      %s142 = sphi 0, %s141
      %s156 = sphi 0, %s142
      %s160 = sphi 0, %s160
      %s162 = sphi 0, %s160
      %s163 = sphi 0, %s162
      %s177 = sphi 0, %s163
      %s181 = sphi 0, %s181
      %s183 = sphi 0, %s181
      %s184 = sphi 0, %s183
      %s198 = sphi 0, %s184
      %s202 = sphi 0, %s202
      %s204 = sphi 0, %s202
      %s205 = sphi 0, %s204
      %s219 = sphi 0, %s205
      %s223 = sphi 0, %s223
      %s225 = sphi 0, %s223
      %s226 = sphi 0, %s225
      %s240 = sphi 0, %s226
      %s244 = sphi 0, %s244
      %s246 = sphi 0, %s244
      %s247 = sphi 0, %s246
      %s261 = sphi 0, %s247
      %s265 = sphi 0, %s265
      %s267 = sphi 0, %s265
      %s268 = sphi 0, %s267
      %s282 = sphi 0, %s268
      %s286 = sphi 0, %s286
      %s288 = sphi 0, %s286
      %s289 = sphi 0, %s288
      %s303 = sphi 0, %s289
      %s309 = sphi 0, %s311
      %s312 = sphi 0, %s309
      %s313 = sphi 0, %s312
      %s329 = sphi 0, %s313
    $region4: #{mlp_forward.1} parent=1 // loop_header_branch
      %24 = sbr.rel (%p22) target = $region8
    $region5: #{mlp_forward.1} parent=1 // loop_body
      %s26 = ssub.s32 %s21, 1
      %s27 = ssub.s32 %s21, 2
      %s28 = sadd.s32 %s21, 1
      %s29 = ssub.s32 %s21, %s28
      %p30 = scmp.eq.s32.totalorder %s29, 0
      %s32 = sadd.s32 %s31, 1
      %s33 = scalar_select %p30, %s31, %s32
      %p36 = pneg %p30
      %p37 = scmp.eq.s32.totalorder %s21, 1
      %p38 = por %p36, %p37
      %p39 = scmp.ne.s32.totalorder %s31, %s34
      %p40 = scmp.eq.s32.totalorder %s21, 0
      %p41 = por %p39, %p40
      %p42 = scmp.ne.s32.totalorder %s31, %s34
      %p43 = scmp.eq.s32.totalorder %s26, 1
      %p44 = por %p42, %p43
      %p45 = scmp.ne.s32.totalorder %s34, %s35
      %p46 = scmp.eq.s32.totalorder %s26, 0
      %p47 = por %p45, %p46
      %p48 = scmp.ne.s32.totalorder %s34, %s35
      %p49 = scmp.eq.s32.totalorder %s27, 1
      %p50 = por %p48, %p49
      %p52 = scmp.ne.s32.totalorder %s35, %s51
      %p53 = scmp.eq.s32.totalorder %s27, 0
      %p54 = por %p52, %p53
      %s56 = sadd.s32 %s55, 1
      %p59 = scmp.eq.s32.totalorder %s21, 1
      %p60 = scmp.ne.s32.totalorder %s55, %s57
      %p61 = scmp.eq.s32.totalorder %s21, 0
      %p62 = por %p60, %p61
      %p63 = scmp.ne.s32.totalorder %s55, %s57
      %p64 = scmp.eq.s32.totalorder %s26, 1
      %p65 = por %p63, %p64
      %p66 = scmp.ne.s32.totalorder %s57, %s58
      %p67 = scmp.eq.s32.totalorder %s26, 0
      %p68 = por %p66, %p67
      %p69 = scmp.ne.s32.totalorder %s57, %s58
      %p70 = scmp.eq.s32.totalorder %s27, 1
      %p71 = por %p69, %p70
      %p73 = scmp.ne.s32.totalorder %s58, %s72
      %p74 = scmp.eq.s32.totalorder %s27, 0
      %p75 = por %p73, %p74
      %s77 = sadd.s32 %s76, 1
      %p80 = scmp.eq.s32.totalorder %s21, 1
      %p81 = scmp.ne.s32.totalorder %s76, %s78
      %p82 = scmp.eq.s32.totalorder %s21, 0
      %p83 = por %p81, %p82
      %p84 = scmp.ne.s32.totalorder %s76, %s78
      %p85 = scmp.eq.s32.totalorder %s26, 1
      %p86 = por %p84, %p85
      %p87 = scmp.ne.s32.totalorder %s78, %s79
      %p88 = scmp.eq.s32.totalorder %s26, 0
      %p89 = por %p87, %p88
      %p90 = scmp.ne.s32.totalorder %s78, %s79
      %p91 = scmp.eq.s32.totalorder %s27, 1
      %p92 = por %p90, %p91
      %p94 = scmp.ne.s32.totalorder %s79, %s93
      %p95 = scmp.eq.s32.totalorder %s27, 0
      %p96 = por %p94, %p95
      %s98 = sadd.s32 %s97, 1
      %p101 = scmp.eq.s32.totalorder %s21, 1
      %p102 = scmp.ne.s32.totalorder %s97, %s99
      %p103 = scmp.eq.s32.totalorder %s21, 0
      %p104 = por %p102, %p103
      %p105 = scmp.ne.s32.totalorder %s97, %s99
      %p106 = scmp.eq.s32.totalorder %s26, 1
      %p107 = por %p105, %p106
      %p108 = scmp.ne.s32.totalorder %s99, %s100
      %p109 = scmp.eq.s32.totalorder %s26, 0
      %p110 = por %p108, %p109
      %p111 = scmp.ne.s32.totalorder %s99, %s100
      %p112 = scmp.eq.s32.totalorder %s27, 1
      %p113 = por %p111, %p112
      %p115 = scmp.ne.s32.totalorder %s100, %s114
      %p116 = scmp.eq.s32.totalorder %s27, 0
      %p117 = por %p115, %p116
      %s119 = sadd.s32 %s118, 1
      %p122 = scmp.eq.s32.totalorder %s21, 1
      %p123 = scmp.ne.s32.totalorder %s118, %s120
      %p124 = scmp.eq.s32.totalorder %s21, 0
      %p125 = por %p123, %p124
      %p126 = scmp.ne.s32.totalorder %s118, %s120
      %p127 = scmp.eq.s32.totalorder %s26, 1
      %p128 = por %p126, %p127
      %p129 = scmp.ne.s32.totalorder %s120, %s121
      %p130 = scmp.eq.s32.totalorder %s26, 0
      %p131 = por %p129, %p130
      %p132 = scmp.ne.s32.totalorder %s120, %s121
      %p133 = scmp.eq.s32.totalorder %s27, 1
      %p134 = por %p132, %p133
      %p136 = scmp.ne.s32.totalorder %s121, %s135
      %p137 = scmp.eq.s32.totalorder %s27, 0
      %p138 = por %p136, %p137
      %s140 = sadd.s32 %s139, 1
      %p143 = scmp.eq.s32.totalorder %s21, 1
      %p144 = scmp.ne.s32.totalorder %s139, %s141
      %p145 = scmp.eq.s32.totalorder %s21, 0
      %p146 = por %p144, %p145
      %p147 = scmp.ne.s32.totalorder %s139, %s141
      %p148 = scmp.eq.s32.totalorder %s26, 1
      %p149 = por %p147, %p148
      %p150 = scmp.ne.s32.totalorder %s141, %s142
      %p151 = scmp.eq.s32.totalorder %s26, 0
      %p152 = por %p150, %p151
      %p153 = scmp.ne.s32.totalorder %s141, %s142
      %p154 = scmp.eq.s32.totalorder %s27, 1
      %p155 = por %p153, %p154
      %p157 = scmp.ne.s32.totalorder %s142, %s156
      %p158 = scmp.eq.s32.totalorder %s27, 0
      %p159 = por %p157, %p158
      %s161 = sadd.s32 %s160, 1
      %p164 = scmp.eq.s32.totalorder %s21, 1
      %p165 = scmp.ne.s32.totalorder %s160, %s162
      %p166 = scmp.eq.s32.totalorder %s21, 0
      %p167 = por %p165, %p166
      %p168 = scmp.ne.s32.totalorder %s160, %s162
      %p169 = scmp.eq.s32.totalorder %s26, 1
      %p170 = por %p168, %p169
      %p171 = scmp.ne.s32.totalorder %s162, %s163
      %p172 = scmp.eq.s32.totalorder %s26, 0
      %p173 = por %p171, %p172
      %p174 = scmp.ne.s32.totalorder %s162, %s163
      %p175 = scmp.eq.s32.totalorder %s27, 1
      %p176 = por %p174, %p175
      %p178 = scmp.ne.s32.totalorder %s163, %s177
      %p179 = scmp.eq.s32.totalorder %s27, 0
      %p180 = por %p178, %p179
      %s182 = sadd.s32 %s181, 1
      %p185 = scmp.eq.s32.totalorder %s21, 1
      %p186 = scmp.ne.s32.totalorder %s181, %s183
      %p187 = scmp.eq.s32.totalorder %s21, 0
      %p188 = por %p186, %p187
      %p189 = scmp.ne.s32.totalorder %s181, %s183
      %p190 = scmp.eq.s32.totalorder %s26, 1
      %p191 = por %p189, %p190
      %p192 = scmp.ne.s32.totalorder %s183, %s184
      %p193 = scmp.eq.s32.totalorder %s26, 0
      %p194 = por %p192, %p193
      %p195 = scmp.ne.s32.totalorder %s183, %s184
      %p196 = scmp.eq.s32.totalorder %s27, 1
      %p197 = por %p195, %p196
      %p199 = scmp.ne.s32.totalorder %s184, %s198
      %p200 = scmp.eq.s32.totalorder %s27, 0
      %p201 = por %p199, %p200
      %s203 = sadd.s32 %s202, 1
      %p206 = scmp.eq.s32.totalorder %s21, 1
      %p207 = scmp.ne.s32.totalorder %s202, %s204
      %p208 = scmp.eq.s32.totalorder %s21, 0
      %p209 = por %p207, %p208
      %p210 = scmp.ne.s32.totalorder %s202, %s204
      %p211 = scmp.eq.s32.totalorder %s26, 1
      %p212 = por %p210, %p211
      %p213 = scmp.ne.s32.totalorder %s204, %s205
      %p214 = scmp.eq.s32.totalorder %s26, 0
      %p215 = por %p213, %p214
      %p216 = scmp.ne.s32.totalorder %s204, %s205
      %p217 = scmp.eq.s32.totalorder %s27, 1
      %p218 = por %p216, %p217
      %p220 = scmp.ne.s32.totalorder %s205, %s219
      %p221 = scmp.eq.s32.totalorder %s27, 0
      %p222 = por %p220, %p221
      %s224 = sadd.s32 %s223, 1
      %p227 = scmp.eq.s32.totalorder %s21, 1
      %p228 = scmp.ne.s32.totalorder %s223, %s225
      %p229 = scmp.eq.s32.totalorder %s21, 0
      %p230 = por %p228, %p229
      %p231 = scmp.ne.s32.totalorder %s223, %s225
      %p232 = scmp.eq.s32.totalorder %s26, 1
      %p233 = por %p231, %p232
      %p234 = scmp.ne.s32.totalorder %s225, %s226
      %p235 = scmp.eq.s32.totalorder %s26, 0
      %p236 = por %p234, %p235
      %p237 = scmp.ne.s32.totalorder %s225, %s226
      %p238 = scmp.eq.s32.totalorder %s27, 1
      %p239 = por %p237, %p238
      %p241 = scmp.ne.s32.totalorder %s226, %s240
      %p242 = scmp.eq.s32.totalorder %s27, 0
      %p243 = por %p241, %p242
      %s245 = sadd.s32 %s244, 1
      %p248 = scmp.eq.s32.totalorder %s21, 1
      %p249 = scmp.ne.s32.totalorder %s244, %s246
      %p250 = scmp.eq.s32.totalorder %s21, 0
      %p251 = por %p249, %p250
      %p252 = scmp.ne.s32.totalorder %s244, %s246
      %p253 = scmp.eq.s32.totalorder %s26, 1
      %p254 = por %p252, %p253
      %p255 = scmp.ne.s32.totalorder %s246, %s247
      %p256 = scmp.eq.s32.totalorder %s26, 0
      %p257 = por %p255, %p256
      %p258 = scmp.ne.s32.totalorder %s246, %s247
      %p259 = scmp.eq.s32.totalorder %s27, 1
      %p260 = por %p258, %p259
      %p262 = scmp.ne.s32.totalorder %s247, %s261
      %p263 = scmp.eq.s32.totalorder %s27, 0
      %p264 = por %p262, %p263
      %s266 = sadd.s32 %s265, 1
      %p269 = scmp.eq.s32.totalorder %s21, 1
      %p270 = scmp.ne.s32.totalorder %s265, %s267
      %p271 = scmp.eq.s32.totalorder %s21, 0
      %p272 = por %p270, %p271
      %p273 = scmp.ne.s32.totalorder %s265, %s267
      %p274 = scmp.eq.s32.totalorder %s26, 1
      %p275 = por %p273, %p274
      %p276 = scmp.ne.s32.totalorder %s267, %s268
      %p277 = scmp.eq.s32.totalorder %s26, 0
      %p278 = por %p276, %p277
      %p279 = scmp.ne.s32.totalorder %s267, %s268
      %p280 = scmp.eq.s32.totalorder %s27, 1
      %p281 = por %p279, %p280
      %p283 = scmp.ne.s32.totalorder %s268, %s282
      %p284 = scmp.eq.s32.totalorder %s27, 0
      %p285 = por %p283, %p284
      %s287 = sadd.s32 %s286, 1
      %p290 = scmp.eq.s32.totalorder %s21, 1
      %p291 = scmp.ne.s32.totalorder %s286, %s288
      %p292 = scmp.eq.s32.totalorder %s21, 0
      %p293 = por %p291, %p292
      %p294 = scmp.ne.s32.totalorder %s286, %s288
      %p295 = scmp.eq.s32.totalorder %s26, 1
      %p296 = por %p294, %p295
      %p297 = scmp.ne.s32.totalorder %s288, %s289
      %p298 = scmp.eq.s32.totalorder %s26, 0
      %p299 = por %p297, %p298
      %p300 = scmp.ne.s32.totalorder %s288, %s289
      %p301 = scmp.eq.s32.totalorder %s27, 1
      %p302 = por %p300, %p301
      %p304 = scmp.ne.s32.totalorder %s289, %s303
      %p305 = scmp.eq.s32.totalorder %s27, 0
      %p306 = por %p304, %p305
      %s307 = ssub.s32 %s21, %s28
      %p308 = scmp.eq.s32.totalorder %s307, 0
      %s310 = sadd.s32 %s309, 1
      %s311 = scalar_select %p308, %s309, %s310
      %p314 = pneg %p308
      %p315 = scmp.eq.s32.totalorder %s21, 1
      %p316 = por %p314, %p315
      %p317 = scmp.ne.s32.totalorder %s309, %s312
      %p318 = scmp.eq.s32.totalorder %s21, 0
      %p319 = por %p317, %p318
      %p320 = scmp.ne.s32.totalorder %s309, %s312
      %p321 = scmp.eq.s32.totalorder %s26, 1
      %p322 = por %p320, %p321
      %p323 = scmp.ne.s32.totalorder %s312, %s313
      %p324 = scmp.eq.s32.totalorder %s26, 0
      %p325 = por %p323, %p324
      %p326 = scmp.ne.s32.totalorder %s312, %s313
      %p327 = scmp.eq.s32.totalorder %s27, 1
      %p328 = por %p326, %p327
      %p330 = scmp.ne.s32.totalorder %s313, %s329
      %p331 = scmp.eq.s32.totalorder %s27, 0
      %p332 = por %p330, %p331
      %p333 = scmp.le.s32.totalorder 1, %s21
      %p334 = scmp.lt.s32.totalorder %s21, 3
      %p335 = pnand %p333, %p334
      %p336 = pneg %p335
      // Predicated region
      $region9: #{mlp_forward.1} parent=5 // pred_check
        _
      $region10: #{mlp_forward.1} parent=5 // pred_check_branch
        %338 = sbr.rel (%p335) target = $region12
      $region11: #{mlp_forward.1} parent=5 // pred_region
        %s339 = ssub.s32 %s21, 1
        // Predicated region
        $region13: #{mlp_forward.1} parent=11 // pred_check
          %p340 = pneg %p68
        $region14: #{mlp_forward.1} parent=11 // pred_check_branch
          %342 = sbr.rel (%p340) target = $region16
        $region15: #{mlp_forward.1} parent=11 // pred_region
          %344 = vsyncadd [#allocation3], 0
          %s345 = sshll.u32 %s1, 4
          %s346 = int_to_ptr.hbm [resolvable:$true] %s345
          %s347 = sshll.u32 [#allocation2], 4
          %s348 = int_to_ptr.vmem [resolvable:$true] %s347
          %353 = dma.hbm_to_vmem [thread:$0]  %s346, 2048, %s348, [#allocation3], 128, 128, 8
        $region16: #{mlp_forward.1} parent=11 // pred_fallthru
          _
        // Predicated region
        $region17: #{mlp_forward.1} parent=11 // pred_check
          %p354 = pneg %p89
        $region18: #{mlp_forward.1} parent=11 // pred_check_branch
          %356 = sbr.rel (%p354) target = $region20
        $region19: #{mlp_forward.1} parent=11 // pred_region
          _
        $region20: #{mlp_forward.1} parent=11 // pred_fallthru
          _
        // Predicated region
        $region21: #{mlp_forward.1} parent=11 // pred_check
          %p357 = pneg %p110
        $region22: #{mlp_forward.1} parent=11 // pred_check_branch
          %359 = sbr.rel (%p357) target = $region24
        $region23: #{mlp_forward.1} parent=11 // pred_region
          _
        $region24: #{mlp_forward.1} parent=11 // pred_fallthru
          _
        // Predicated region
        $region25: #{mlp_forward.1} parent=11 // pred_check
          %p360 = pneg %p131
        $region26: #{mlp_forward.1} parent=11 // pred_check_branch
          %362 = sbr.rel (%p360) target = $region28
        $region27: #{mlp_forward.1} parent=11 // pred_region
          _
        $region28: #{mlp_forward.1} parent=11 // pred_fallthru
          _
        // Predicated region
        $region29: #{mlp_forward.1} parent=11 // pred_check
          %p363 = pneg %p152
        $region30: #{mlp_forward.1} parent=11 // pred_check_branch
          %365 = sbr.rel (%p363) target = $region32
        $region31: #{mlp_forward.1} parent=11 // pred_region
          %367 = vsyncadd [#allocation5], 0
          %s368 = sshll.u32 %s5, 4
          %s369 = int_to_ptr.hbm [resolvable:$true] %s368
          %s370 = sshll.u32 [#allocation4], 4
          %s371 = int_to_ptr.vmem [resolvable:$true] %s370
          %376 = dma.hbm_to_vmem [thread:$0]  %s369, 8192, %s371, [#allocation5], 256, 256, 16
        $region32: #{mlp_forward.1} parent=11 // pred_fallthru
          _
        // Predicated region
        $region33: #{mlp_forward.1} parent=11 // pred_check
          %p377 = pneg %p173
        $region34: #{mlp_forward.1} parent=11 // pred_check_branch
          %379 = sbr.rel (%p377) target = $region36
        $region35: #{mlp_forward.1} parent=11 // pred_region
          _
        $region36: #{mlp_forward.1} parent=11 // pred_fallthru
          _
        // Predicated region
        $region37: #{mlp_forward.1} parent=11 // pred_check
          %p380 = pneg %p194
        $region38: #{mlp_forward.1} parent=11 // pred_check_branch
          %382 = sbr.rel (%p380) target = $region40
        $region39: #{mlp_forward.1} parent=11 // pred_region
          _
        $region40: #{mlp_forward.1} parent=11 // pred_fallthru
          _
        // Predicated region
        $region41: #{mlp_forward.1} parent=11 // pred_check
          %p383 = pneg %p215
        $region42: #{mlp_forward.1} parent=11 // pred_check_branch
          %385 = sbr.rel (%p383) target = $region44
        $region43: #{mlp_forward.1} parent=11 // pred_region
          _
        $region44: #{mlp_forward.1} parent=11 // pred_fallthru
          _
        // Predicated region
        $region45: #{mlp_forward.1} parent=11 // pred_check
          %p386 = pneg %p236
        $region46: #{mlp_forward.1} parent=11 // pred_check_branch
          %388 = sbr.rel (%p386) target = $region48
        $region47: #{mlp_forward.1} parent=11 // pred_region
          %390 = vsyncadd [#allocation5], 0
          %s391 = sshll.u32 %s9, 4
          %s392 = int_to_ptr.hbm [resolvable:$true] %s391
          %s393 = sshll.u32 [#allocation6], 4
          %s394 = int_to_ptr.vmem [resolvable:$true] %s393
          %399 = dma.hbm_to_vmem [thread:$0]  %s392, 32768, %s394, [#allocation5], 512, 512, 32
        $region48: #{mlp_forward.1} parent=11 // pred_fallthru
          _
        // Predicated region
        $region49: #{mlp_forward.1} parent=11 // pred_check
          %p400 = pneg %p257
        $region50: #{mlp_forward.1} parent=11 // pred_check_branch
          %402 = sbr.rel (%p400) target = $region52
        $region51: #{mlp_forward.1} parent=11 // pred_region
          _
        $region52: #{mlp_forward.1} parent=11 // pred_fallthru
          _
        // Predicated region
        $region53: #{mlp_forward.1} parent=11 // pred_check
          %p403 = pneg %p278
        $region54: #{mlp_forward.1} parent=11 // pred_check_branch
          %405 = sbr.rel (%p403) target = $region56
        $region55: #{mlp_forward.1} parent=11 // pred_region
          _
        $region56: #{mlp_forward.1} parent=11 // pred_fallthru
          _
        // Predicated region
        $region57: #{mlp_forward.1} parent=11 // pred_check
          %p406 = pneg %p299
        $region58: #{mlp_forward.1} parent=11 // pred_check_branch
          %408 = sbr.rel (%p406) target = $region60
        $region59: #{mlp_forward.1} parent=11 // pred_region
          _
        $region60: #{mlp_forward.1} parent=11 // pred_fallthru
          _
      $region12: #{mlp_forward.1} parent=5 // pred_fallthru
        _
      %p409 = scmp.lt.s32.totalorder %s21, 2
      // Predicated region
      $region61: #{mlp_forward.1} parent=5 // pred_check
        %p410 = pneg %p409
      $region62: #{mlp_forward.1} parent=5 // pred_check_branch
        %412 = sbr.rel (%p410) target = $region64
      $region63: #{mlp_forward.1} parent=5 // pred_region
        // Predicated region
        $region65: #{mlp_forward.1} parent=63 // pred_check
          %p413 = pneg %p41
        $region66: #{mlp_forward.1} parent=63 // pred_check_branch
          %415 = sbr.rel (%p413) target = $region68
        $region67: #{mlp_forward.1} parent=63 // pred_region
          %s416 = smul.u32 2, %s21
          %p417 = scmp.lt.s32.totalorder %s416, 3
          %s418 = scalar_select %p417, %s416, 3
          %s419 = smul.addr %s418, 8
          %s420 = scalar_lea.vmem %s0, %s419
          %s421 = smul.u32 2, %s21
        $region68: #{mlp_forward.1} parent=63 // pred_fallthru
          _
      $region64: #{mlp_forward.1} parent=5 // pred_fallthru
        _
      %p422 = scmp.le.s32.totalorder 1, %s21
      %p423 = scmp.lt.s32.totalorder %s21, 3
      %p424 = pnand %p422, %p423
      %p425 = pneg %p424
      // Predicated region
      $region69: #{mlp_forward.1} parent=5 // pred_check
        _
      $region70: #{mlp_forward.1} parent=5 // pred_check_branch
        %427 = sbr.rel (%p424) target = $region72
      $region71: #{mlp_forward.1} parent=5 // pred_region
        %s428 = ssub.s32 %s21, 1
        // Predicated region
        $region73: #{mlp_forward.1} parent=71 // pred_check
          %p429 = pneg %p68
        $region74: #{mlp_forward.1} parent=71 // pred_check_branch
          %431 = sbr.rel (%p429) target = $region76
        $region75: #{mlp_forward.1} parent=71 // pred_region
          %433 = dma.done [#allocation3], 2048
        $region76: #{mlp_forward.1} parent=71 // pred_fallthru
          _
        // Predicated region
        $region77: #{mlp_forward.1} parent=71 // pred_check
          %p434 = pneg %p152
        $region78: #{mlp_forward.1} parent=71 // pred_check_branch
          %436 = sbr.rel (%p434) target = $region80
        $region79: #{mlp_forward.1} parent=71 // pred_region
          %438 = dma.done [#allocation5], 8192
        $region80: #{mlp_forward.1} parent=71 // pred_fallthru
          _
        // Predicated region
        $region81: #{mlp_forward.1} parent=71 // pred_check
          %p439 = pneg %p236
        $region82: #{mlp_forward.1} parent=71 // pred_check_branch
          %441 = sbr.rel (%p439) target = $region84
        $region83: #{mlp_forward.1} parent=71 // pred_region
          %443 = dma.done [#allocation5], 32768
        $region84: #{mlp_forward.1} parent=71 // pred_fallthru
          _
        %s444 = smul.u32 2, %s26
        %p445 = scmp.lt.s32.totalorder %s444, 3
        %s446 = scalar_select %p445, %s444, 3
        %s447 = smul.addr %s446, 8
        %s448 = scalar_lea.vmem %s0, %s447
        %p449 = pneg %p47
        %p450 = pneg %p44
        %p451 = pneg %p68
        %p452 = pneg %p65
        %p453 = pneg %p89
        %p454 = pneg %p86
        %p455 = pneg %p110
        %p456 = pneg %p107
        %p457 = pneg %p131
        %p458 = pneg %p128
        %p459 = pneg %p152
        %p460 = pneg %p149
        %p461 = pneg %p173
        %p462 = pneg %p170
        %p463 = pneg %p194
        %p464 = pneg %p191
        %p465 = pneg %p215
        %p466 = pneg %p212
        %p467 = pneg %p236
        %p468 = pneg %p233
        %p469 = pneg %p257
        %p470 = pneg %p254
        %p471 = pneg %p278
        %p472 = pneg %p275
        %p473 = pneg %p299
        %p474 = pneg %p296
        %p475 = pneg %p325
        %p476 = pneg %p322
        %s477 = smul.u32 2, %s26
        %p478 = scmp.lt.s32.totalorder %s477, 3
        %s479 = scalar_select %p478, %s477, 3
        %s480 = smul.addr %s479, 8
        %s481 = smul.addr %s480, 8
        %s482 = scalar_lea.vmem %s13, %s481
        %s483 = smul.u32 2, %s26
        %p484 = scmp.lt.s32.totalorder %s483, 3
        %s485 = scalar_select %p484, %s483, 3
        %s486 = smul.addr %s485, 8
        %s487 = scalar_lea.vmem %s0, %s486
        %s488 = smul.u32 2, %s26
        %s489 = smul.u32 2, %s26
        %p490 = scmp.lt.s32.totalorder %s489, 3
        %s491 = scalar_select %p490, %s489, 3
        %s492 = smul.addr %s491, 8
        %s493 = smul.addr %s492, 8
        %s494 = scalar_lea.vmem %s13, %s493
        %s495 = smul.u32 2, %s26
        %v496 = vld [vmem:[%s487] sm:$0xff]
        %v497 = vld [vmem:[%s487 + $0x8] sm:$0xff]
        %v498 = vpack.c.bf16 %v497, %v496
        %v499 = vld [vmem:[#allocation2] sm:$0xff]
        %v500 = vld [vmem:[#allocation2 + $0x8] sm:$0xff]
        %v501 = vld [vmem:[#allocation2 + $0x10] sm:$0xff]
        %v502 = vld [vmem:[#allocation2 + $0x18] sm:$0xff]
        %v503 = vld [vmem:[#allocation2 + $0x20] sm:$0xff]
        %v504 = vld [vmem:[#allocation2 + $0x28] sm:$0xff]
        %v505 = vld [vmem:[#allocation2 + $0x30] sm:$0xff]
        %v506 = vld [vmem:[#allocation2 + $0x38] sm:$0xff]
        %v507 = vld [vmem:[#allocation2 + $0x40] sm:$0xff]
        %v508 = vld [vmem:[#allocation2 + $0x48] sm:$0xff]
        %v509 = vld [vmem:[#allocation2 + $0x50] sm:$0xff]
        %v510 = vld [vmem:[#allocation2 + $0x58] sm:$0xff]
        %v511 = vld [vmem:[#allocation2 + $0x60] sm:$0xff]
        %v512 = vld [vmem:[#allocation2 + $0x68] sm:$0xff]
        %v513 = vld [vmem:[#allocation2 + $0x70] sm:$0xff]
        %v514 = vld [vmem:[#allocation2 + $0x78] sm:$0xff]
        %v515 = vld [vmem:[%s2] sm:$0x3]
        %v517 = vperm.slane %v515, 0
        %v518 = vperm.slane %v515, 1
        %v537 = vunpack.c.l.b16 %v499
        %v538 = vunpack.c.h.b16 %v499
        %v539 = vunpack.c.l.b16 %v500
        %v540 = vunpack.c.h.b16 %v500
        %v541 = vunpack.c.l.b16 %v501
        %v542 = vunpack.c.h.b16 %v501
        %v543 = vunpack.c.l.b16 %v502
        %v544 = vunpack.c.h.b16 %v502
        %v545 = vunpack.c.l.b16 %v503
        %v546 = vunpack.c.h.b16 %v503
        %v547 = vunpack.c.l.b16 %v504
        %v548 = vunpack.c.h.b16 %v504
        %v549 = vunpack.c.l.b16 %v505
        %v550 = vunpack.c.h.b16 %v505
        %v551 = vunpack.c.l.b16 %v506
        %v552 = vunpack.c.h.b16 %v506
        %v553 = vunpack.c.l.b16 %v507
        %v554 = vunpack.c.h.b16 %v507
        %v555 = vunpack.c.l.b16 %v508
        %v556 = vunpack.c.h.b16 %v508
        %v557 = vunpack.c.l.b16 %v509
        %v558 = vunpack.c.h.b16 %v509
        %v559 = vunpack.c.l.b16 %v510
        %v560 = vunpack.c.h.b16 %v510
        %v561 = vunpack.c.l.b16 %v511
        %v562 = vunpack.c.h.b16 %v511
        %v563 = vunpack.c.l.b16 %v512
        %v564 = vunpack.c.h.b16 %v512
        %v565 = vunpack.c.l.b16 %v513
        %v566 = vunpack.c.h.b16 %v513
        %v567 = vunpack.c.l.b16 %v514
        %v568 = vunpack.c.h.b16 %v514
        %v569 = vpack.c.b16 %v539, %v537
        %v570 = vpack.c.b16 %v540, %v538
        %v571 = vpack.c.b16 %v543, %v541
        %v572 = vpack.c.b16 %v544, %v542
        %v573 = vpack.c.b16 %v547, %v545
        %v574 = vpack.c.b16 %v548, %v546
        %v575 = vpack.c.b16 %v551, %v549
        %v576 = vpack.c.b16 %v552, %v550
        %v577 = vpack.c.b16 %v555, %v553
        %v578 = vpack.c.b16 %v556, %v554
        %v579 = vpack.c.b16 %v559, %v557
        %v580 = vpack.c.b16 %v560, %v558
        %v581 = vpack.c.b16 %v563, %v561
        %v582 = vpack.c.b16 %v564, %v562
        %v583 = vpack.c.b16 %v567, %v565
        %v584 = vpack.c.b16 %v568, %v566
        %601 = vmatpush.bf16.msra.mxu0 %v583
        %602 = vmatpush.bf16.msra.mxu0 %v581
        %603 = vmatpush.bf16.msra.mxu0 %v579
        %604 = vmatpush.bf16.msra.mxu0 %v577
        %605 = vmatpush.bf16.msra.mxu0 %v575
        %606 = vmatpush.bf16.msra.mxu0 %v573
        %607 = vmatpush.bf16.msra.mxu0 %v571
        %608 = vmatpush.bf16.msra.mxu0 %v569
        %609 = vmatmul.bf16.gmra.mxu0 %v498
        %v610 = vpop.f32.mrf.mxu0
        %v611 = vadd.f32 %v517, %v610
        %v612 = vpop.f32.mrf.mxu0
        %v613 = vadd.f32 %v517, %v612
        %614 = vdwg.mxu0
        %615 = vmatpush.bf16.msra.mxu0 %v584
        %616 = vmatpush.bf16.msra.mxu0 %v582
        %617 = vmatpush.bf16.msra.mxu0 %v580
        %618 = vmatpush.bf16.msra.mxu0 %v578
        %619 = vmatpush.bf16.msra.mxu0 %v576
        %620 = vmatpush.bf16.msra.mxu0 %v574
        %621 = vmatpush.bf16.msra.mxu0 %v572
        %622 = vmatpush.bf16.msra.mxu0 %v570
        %623 = vmatmul.bf16.gmra.mxu0 %v498
        %v624 = vpop.f32.mrf.mxu0
        %v625 = vadd.f32 %v518, %v624
        %v626 = vpop.f32.mrf.mxu0
        %v627 = vadd.f32 %v518, %v626
        %628 = vdwg.mxu0
        %v629 = vadd.f32 %v611, %v625
        %630 = vadd.xlane.f32.xlu0 %v629
        %v631 = vpop.xlane.xlu0 %630
        %v632 = vadd.f32 %v613, %v627
        %633 = vadd.xlane.f32.xlu0 %v632
        %v634 = vpop.xlane.xlu0 %633
        %v635 = vmul.f32 %v611, %v611
        %v636 = vmul.f32 %v625, %v625
        %v637 = vmul.f32 %v613, %v613
        %v638 = vmul.f32 %v627, %v627
        %v639 = vadd.f32 %v635, %v636
        %640 = vadd.xlane.f32.xlu0 %v639
        %v641 = vpop.xlane.xlu0 %640
        %v642 = vadd.f32 %v637, %v638
        %643 = vadd.xlane.f32.xlu0 %v642
        %v644 = vpop.xlane.xlu0 %643
        %v645 = vmul.f32 %v631, 0.00390625
        %v646 = vmul.f32 %v634, 0.00390625
        %v647 = vmul.f32 %v641, 0.00390625
        %v648 = vmul.f32 %v644, 0.00390625
        %v649 = vmul.f32 %v645, %v645
        %v650 = vmul.f32 %v646, %v646
        %v651 = vsub.f32 %v647, %v649
        %v652 = vsub.f32 %v648, %v650
        %v653 = vsub.f32 %v611, %v645
        %v654 = vsub.f32 %v625, %v645
        %v655 = vsub.f32 %v613, %v646
        %v656 = vsub.f32 %v627, %v646
        %v657 = vadd.f32 %v651, 1e-05
        %v658 = vadd.f32 %v652, 1e-05
        %v659 = vrsqrt.pop %v657
        %v660 = vmul.f32 %v659, %v657
        %v661 = vmul.f32 %v660, %v659
        %v662 = vmul.f32 0.5, %v661
        %v663 = vsub.f32 1.5, %v662
        %v664 = vmul.f32 %v659, %v663
        %vm665 = vweird.f32 %v657
        %vm666 = vweird.f32 %v659
        %vm667 = vmor %vm665, %vm666
        %v668 = vsel %vm667, %v659, %v664
        %v669 = vrsqrt.pop %v658
        %v670 = vmul.f32 %v669, %v658
        %v671 = vmul.f32 %v670, %v669
        %v672 = vmul.f32 0.5, %v671
        %v673 = vsub.f32 1.5, %v672
        %v674 = vmul.f32 %v669, %v673
        %vm675 = vweird.f32 %v658
        %vm676 = vweird.f32 %v669
        %vm677 = vmor %vm675, %vm676
        %v678 = vsel %vm677, %v669, %v674
        %v679 = vmul.f32 %v653, %v668
        %v680 = vmul.f32 %v654, %v668
        %v681 = vmul.f32 %v655, %v678
        %v682 = vmul.f32 %v656, %v678
        %v683 = vld [vmem:[%s3] sm:$0x3]
        %v685 = vperm.slane %v683, 0
        %v686 = vperm.slane %v683, 1
        %v689 = vmul.f32 %v679, %v685
        %v690 = vmul.f32 %v680, %v686
        %v691 = vmul.f32 %v681, %v685
        %v692 = vmul.f32 %v682, %v686
        %v693 = vld [vmem:[%s4] sm:$0x3]
        %v695 = vperm.slane %v693, 0
        %v696 = vperm.slane %v693, 1
        %v699 = vadd.f32 %v689, %v695
        %v700 = vadd.f32 %v690, %v696
        %v701 = vadd.f32 %v691, %v695
        %v702 = vadd.f32 %v692, %v696
        %v703 = vmul.f32 %v699, 0.01
        %v704 = vmul.f32 %v700, 0.01
        %v705 = vmul.f32 %v701, 0.01
        %v706 = vmul.f32 %v702, 0.01
        %v707 = vmax.f32 %v699, %v703
        %v708 = vmax.f32 %v700, %v704
        %v709 = vmax.f32 %v701, %v705
        %v710 = vmax.f32 %v702, %v706
        %v711 = vpack.c.bf16 %v709, %v707
        %v712 = vpack.c.bf16 %v710, %v708
        %v713 = vld [vmem:[#allocation4] sm:$0xff]
        %v714 = vld [vmem:[#allocation4 + $0x8] sm:$0xff]
        %v715 = vld [vmem:[#allocation4 + $0x10] sm:$0xff]
        %v716 = vld [vmem:[#allocation4 + $0x18] sm:$0xff]
        %v717 = vld [vmem:[#allocation4 + $0x20] sm:$0xff]
        %v718 = vld [vmem:[#allocation4 + $0x28] sm:$0xff]
        %v719 = vld [vmem:[#allocation4 + $0x30] sm:$0xff]
        %v720 = vld [vmem:[#allocation4 + $0x38] sm:$0xff]
        %v721 = vld [vmem:[#allocation4 + $0x40] sm:$0xff]
        %v722 = vld [vmem:[#allocation4 + $0x48] sm:$0xff]
        %v723 = vld [vmem:[#allocation4 + $0x50] sm:$0xff]
        %v724 = vld [vmem:[#allocation4 + $0x58] sm:$0xff]
        %v725 = vld [vmem:[#allocation4 + $0x60] sm:$0xff]
        %v726 = vld [vmem:[#allocation4 + $0x68] sm:$0xff]
        %v727 = vld [vmem:[#allocation4 + $0x70] sm:$0xff]
        %v728 = vld [vmem:[#allocation4 + $0x78] sm:$0xff]
        %v729 = vld [vmem:[#allocation4 + $0x80] sm:$0xff]
        %v730 = vld [vmem:[#allocation4 + $0x88] sm:$0xff]
        %v731 = vld [vmem:[#allocation4 + $0x90] sm:$0xff]
        %v732 = vld [vmem:[#allocation4 + $0x98] sm:$0xff]
        %v733 = vld [vmem:[#allocation4 + $0xa0] sm:$0xff]
        %v734 = vld [vmem:[#allocation4 + $0xa8] sm:$0xff]
        %v735 = vld [vmem:[#allocation4 + $0xb0] sm:$0xff]
        %v736 = vld [vmem:[#allocation4 + $0xb8] sm:$0xff]
        %v737 = vld [vmem:[#allocation4 + $0xc0] sm:$0xff]
        %v738 = vld [vmem:[#allocation4 + $0xc8] sm:$0xff]
        %v739 = vld [vmem:[#allocation4 + $0xd0] sm:$0xff]
        %v740 = vld [vmem:[#allocation4 + $0xd8] sm:$0xff]
        %v741 = vld [vmem:[#allocation4 + $0xe0] sm:$0xff]
        %v742 = vld [vmem:[#allocation4 + $0xe8] sm:$0xff]
        %v743 = vld [vmem:[#allocation4 + $0xf0] sm:$0xff]
        %v744 = vld [vmem:[#allocation4 + $0xf8] sm:$0xff]
        %v745 = vld [vmem:[#allocation4 + $0x100] sm:$0xff]
        %v746 = vld [vmem:[#allocation4 + $0x108] sm:$0xff]
        %v747 = vld [vmem:[#allocation4 + $0x110] sm:$0xff]
        %v748 = vld [vmem:[#allocation4 + $0x118] sm:$0xff]
        %v749 = vld [vmem:[#allocation4 + $0x120] sm:$0xff]
        %v750 = vld [vmem:[#allocation4 + $0x128] sm:$0xff]
        %v751 = vld [vmem:[#allocation4 + $0x130] sm:$0xff]
        %v752 = vld [vmem:[#allocation4 + $0x138] sm:$0xff]
        %v753 = vld [vmem:[#allocation4 + $0x140] sm:$0xff]
        %v754 = vld [vmem:[#allocation4 + $0x148] sm:$0xff]
        %v755 = vld [vmem:[#allocation4 + $0x150] sm:$0xff]
        %v756 = vld [vmem:[#allocation4 + $0x158] sm:$0xff]
        %v757 = vld [vmem:[#allocation4 + $0x160] sm:$0xff]
        %v758 = vld [vmem:[#allocation4 + $0x168] sm:$0xff]
        %v759 = vld [vmem:[#allocation4 + $0x170] sm:$0xff]
        %v760 = vld [vmem:[#allocation4 + $0x178] sm:$0xff]
        %v761 = vld [vmem:[#allocation4 + $0x180] sm:$0xff]
        %v762 = vld [vmem:[#allocation4 + $0x188] sm:$0xff]
        %v763 = vld [vmem:[#allocation4 + $0x190] sm:$0xff]
        %v764 = vld [vmem:[#allocation4 + $0x198] sm:$0xff]
        %v765 = vld [vmem:[#allocation4 + $0x1a0] sm:$0xff]
        %v766 = vld [vmem:[#allocation4 + $0x1a8] sm:$0xff]
        %v767 = vld [vmem:[#allocation4 + $0x1b0] sm:$0xff]
        %v768 = vld [vmem:[#allocation4 + $0x1b8] sm:$0xff]
        %v769 = vld [vmem:[#allocation4 + $0x1c0] sm:$0xff]
        %v770 = vld [vmem:[#allocation4 + $0x1c8] sm:$0xff]
        %v771 = vld [vmem:[#allocation4 + $0x1d0] sm:$0xff]
        %v772 = vld [vmem:[#allocation4 + $0x1d8] sm:$0xff]
        %v773 = vld [vmem:[#allocation4 + $0x1e0] sm:$0xff]
        %v774 = vld [vmem:[#allocation4 + $0x1e8] sm:$0xff]
        %v775 = vld [vmem:[#allocation4 + $0x1f0] sm:$0xff]
        %v776 = vld [vmem:[#allocation4 + $0x1f8] sm:$0xff]
        %v777 = vld [vmem:[%s6] sm:$0xf]
        %v779 = vperm.slane %v777, 0
        %v780 = vperm.slane %v777, 1
        %v781 = vperm.slane %v777, 2
        %v782 = vperm.slane %v777, 3
        %v851 = vunpack.c.l.b16 %v713
        %v852 = vunpack.c.h.b16 %v713
        %v853 = vunpack.c.l.b16 %v714
        %v854 = vunpack.c.h.b16 %v714
        %v855 = vunpack.c.l.b16 %v715
        %v856 = vunpack.c.h.b16 %v715
        %v857 = vunpack.c.l.b16 %v716
        %v858 = vunpack.c.h.b16 %v716
        %v859 = vunpack.c.l.b16 %v717
        %v860 = vunpack.c.h.b16 %v717
        %v861 = vunpack.c.l.b16 %v718
        %v862 = vunpack.c.h.b16 %v718
        %v863 = vunpack.c.l.b16 %v719
        %v864 = vunpack.c.h.b16 %v719
        %v865 = vunpack.c.l.b16 %v720
        %v866 = vunpack.c.h.b16 %v720
        %v867 = vunpack.c.l.b16 %v721
        %v868 = vunpack.c.h.b16 %v721
        %v869 = vunpack.c.l.b16 %v722
        %v870 = vunpack.c.h.b16 %v722
        %v871 = vunpack.c.l.b16 %v723
        %v872 = vunpack.c.h.b16 %v723
        %v873 = vunpack.c.l.b16 %v724
        %v874 = vunpack.c.h.b16 %v724
        %v875 = vunpack.c.l.b16 %v725
        %v876 = vunpack.c.h.b16 %v725
        %v877 = vunpack.c.l.b16 %v726
        %v878 = vunpack.c.h.b16 %v726
        %v879 = vunpack.c.l.b16 %v727
        %v880 = vunpack.c.h.b16 %v727
        %v881 = vunpack.c.l.b16 %v728
        %v882 = vunpack.c.h.b16 %v728
        %v883 = vunpack.c.l.b16 %v729
        %v884 = vunpack.c.h.b16 %v729
        %v885 = vunpack.c.l.b16 %v730
        %v886 = vunpack.c.h.b16 %v730
        %v887 = vunpack.c.l.b16 %v731
        %v888 = vunpack.c.h.b16 %v731
        %v889 = vunpack.c.l.b16 %v732
        %v890 = vunpack.c.h.b16 %v732
        %v891 = vunpack.c.l.b16 %v733
        %v892 = vunpack.c.h.b16 %v733
        %v893 = vunpack.c.l.b16 %v734
        %v894 = vunpack.c.h.b16 %v734
        %v895 = vunpack.c.l.b16 %v735
        %v896 = vunpack.c.h.b16 %v735
        %v897 = vunpack.c.l.b16 %v736
        %v898 = vunpack.c.h.b16 %v736
        %v899 = vunpack.c.l.b16 %v737
        %v900 = vunpack.c.h.b16 %v737
        %v901 = vunpack.c.l.b16 %v738
        %v902 = vunpack.c.h.b16 %v738
        %v903 = vunpack.c.l.b16 %v739
        %v904 = vunpack.c.h.b16 %v739
        %v905 = vunpack.c.l.b16 %v740
        %v906 = vunpack.c.h.b16 %v740
        %v907 = vunpack.c.l.b16 %v741
        %v908 = vunpack.c.h.b16 %v741
        %v909 = vunpack.c.l.b16 %v742
        %v910 = vunpack.c.h.b16 %v742
        %v911 = vunpack.c.l.b16 %v743
        %v912 = vunpack.c.h.b16 %v743
        %v913 = vunpack.c.l.b16 %v744
        %v914 = vunpack.c.h.b16 %v744
        %v915 = vunpack.c.l.b16 %v745
        %v916 = vunpack.c.h.b16 %v745
        %v917 = vunpack.c.l.b16 %v746
        %v918 = vunpack.c.h.b16 %v746
        %v919 = vunpack.c.l.b16 %v747
        %v920 = vunpack.c.h.b16 %v747
        %v921 = vunpack.c.l.b16 %v748
        %v922 = vunpack.c.h.b16 %v748
        %v923 = vunpack.c.l.b16 %v749
        %v924 = vunpack.c.h.b16 %v749
        %v925 = vunpack.c.l.b16 %v750
        %v926 = vunpack.c.h.b16 %v750
        %v927 = vunpack.c.l.b16 %v751
        %v928 = vunpack.c.h.b16 %v751
        %v929 = vunpack.c.l.b16 %v752
        %v930 = vunpack.c.h.b16 %v752
        %v931 = vunpack.c.l.b16 %v753
        %v932 = vunpack.c.h.b16 %v753
        %v933 = vunpack.c.l.b16 %v754
        %v934 = vunpack.c.h.b16 %v754
        %v935 = vunpack.c.l.b16 %v755
        %v936 = vunpack.c.h.b16 %v755
        %v937 = vunpack.c.l.b16 %v756
        %v938 = vunpack.c.h.b16 %v756
        %v939 = vunpack.c.l.b16 %v757
        %v940 = vunpack.c.h.b16 %v757
        %v941 = vunpack.c.l.b16 %v758
        %v942 = vunpack.c.h.b16 %v758
        %v943 = vunpack.c.l.b16 %v759
        %v944 = vunpack.c.h.b16 %v759
        %v945 = vunpack.c.l.b16 %v760
        %v946 = vunpack.c.h.b16 %v760
        %v947 = vunpack.c.l.b16 %v761
        %v948 = vunpack.c.h.b16 %v761
        %v949 = vunpack.c.l.b16 %v762
        %v950 = vunpack.c.h.b16 %v762
        %v951 = vunpack.c.l.b16 %v763
        %v952 = vunpack.c.h.b16 %v763
        %v953 = vunpack.c.l.b16 %v764
        %v954 = vunpack.c.h.b16 %v764
        %v955 = vunpack.c.l.b16 %v765
        %v956 = vunpack.c.h.b16 %v765
        %v957 = vunpack.c.l.b16 %v766
        %v958 = vunpack.c.h.b16 %v766
        %v959 = vunpack.c.l.b16 %v767
        %v960 = vunpack.c.h.b16 %v767
        %v961 = vunpack.c.l.b16 %v768
        %v962 = vunpack.c.h.b16 %v768
        %v963 = vunpack.c.l.b16 %v769
        %v964 = vunpack.c.h.b16 %v769
        %v965 = vunpack.c.l.b16 %v770
        %v966 = vunpack.c.h.b16 %v770
        %v967 = vunpack.c.l.b16 %v771
        %v968 = vunpack.c.h.b16 %v771
        %v969 = vunpack.c.l.b16 %v772
        %v970 = vunpack.c.h.b16 %v772
        %v971 = vunpack.c.l.b16 %v773
        %v972 = vunpack.c.h.b16 %v773
        %v973 = vunpack.c.l.b16 %v774
        %v974 = vunpack.c.h.b16 %v774
        %v975 = vunpack.c.l.b16 %v775
        %v976 = vunpack.c.h.b16 %v775
        %v977 = vunpack.c.l.b16 %v776
        %v978 = vunpack.c.h.b16 %v776
        %v979 = vpack.c.b16 %v855, %v851
        %v980 = vpack.c.b16 %v856, %v852
        %v981 = vpack.c.b16 %v857, %v853
        %v982 = vpack.c.b16 %v858, %v854
        %v983 = vpack.c.b16 %v863, %v859
        %v984 = vpack.c.b16 %v864, %v860
        %v985 = vpack.c.b16 %v865, %v861
        %v986 = vpack.c.b16 %v866, %v862
        %v987 = vpack.c.b16 %v871, %v867
        %v988 = vpack.c.b16 %v872, %v868
        %v989 = vpack.c.b16 %v873, %v869
        %v990 = vpack.c.b16 %v874, %v870
        %v991 = vpack.c.b16 %v879, %v875
        %v992 = vpack.c.b16 %v880, %v876
        %v993 = vpack.c.b16 %v881, %v877
        %v994 = vpack.c.b16 %v882, %v878
        %v995 = vpack.c.b16 %v887, %v883
        %v996 = vpack.c.b16 %v888, %v884
        %v997 = vpack.c.b16 %v889, %v885
        %v998 = vpack.c.b16 %v890, %v886
        %v999 = vpack.c.b16 %v895, %v891
        %v1000 = vpack.c.b16 %v896, %v892
        %v1001 = vpack.c.b16 %v897, %v893
        %v1002 = vpack.c.b16 %v898, %v894
        %v1003 = vpack.c.b16 %v903, %v899
        %v1004 = vpack.c.b16 %v904, %v900
        %v1005 = vpack.c.b16 %v905, %v901
        %v1006 = vpack.c.b16 %v906, %v902
        %v1007 = vpack.c.b16 %v911, %v907
        %v1008 = vpack.c.b16 %v912, %v908
        %v1009 = vpack.c.b16 %v913, %v909
        %v1010 = vpack.c.b16 %v914, %v910
        %v1011 = vpack.c.b16 %v919, %v915
        %v1012 = vpack.c.b16 %v920, %v916
        %v1013 = vpack.c.b16 %v921, %v917
        %v1014 = vpack.c.b16 %v922, %v918
        %v1015 = vpack.c.b16 %v927, %v923
        %v1016 = vpack.c.b16 %v928, %v924
        %v1017 = vpack.c.b16 %v929, %v925
        %v1018 = vpack.c.b16 %v930, %v926
        %v1019 = vpack.c.b16 %v935, %v931
        %v1020 = vpack.c.b16 %v936, %v932
        %v1021 = vpack.c.b16 %v937, %v933
        %v1022 = vpack.c.b16 %v938, %v934
        %v1023 = vpack.c.b16 %v943, %v939
        %v1024 = vpack.c.b16 %v944, %v940
        %v1025 = vpack.c.b16 %v945, %v941
        %v1026 = vpack.c.b16 %v946, %v942
        %v1027 = vpack.c.b16 %v951, %v947
        %v1028 = vpack.c.b16 %v952, %v948
        %v1029 = vpack.c.b16 %v953, %v949
        %v1030 = vpack.c.b16 %v954, %v950
        %v1031 = vpack.c.b16 %v959, %v955
        %v1032 = vpack.c.b16 %v960, %v956
        %v1033 = vpack.c.b16 %v961, %v957
        %v1034 = vpack.c.b16 %v962, %v958
        %v1035 = vpack.c.b16 %v967, %v963
        %v1036 = vpack.c.b16 %v968, %v964
        %v1037 = vpack.c.b16 %v969, %v965
        %v1038 = vpack.c.b16 %v970, %v966
        %v1039 = vpack.c.b16 %v975, %v971
        %v1040 = vpack.c.b16 %v976, %v972
        %v1041 = vpack.c.b16 %v977, %v973
        %v1042 = vpack.c.b16 %v978, %v974
        %1107 = vmatpush.bf16.msra.mxu0 %v1007
        %1108 = vmatpush.bf16.msra.mxu0 %v1003
        %1109 = vmatpush.bf16.msra.mxu0 %v999
        %1110 = vmatpush.bf16.msra.mxu0 %v995
        %1111 = vmatpush.bf16.msra.mxu0 %v991
        %1112 = vmatpush.bf16.msra.mxu0 %v987
        %1113 = vmatpush.bf16.msra.mxu0 %v983
        %1114 = vmatpush.bf16.msra.mxu0 %v979
        %1115 = vmatmul.bf16.gmra.mxu0 %v711
        %v1116 = vpop.f32.mrf.mxu0
        %v1117 = vadd.f32 %v779, %v1116
        %v1118 = vpop.f32.mrf.mxu0
        %v1119 = vadd.f32 %v779, %v1118
        %1120 = vdwg.mxu0
        %1121 = vmatpush.bf16.msra.mxu0 %v1039
        %1122 = vmatpush.bf16.msra.mxu0 %v1035
        %1123 = vmatpush.bf16.msra.mxu0 %v1031
        %1124 = vmatpush.bf16.msra.mxu0 %v1027
        %1125 = vmatpush.bf16.msra.mxu0 %v1023
        %1126 = vmatpush.bf16.msra.mxu0 %v1019
        %1127 = vmatpush.bf16.msra.mxu0 %v1015
        %1128 = vmatpush.bf16.msra.mxu0 %v1011
        %1129 = vmatmul.bf16.gmra.mxu0 %v712
        %v1130 = vpop.f32.mrf.mxu0
        %v1131 = vadd.f32 %v1117, %v1130
        %v1132 = vpop.f32.mrf.mxu0
        %v1133 = vadd.f32 %v1119, %v1132
        %1134 = vdwg.mxu0
        %1135 = vmatpush.bf16.msra.mxu0 %v1008
        %1136 = vmatpush.bf16.msra.mxu0 %v1004
        %1137 = vmatpush.bf16.msra.mxu0 %v1000
        %1138 = vmatpush.bf16.msra.mxu0 %v996
        %1139 = vmatpush.bf16.msra.mxu0 %v992
        %1140 = vmatpush.bf16.msra.mxu0 %v988
        %1141 = vmatpush.bf16.msra.mxu0 %v984
        %1142 = vmatpush.bf16.msra.mxu0 %v980
        %1143 = vmatmul.bf16.gmra.mxu0 %v711
        %v1144 = vpop.f32.mrf.mxu0
        %v1145 = vadd.f32 %v780, %v1144
        %v1146 = vpop.f32.mrf.mxu0
        %v1147 = vadd.f32 %v780, %v1146
        %1148 = vdwg.mxu0
        %1149 = vmatpush.bf16.msra.mxu0 %v1040
        %1150 = vmatpush.bf16.msra.mxu0 %v1036
        %1151 = vmatpush.bf16.msra.mxu0 %v1032
        %1152 = vmatpush.bf16.msra.mxu0 %v1028
        %1153 = vmatpush.bf16.msra.mxu0 %v1024
        %1154 = vmatpush.bf16.msra.mxu0 %v1020
        %1155 = vmatpush.bf16.msra.mxu0 %v1016
        %1156 = vmatpush.bf16.msra.mxu0 %v1012
        %1157 = vmatmul.bf16.gmra.mxu0 %v712
        %v1158 = vpop.f32.mrf.mxu0
        %v1159 = vadd.f32 %v1145, %v1158
        %v1160 = vpop.f32.mrf.mxu0
        %v1161 = vadd.f32 %v1147, %v1160
        %1162 = vdwg.mxu0
        %1163 = vmatpush.bf16.msra.mxu0 %v1009
        %1164 = vmatpush.bf16.msra.mxu0 %v1005
        %1165 = vmatpush.bf16.msra.mxu0 %v1001
        %1166 = vmatpush.bf16.msra.mxu0 %v997
        %1167 = vmatpush.bf16.msra.mxu0 %v993
        %1168 = vmatpush.bf16.msra.mxu0 %v989
        %1169 = vmatpush.bf16.msra.mxu0 %v985
        %1170 = vmatpush.bf16.msra.mxu0 %v981
        %1171 = vmatmul.bf16.gmra.mxu0 %v711
        %v1172 = vpop.f32.mrf.mxu0
        %v1173 = vadd.f32 %v781, %v1172
        %v1174 = vpop.f32.mrf.mxu0
        %v1175 = vadd.f32 %v781, %v1174
        %1176 = vdwg.mxu0
        %1177 = vmatpush.bf16.msra.mxu0 %v1041
        %1178 = vmatpush.bf16.msra.mxu0 %v1037
        %1179 = vmatpush.bf16.msra.mxu0 %v1033
        %1180 = vmatpush.bf16.msra.mxu0 %v1029
        %1181 = vmatpush.bf16.msra.mxu0 %v1025
        %1182 = vmatpush.bf16.msra.mxu0 %v1021
        %1183 = vmatpush.bf16.msra.mxu0 %v1017
        %1184 = vmatpush.bf16.msra.mxu0 %v1013
        %1185 = vmatmul.bf16.gmra.mxu0 %v712
        %v1186 = vpop.f32.mrf.mxu0
        %v1187 = vadd.f32 %v1173, %v1186
        %v1188 = vpop.f32.mrf.mxu0
        %v1189 = vadd.f32 %v1175, %v1188
        %1190 = vdwg.mxu0
        %1191 = vmatpush.bf16.msra.mxu0 %v1010
        %1192 = vmatpush.bf16.msra.mxu0 %v1006
        %1193 = vmatpush.bf16.msra.mxu0 %v1002
        %1194 = vmatpush.bf16.msra.mxu0 %v998
        %1195 = vmatpush.bf16.msra.mxu0 %v994
        %1196 = vmatpush.bf16.msra.mxu0 %v990
        %1197 = vmatpush.bf16.msra.mxu0 %v986
        %1198 = vmatpush.bf16.msra.mxu0 %v982
        %1199 = vmatmul.bf16.gmra.mxu0 %v711
        %v1200 = vpop.f32.mrf.mxu0
        %v1201 = vadd.f32 %v782, %v1200
        %v1202 = vpop.f32.mrf.mxu0
        %v1203 = vadd.f32 %v782, %v1202
        %1204 = vdwg.mxu0
        %1205 = vmatpush.bf16.msra.mxu0 %v1042
        %1206 = vmatpush.bf16.msra.mxu0 %v1038
        %1207 = vmatpush.bf16.msra.mxu0 %v1034
        %1208 = vmatpush.bf16.msra.mxu0 %v1030
        %1209 = vmatpush.bf16.msra.mxu0 %v1026
        %1210 = vmatpush.bf16.msra.mxu0 %v1022
        %1211 = vmatpush.bf16.msra.mxu0 %v1018
        %1212 = vmatpush.bf16.msra.mxu0 %v1014
        %1213 = vmatmul.bf16.gmra.mxu0 %v712
        %v1214 = vpop.f32.mrf.mxu0
        %v1215 = vadd.f32 %v1201, %v1214
        %v1216 = vpop.f32.mrf.mxu0
        %v1217 = vadd.f32 %v1203, %v1216
        %1218 = vdwg.mxu0
        %v1219 = vadd.f32 %v1131, %v1159
        %v1220 = vadd.f32 %v1219, %v1187
        %v1221 = vadd.f32 %v1220, %v1215
        %1222 = vadd.xlane.f32.xlu0 %v1221
        %v1223 = vpop.xlane.xlu0 %1222
        %v1224 = vadd.f32 %v1133, %v1161
        %v1225 = vadd.f32 %v1224, %v1189
        %v1226 = vadd.f32 %v1225, %v1217
        %1227 = vadd.xlane.f32.xlu0 %v1226
        %v1228 = vpop.xlane.xlu0 %1227
        %v1229 = vmul.f32 %v1131, %v1131
        %v1230 = vmul.f32 %v1159, %v1159
        %v1231 = vmul.f32 %v1187, %v1187
        %v1232 = vmul.f32 %v1215, %v1215
        %v1233 = vmul.f32 %v1133, %v1133
        %v1234 = vmul.f32 %v1161, %v1161
        %v1235 = vmul.f32 %v1189, %v1189
        %v1236 = vmul.f32 %v1217, %v1217
        %v1237 = vadd.f32 %v1229, %v1230
        %v1238 = vadd.f32 %v1237, %v1231
        %v1239 = vadd.f32 %v1238, %v1232
        %1240 = vadd.xlane.f32.xlu0 %v1239
        %v1241 = vpop.xlane.xlu0 %1240
        %v1242 = vadd.f32 %v1233, %v1234
        %v1243 = vadd.f32 %v1242, %v1235
        %v1244 = vadd.f32 %v1243, %v1236
        %1245 = vadd.xlane.f32.xlu0 %v1244
        %v1246 = vpop.xlane.xlu0 %1245
        %v1247 = vmul.f32 %v1223, 0.001953125
        %v1248 = vmul.f32 %v1228, 0.001953125
        %v1249 = vmul.f32 %v1241, 0.001953125
        %v1250 = vmul.f32 %v1246, 0.001953125
        %v1251 = vmul.f32 %v1247, %v1247
        %v1252 = vmul.f32 %v1248, %v1248
        %v1253 = vsub.f32 %v1249, %v1251
        %v1254 = vsub.f32 %v1250, %v1252
        %v1255 = vsub.f32 %v1131, %v1247
        %v1256 = vsub.f32 %v1159, %v1247
        %v1257 = vsub.f32 %v1187, %v1247
        %v1258 = vsub.f32 %v1215, %v1247
        %v1259 = vsub.f32 %v1133, %v1248
        %v1260 = vsub.f32 %v1161, %v1248
        %v1261 = vsub.f32 %v1189, %v1248
        %v1262 = vsub.f32 %v1217, %v1248
        %v1263 = vadd.f32 %v1253, 1e-05
        %v1264 = vadd.f32 %v1254, 1e-05
        %v1265 = vrsqrt.pop %v1263
        %v1266 = vmul.f32 %v1265, %v1263
        %v1267 = vmul.f32 %v1266, %v1265
        %v1268 = vmul.f32 0.5, %v1267
        %v1269 = vsub.f32 1.5, %v1268
        %v1270 = vmul.f32 %v1265, %v1269
        %vm1271 = vweird.f32 %v1263
        %vm1272 = vweird.f32 %v1265
        %vm1273 = vmor %vm1271, %vm1272
        %v1274 = vsel %vm1273, %v1265, %v1270
        %v1275 = vrsqrt.pop %v1264
        %v1276 = vmul.f32 %v1275, %v1264
        %v1277 = vmul.f32 %v1276, %v1275
        %v1278 = vmul.f32 0.5, %v1277
        %v1279 = vsub.f32 1.5, %v1278
        %v1280 = vmul.f32 %v1275, %v1279
        %vm1281 = vweird.f32 %v1264
        %vm1282 = vweird.f32 %v1275
        %vm1283 = vmor %vm1281, %vm1282
        %v1284 = vsel %vm1283, %v1275, %v1280
        %v1285 = vmul.f32 %v1255, %v1274
        %v1286 = vmul.f32 %v1256, %v1274
        %v1287 = vmul.f32 %v1257, %v1274
        %v1288 = vmul.f32 %v1258, %v1274
        %v1289 = vmul.f32 %v1259, %v1284
        %v1290 = vmul.f32 %v1260, %v1284
        %v1291 = vmul.f32 %v1261, %v1284
        %v1292 = vmul.f32 %v1262, %v1284
        %v1293 = vld [vmem:[%s7] sm:$0xf]
        %v1295 = vperm.slane %v1293, 0
        %v1296 = vperm.slane %v1293, 1
        %v1297 = vperm.slane %v1293, 2
        %v1298 = vperm.slane %v1293, 3
        %v1303 = vmul.f32 %v1285, %v1295
        %v1304 = vmul.f32 %v1286, %v1296
        %v1305 = vmul.f32 %v1287, %v1297
        %v1306 = vmul.f32 %v1288, %v1298
        %v1307 = vmul.f32 %v1289, %v1295
        %v1308 = vmul.f32 %v1290, %v1296
        %v1309 = vmul.f32 %v1291, %v1297
        %v1310 = vmul.f32 %v1292, %v1298
        %v1311 = vld [vmem:[%s8] sm:$0xf]
        %v1313 = vperm.slane %v1311, 0
        %v1314 = vperm.slane %v1311, 1
        %v1315 = vperm.slane %v1311, 2
        %v1316 = vperm.slane %v1311, 3
        %v1321 = vadd.f32 %v1303, %v1313
        %v1322 = vadd.f32 %v1304, %v1314
        %v1323 = vadd.f32 %v1305, %v1315
        %v1324 = vadd.f32 %v1306, %v1316
        %v1325 = vadd.f32 %v1307, %v1313
        %v1326 = vadd.f32 %v1308, %v1314
        %v1327 = vadd.f32 %v1309, %v1315
        %v1328 = vadd.f32 %v1310, %v1316
        %v1329 = vmul.f32 %v1321, 0.01
        %v1330 = vmul.f32 %v1322, 0.01
        %v1331 = vmul.f32 %v1323, 0.01
        %v1332 = vmul.f32 %v1324, 0.01
        %v1333 = vmul.f32 %v1325, 0.01
        %v1334 = vmul.f32 %v1326, 0.01
        %v1335 = vmul.f32 %v1327, 0.01
        %v1336 = vmul.f32 %v1328, 0.01
        %v1337 = vmax.f32 %v1321, %v1329
        %v1338 = vmax.f32 %v1322, %v1330
        %v1339 = vmax.f32 %v1323, %v1331
        %v1340 = vmax.f32 %v1324, %v1332
        %v1341 = vmax.f32 %v1325, %v1333
        %v1342 = vmax.f32 %v1326, %v1334
        %v1343 = vmax.f32 %v1327, %v1335
        %v1344 = vmax.f32 %v1328, %v1336
        %v1345 = vpack.c.bf16 %v1341, %v1337
        %v1346 = vpack.c.bf16 %v1342, %v1338
        %v1347 = vpack.c.bf16 %v1343, %v1339
        %v1348 = vpack.c.bf16 %v1344, %v1340
        %v1349 = vld [vmem:[#allocation6] sm:$0xff]
        %v1350 = vld [vmem:[#allocation6 + $0x8] sm:$0xff]
        %v1351 = vld [vmem:[#allocation6 + $0x10] sm:$0xff]
        %v1352 = vld [vmem:[#allocation6 + $0x18] sm:$0xff]
        %v1353 = vld [vmem:[#allocation6 + $0x20] sm:$0xff]
        %v1354 = vld [vmem:[#allocation6 + $0x28] sm:$0xff]
        %v1355 = vld [vmem:[#allocation6 + $0x30] sm:$0xff]
        %v1356 = vld [vmem:[#allocation6 + $0x38] sm:$0xff]
        %v1357 = vld [vmem:[#allocation6 + $0x40] sm:$0xff]
        %v1358 = vld [vmem:[#allocation6 + $0x48] sm:$0xff]
        %v1359 = vld [vmem:[#allocation6 + $0x50] sm:$0xff]
        %v1360 = vld [vmem:[#allocation6 + $0x58] sm:$0xff]
        %v1361 = vld [vmem:[#allocation6 + $0x60] sm:$0xff]
        %v1362 = vld [vmem:[#allocation6 + $0x68] sm:$0xff]
        %v1363 = vld [vmem:[#allocation6 + $0x70] sm:$0xff]
        %v1364 = vld [vmem:[#allocation6 + $0x78] sm:$0xff]
        %v1365 = vld [vmem:[#allocation6 + $0x80] sm:$0xff]
        %v1366 = vld [vmem:[#allocation6 + $0x88] sm:$0xff]
        %v1367 = vld [vmem:[#allocation6 + $0x90] sm:$0xff]
        %v1368 = vld [vmem:[#allocation6 + $0x98] sm:$0xff]
        %v1369 = vld [vmem:[#allocation6 + $0xa0] sm:$0xff]
        %v1370 = vld [vmem:[#allocation6 + $0xa8] sm:$0xff]
        %v1371 = vld [vmem:[#allocation6 + $0xb0] sm:$0xff]
        %v1372 = vld [vmem:[#allocation6 + $0xb8] sm:$0xff]
        %v1373 = vld [vmem:[#allocation6 + $0xc0] sm:$0xff]
        %v1374 = vld [vmem:[#allocation6 + $0xc8] sm:$0xff]
        %v1375 = vld [vmem:[#allocation6 + $0xd0] sm:$0xff]
        %v1376 = vld [vmem:[#allocation6 + $0xd8] sm:$0xff]
        %v1377 = vld [vmem:[#allocation6 + $0xe0] sm:$0xff]
        %v1378 = vld [vmem:[#allocation6 + $0xe8] sm:$0xff]
        %v1379 = vld [vmem:[#allocation6 + $0xf0] sm:$0xff]
        %v1380 = vld [vmem:[#allocation6 + $0xf8] sm:$0xff]
        %v1381 = vld [vmem:[#allocation6 + $0x100] sm:$0xff]
        %v1382 = vld [vmem:[#allocation6 + $0x108] sm:$0xff]
        %v1383 = vld [vmem:[#allocation6 + $0x110] sm:$0xff]
        %v1384 = vld [vmem:[#allocation6 + $0x118] sm:$0xff]
        %v1385 = vld [vmem:[#allocation6 + $0x120] sm:$0xff]
        %v1386 = vld [vmem:[#allocation6 + $0x128] sm:$0xff]
        %v1387 = vld [vmem:[#allocation6 + $0x130] sm:$0xff]
        %v1388 = vld [vmem:[#allocation6 + $0x138] sm:$0xff]
        %v1389 = vld [vmem:[#allocation6 + $0x140] sm:$0xff]
        %v1390 = vld [vmem:[#allocation6 + $0x148] sm:$0xff]
        %v1391 = vld [vmem:[#allocation6 + $0x150] sm:$0xff]
        %v1392 = vld [vmem:[#allocation6 + $0x158] sm:$0xff]
        %v1393 = vld [vmem:[#allocation6 + $0x160] sm:$0xff]
        %v1394 = vld [vmem:[#allocation6 + $0x168] sm:$0xff]
        %v1395 = vld [vmem:[#allocation6 + $0x170] sm:$0xff]
        %v1396 = vld [vmem:[#allocation6 + $0x178] sm:$0xff]
        %v1397 = vld [vmem:[#allocation6 + $0x180] sm:$0xff]
        %v1398 = vld [vmem:[#allocation6 + $0x188] sm:$0xff]
        %v1399 = vld [vmem:[#allocation6 + $0x190] sm:$0xff]
        %v1400 = vld [vmem:[#allocation6 + $0x198] sm:$0xff]
        %v1401 = vld [vmem:[#allocation6 + $0x1a0] sm:$0xff]
        %v1402 = vld [vmem:[#allocation6 + $0x1a8] sm:$0xff]
        %v1403 = vld [vmem:[#allocation6 + $0x1b0] sm:$0xff]
        %v1404 = vld [vmem:[#allocation6 + $0x1b8] sm:$0xff]
        %v1405 = vld [vmem:[#allocation6 + $0x1c0] sm:$0xff]
        %v1406 = vld [vmem:[#allocation6 + $0x1c8] sm:$0xff]
        %v1407 = vld [vmem:[#allocation6 + $0x1d0] sm:$0xff]
        %v1408 = vld [vmem:[#allocation6 + $0x1d8] sm:$0xff]
        %v1409 = vld [vmem:[#allocation6 + $0x1e0] sm:$0xff]
        %v1410 = vld [vmem:[#allocation6 + $0x1e8] sm:$0xff]
        %v1411 = vld [vmem:[#allocation6 + $0x1f0] sm:$0xff]
        %v1412 = vld [vmem:[#allocation6 + $0x1f8] sm:$0xff]
        %v1413 = vld [vmem:[#allocation6 + $0x200] sm:$0xff]
        %v1414 = vld [vmem:[#allocation6 + $0x208] sm:$0xff]
        %v1415 = vld [vmem:[#allocation6 + $0x210] sm:$0xff]
        %v1416 = vld [vmem:[#allocation6 + $0x218] sm:$0xff]
        %v1417 = vld [vmem:[#allocation6 + $0x220] sm:$0xff]
        %v1418 = vld [vmem:[#allocation6 + $0x228] sm:$0xff]
        %v1419 = vld [vmem:[#allocation6 + $0x230] sm:$0xff]
        %v1420 = vld [vmem:[#allocation6 + $0x238] sm:$0xff]
        %v1421 = vld [vmem:[#allocation6 + $0x240] sm:$0xff]
        %v1422 = vld [vmem:[#allocation6 + $0x248] sm:$0xff]
        %v1423 = vld [vmem:[#allocation6 + $0x250] sm:$0xff]
        %v1424 = vld [vmem:[#allocation6 + $0x258] sm:$0xff]
        %v1425 = vld [vmem:[#allocation6 + $0x260] sm:$0xff]
        %v1426 = vld [vmem:[#allocation6 + $0x268] sm:$0xff]
        %v1427 = vld [vmem:[#allocation6 + $0x270] sm:$0xff]
        %v1428 = vld [vmem:[#allocation6 + $0x278] sm:$0xff]
        %v1429 = vld [vmem:[#allocation6 + $0x280] sm:$0xff]
        %v1430 = vld [vmem:[#allocation6 + $0x288] sm:$0xff]
        %v1431 = vld [vmem:[#allocation6 + $0x290] sm:$0xff]
        %v1432 = vld [vmem:[#allocation6 + $0x298] sm:$0xff]
        %v1433 = vld [vmem:[#allocation6 + $0x2a0] sm:$0xff]
        %v1434 = vld [vmem:[#allocation6 + $0x2a8] sm:$0xff]
        %v1435 = vld [vmem:[#allocation6 + $0x2b0] sm:$0xff]
        %v1436 = vld [vmem:[#allocation6 + $0x2b8] sm:$0xff]
        %v1437 = vld [vmem:[#allocation6 + $0x2c0] sm:$0xff]
        %v1438 = vld [vmem:[#allocation6 + $0x2c8] sm:$0xff]
        %v1439 = vld [vmem:[#allocation6 + $0x2d0] sm:$0xff]
        %v1440 = vld [vmem:[#allocation6 + $0x2d8] sm:$0xff]
        %v1441 = vld [vmem:[#allocation6 + $0x2e0] sm:$0xff]
        %v1442 = vld [vmem:[#allocation6 + $0x2e8] sm:$0xff]
        %v1443 = vld [vmem:[#allocation6 + $0x2f0] sm:$0xff]
        %v1444 = vld [vmem:[#allocation6 + $0x2f8] sm:$0xff]
        %v1445 = vld [vmem:[#allocation6 + $0x300] sm:$0xff]
        %v1446 = vld [vmem:[#allocation6 + $0x308] sm:$0xff]
        %v1447 = vld [vmem:[#allocation6 + $0x310] sm:$0xff]
        %v1448 = vld [vmem:[#allocation6 + $0x318] sm:$0xff]
        %v1449 = vld [vmem:[#allocation6 + $0x320] sm:$0xff]
        %v1450 = vld [vmem:[#allocation6 + $0x328] sm:$0xff]
        %v1451 = vld [vmem:[#allocation6 + $0x330] sm:$0xff]
        %v1452 = vld [vmem:[#allocation6 + $0x338] sm:$0xff]
        %v1453 = vld [vmem:[#allocation6 + $0x340] sm:$0xff]
        %v1454 = vld [vmem:[#allocation6 + $0x348] sm:$0xff]
        %v1455 = vld [vmem:[#allocation6 + $0x350] sm:$0xff]
        %v1456 = vld [vmem:[#allocation6 + $0x358] sm:$0xff]
        %v1457 = vld [vmem:[#allocation6 + $0x360] sm:$0xff]
        %v1458 = vld [vmem:[#allocation6 + $0x368] sm:$0xff]
        %v1459 = vld [vmem:[#allocation6 + $0x370] sm:$0xff]
        %v1460 = vld [vmem:[#allocation6 + $0x378] sm:$0xff]
        %v1461 = vld [vmem:[#allocation6 + $0x380] sm:$0xff]
        %v1462 = vld [vmem:[#allocation6 + $0x388] sm:$0xff]
        %v1463 = vld [vmem:[#allocation6 + $0x390] sm:$0xff]
        %v1464 = vld [vmem:[#allocation6 + $0x398] sm:$0xff]
        %v1465 = vld [vmem:[#allocation6 + $0x3a0] sm:$0xff]
        %v1466 = vld [vmem:[#allocation6 + $0x3a8] sm:$0xff]
        %v1467 = vld [vmem:[#allocation6 + $0x3b0] sm:$0xff]
        %v1468 = vld [vmem:[#allocation6 + $0x3b8] sm:$0xff]
        %v1469 = vld [vmem:[#allocation6 + $0x3c0] sm:$0xff]
        %v1470 = vld [vmem:[#allocation6 + $0x3c8] sm:$0xff]
        %v1471 = vld [vmem:[#allocation6 + $0x3d0] sm:$0xff]
        %v1472 = vld [vmem:[#allocation6 + $0x3d8] sm:$0xff]
        %v1473 = vld [vmem:[#allocation6 + $0x3e0] sm:$0xff]
        %v1474 = vld [vmem:[#allocation6 + $0x3e8] sm:$0xff]
        %v1475 = vld [vmem:[#allocation6 + $0x3f0] sm:$0xff]
        %v1476 = vld [vmem:[#allocation6 + $0x3f8] sm:$0xff]
        %v1477 = vld [vmem:[#allocation6 + $0x400] sm:$0xff]
        %v1478 = vld [vmem:[#allocation6 + $0x408] sm:$0xff]
        %v1479 = vld [vmem:[#allocation6 + $0x410] sm:$0xff]
        %v1480 = vld [vmem:[#allocation6 + $0x418] sm:$0xff]
        %v1481 = vld [vmem:[#allocation6 + $0x420] sm:$0xff]
        %v1482 = vld [vmem:[#allocation6 + $0x428] sm:$0xff]
        %v1483 = vld [vmem:[#allocation6 + $0x430] sm:$0xff]
        %v1484 = vld [vmem:[#allocation6 + $0x438] sm:$0xff]
        %v1485 = vld [vmem:[#allocation6 + $0x440] sm:$0xff]
        %v1486 = vld [vmem:[#allocation6 + $0x448] sm:$0xff]
        %v1487 = vld [vmem:[#allocation6 + $0x450] sm:$0xff]
        %v1488 = vld [vmem:[#allocation6 + $0x458] sm:$0xff]
        %v1489 = vld [vmem:[#allocation6 + $0x460] sm:$0xff]
        %v1490 = vld [vmem:[#allocation6 + $0x468] sm:$0xff]
        %v1491 = vld [vmem:[#allocation6 + $0x470] sm:$0xff]
        %v1492 = vld [vmem:[#allocation6 + $0x478] sm:$0xff]
        %v1493 = vld [vmem:[#allocation6 + $0x480] sm:$0xff]
        %v1494 = vld [vmem:[#allocation6 + $0x488] sm:$0xff]
        %v1495 = vld [vmem:[#allocation6 + $0x490] sm:$0xff]
        %v1496 = vld [vmem:[#allocation6 + $0x498] sm:$0xff]
        %v1497 = vld [vmem:[#allocation6 + $0x4a0] sm:$0xff]
        %v1498 = vld [vmem:[#allocation6 + $0x4a8] sm:$0xff]
        %v1499 = vld [vmem:[#allocation6 + $0x4b0] sm:$0xff]
        %v1500 = vld [vmem:[#allocation6 + $0x4b8] sm:$0xff]
        %v1501 = vld [vmem:[#allocation6 + $0x4c0] sm:$0xff]
        %v1502 = vld [vmem:[#allocation6 + $0x4c8] sm:$0xff]
        %v1503 = vld [vmem:[#allocation6 + $0x4d0] sm:$0xff]
        %v1504 = vld [vmem:[#allocation6 + $0x4d8] sm:$0xff]
        %v1505 = vld [vmem:[#allocation6 + $0x4e0] sm:$0xff]
        %v1506 = vld [vmem:[#allocation6 + $0x4e8] sm:$0xff]
        %v1507 = vld [vmem:[#allocation6 + $0x4f0] sm:$0xff]
        %v1508 = vld [vmem:[#allocation6 + $0x4f8] sm:$0xff]
        %v1509 = vld [vmem:[#allocation6 + $0x500] sm:$0xff]
        %v1510 = vld [vmem:[#allocation6 + $0x508] sm:$0xff]
        %v1511 = vld [vmem:[#allocation6 + $0x510] sm:$0xff]
        %v1512 = vld [vmem:[#allocation6 + $0x518] sm:$0xff]
        %v1513 = vld [vmem:[#allocation6 + $0x520] sm:$0xff]
        %v1514 = vld [vmem:[#allocation6 + $0x528] sm:$0xff]
        %v1515 = vld [vmem:[#allocation6 + $0x530] sm:$0xff]
        %v1516 = vld [vmem:[#allocation6 + $0x538] sm:$0xff]
        %v1517 = vld [vmem:[#allocation6 + $0x540] sm:$0xff]
        %v1518 = vld [vmem:[#allocation6 + $0x548] sm:$0xff]
        %v1519 = vld [vmem:[#allocation6 + $0x550] sm:$0xff]
        %v1520 = vld [vmem:[#allocation6 + $0x558] sm:$0xff]
        %v1521 = vld [vmem:[#allocation6 + $0x560] sm:$0xff]
        %v1522 = vld [vmem:[#allocation6 + $0x568] sm:$0xff]
        %v1523 = vld [vmem:[#allocation6 + $0x570] sm:$0xff]
        %v1524 = vld [vmem:[#allocation6 + $0x578] sm:$0xff]
        %v1525 = vld [vmem:[#allocation6 + $0x580] sm:$0xff]
        %v1526 = vld [vmem:[#allocation6 + $0x588] sm:$0xff]
        %v1527 = vld [vmem:[#allocation6 + $0x590] sm:$0xff]
        %v1528 = vld [vmem:[#allocation6 + $0x598] sm:$0xff]
        %v1529 = vld [vmem:[#allocation6 + $0x5a0] sm:$0xff]
        %v1530 = vld [vmem:[#allocation6 + $0x5a8] sm:$0xff]
        %v1531 = vld [vmem:[#allocation6 + $0x5b0] sm:$0xff]
        %v1532 = vld [vmem:[#allocation6 + $0x5b8] sm:$0xff]
        %v1533 = vld [vmem:[#allocation6 + $0x5c0] sm:$0xff]
        %v1534 = vld [vmem:[#allocation6 + $0x5c8] sm:$0xff]
        %v1535 = vld [vmem:[#allocation6 + $0x5d0] sm:$0xff]
        %v1536 = vld [vmem:[#allocation6 + $0x5d8] sm:$0xff]
        %v1537 = vld [vmem:[#allocation6 + $0x5e0] sm:$0xff]
        %v1538 = vld [vmem:[#allocation6 + $0x5e8] sm:$0xff]
        %v1539 = vld [vmem:[#allocation6 + $0x5f0] sm:$0xff]
        %v1540 = vld [vmem:[#allocation6 + $0x5f8] sm:$0xff]
        %v1541 = vld [vmem:[#allocation6 + $0x600] sm:$0xff]
        %v1542 = vld [vmem:[#allocation6 + $0x608] sm:$0xff]
        %v1543 = vld [vmem:[#allocation6 + $0x610] sm:$0xff]
        %v1544 = vld [vmem:[#allocation6 + $0x618] sm:$0xff]
        %v1545 = vld [vmem:[#allocation6 + $0x620] sm:$0xff]
        %v1546 = vld [vmem:[#allocation6 + $0x628] sm:$0xff]
        %v1547 = vld [vmem:[#allocation6 + $0x630] sm:$0xff]
        %v1548 = vld [vmem:[#allocation6 + $0x638] sm:$0xff]
        %v1549 = vld [vmem:[#allocation6 + $0x640] sm:$0xff]
        %v1550 = vld [vmem:[#allocation6 + $0x648] sm:$0xff]
        %v1551 = vld [vmem:[#allocation6 + $0x650] sm:$0xff]
        %v1552 = vld [vmem:[#allocation6 + $0x658] sm:$0xff]
        %v1553 = vld [vmem:[#allocation6 + $0x660] sm:$0xff]
        %v1554 = vld [vmem:[#allocation6 + $0x668] sm:$0xff]
        %v1555 = vld [vmem:[#allocation6 + $0x670] sm:$0xff]
        %v1556 = vld [vmem:[#allocation6 + $0x678] sm:$0xff]
        %v1557 = vld [vmem:[#allocation6 + $0x680] sm:$0xff]
        %v1558 = vld [vmem:[#allocation6 + $0x688] sm:$0xff]
        %v1559 = vld [vmem:[#allocation6 + $0x690] sm:$0xff]
        %v1560 = vld [vmem:[#allocation6 + $0x698] sm:$0xff]
        %v1561 = vld [vmem:[#allocation6 + $0x6a0] sm:$0xff]
        %v1562 = vld [vmem:[#allocation6 + $0x6a8] sm:$0xff]
        %v1563 = vld [vmem:[#allocation6 + $0x6b0] sm:$0xff]
        %v1564 = vld [vmem:[#allocation6 + $0x6b8] sm:$0xff]
        %v1565 = vld [vmem:[#allocation6 + $0x6c0] sm:$0xff]
        %v1566 = vld [vmem:[#allocation6 + $0x6c8] sm:$0xff]
        %v1567 = vld [vmem:[#allocation6 + $0x6d0] sm:$0xff]
        %v1568 = vld [vmem:[#allocation6 + $0x6d8] sm:$0xff]
        %v1569 = vld [vmem:[#allocation6 + $0x6e0] sm:$0xff]
        %v1570 = vld [vmem:[#allocation6 + $0x6e8] sm:$0xff]
        %v1571 = vld [vmem:[#allocation6 + $0x6f0] sm:$0xff]
        %v1572 = vld [vmem:[#allocation6 + $0x6f8] sm:$0xff]
        %v1573 = vld [vmem:[#allocation6 + $0x700] sm:$0xff]
        %v1574 = vld [vmem:[#allocation6 + $0x708] sm:$0xff]
        %v1575 = vld [vmem:[#allocation6 + $0x710] sm:$0xff]
        %v1576 = vld [vmem:[#allocation6 + $0x718] sm:$0xff]
        %v1577 = vld [vmem:[#allocation6 + $0x720] sm:$0xff]
        %v1578 = vld [vmem:[#allocation6 + $0x728] sm:$0xff]
        %v1579 = vld [vmem:[#allocation6 + $0x730] sm:$0xff]
        %v1580 = vld [vmem:[#allocation6 + $0x738] sm:$0xff]
        %v1581 = vld [vmem:[#allocation6 + $0x740] sm:$0xff]
        %v1582 = vld [vmem:[#allocation6 + $0x748] sm:$0xff]
        %v1583 = vld [vmem:[#allocation6 + $0x750] sm:$0xff]
        %v1584 = vld [vmem:[#allocation6 + $0x758] sm:$0xff]
        %v1585 = vld [vmem:[#allocation6 + $0x760] sm:$0xff]
        %v1586 = vld [vmem:[#allocation6 + $0x768] sm:$0xff]
        %v1587 = vld [vmem:[#allocation6 + $0x770] sm:$0xff]
        %v1588 = vld [vmem:[#allocation6 + $0x778] sm:$0xff]
        %v1589 = vld [vmem:[#allocation6 + $0x780] sm:$0xff]
        %v1590 = vld [vmem:[#allocation6 + $0x788] sm:$0xff]
        %v1591 = vld [vmem:[#allocation6 + $0x790] sm:$0xff]
        %v1592 = vld [vmem:[#allocation6 + $0x798] sm:$0xff]
        %v1593 = vld [vmem:[#allocation6 + $0x7a0] sm:$0xff]
        %v1594 = vld [vmem:[#allocation6 + $0x7a8] sm:$0xff]
        %v1595 = vld [vmem:[#allocation6 + $0x7b0] sm:$0xff]
        %v1596 = vld [vmem:[#allocation6 + $0x7b8] sm:$0xff]
        %v1597 = vld [vmem:[#allocation6 + $0x7c0] sm:$0xff]
        %v1598 = vld [vmem:[#allocation6 + $0x7c8] sm:$0xff]
        %v1599 = vld [vmem:[#allocation6 + $0x7d0] sm:$0xff]
        %v1600 = vld [vmem:[#allocation6 + $0x7d8] sm:$0xff]
        %v1601 = vld [vmem:[#allocation6 + $0x7e0] sm:$0xff]
        %v1602 = vld [vmem:[#allocation6 + $0x7e8] sm:$0xff]
        %v1603 = vld [vmem:[#allocation6 + $0x7f0] sm:$0xff]
        %v1604 = vld [vmem:[#allocation6 + $0x7f8] sm:$0xff]
        %v1605 = vld [vmem:[%s10] sm:$0xff]
        %v1607 = vperm.slane %v1605, 0
        %v1608 = vperm.slane %v1605, 1
        %v1609 = vperm.slane %v1605, 2
        %v1610 = vperm.slane %v1605, 3
        %v1611 = vperm.slane %v1605, 4
        %v1612 = vperm.slane %v1605, 5
        %v1613 = vperm.slane %v1605, 6
        %v1614 = vperm.slane %v1605, 7
        %v1879 = vunpack.c.l.b16 %v1349
        %v1880 = vunpack.c.h.b16 %v1349
        %v1881 = vunpack.c.l.b16 %v1350
        %v1882 = vunpack.c.h.b16 %v1350
        %v1883 = vunpack.c.l.b16 %v1351
        %v1884 = vunpack.c.h.b16 %v1351
        %v1885 = vunpack.c.l.b16 %v1352
        %v1886 = vunpack.c.h.b16 %v1352
        %v1887 = vunpack.c.l.b16 %v1353
        %v1888 = vunpack.c.h.b16 %v1353
        %v1889 = vunpack.c.l.b16 %v1354
        %v1890 = vunpack.c.h.b16 %v1354
        %v1891 = vunpack.c.l.b16 %v1355
        %v1892 = vunpack.c.h.b16 %v1355
        %v1893 = vunpack.c.l.b16 %v1356
        %v1894 = vunpack.c.h.b16 %v1356
        %v1895 = vunpack.c.l.b16 %v1357
        %v1896 = vunpack.c.h.b16 %v1357
        %v1897 = vunpack.c.l.b16 %v1358
        %v1898 = vunpack.c.h.b16 %v1358
        %v1899 = vunpack.c.l.b16 %v1359
        %v1900 = vunpack.c.h.b16 %v1359
        %v1901 = vunpack.c.l.b16 %v1360
        %v1902 = vunpack.c.h.b16 %v1360
        %v1903 = vunpack.c.l.b16 %v1361
        %v1904 = vunpack.c.h.b16 %v1361
        %v1905 = vunpack.c.l.b16 %v1362
        %v1906 = vunpack.c.h.b16 %v1362
        %v1907 = vunpack.c.l.b16 %v1363
        %v1908 = vunpack.c.h.b16 %v1363
        %v1909 = vunpack.c.l.b16 %v1364
        %v1910 = vunpack.c.h.b16 %v1364
        %v1911 = vunpack.c.l.b16 %v1365
        %v1912 = vunpack.c.h.b16 %v1365
        %v1913 = vunpack.c.l.b16 %v1366
        %v1914 = vunpack.c.h.b16 %v1366
        %v1915 = vunpack.c.l.b16 %v1367
        %v1916 = vunpack.c.h.b16 %v1367
        %v1917 = vunpack.c.l.b16 %v1368
        %v1918 = vunpack.c.h.b16 %v1368
        %v1919 = vunpack.c.l.b16 %v1369
        %v1920 = vunpack.c.h.b16 %v1369
        %v1921 = vunpack.c.l.b16 %v1370
        %v1922 = vunpack.c.h.b16 %v1370
        %v1923 = vunpack.c.l.b16 %v1371
        %v1924 = vunpack.c.h.b16 %v1371
        %v1925 = vunpack.c.l.b16 %v1372
        %v1926 = vunpack.c.h.b16 %v1372
        %v1927 = vunpack.c.l.b16 %v1373
        %v1928 = vunpack.c.h.b16 %v1373
        %v1929 = vunpack.c.l.b16 %v1374
        %v1930 = vunpack.c.h.b16 %v1374
        %v1931 = vunpack.c.l.b16 %v1375
        %v1932 = vunpack.c.h.b16 %v1375
        %v1933 = vunpack.c.l.b16 %v1376
        %v1934 = vunpack.c.h.b16 %v1376
        %v1935 = vunpack.c.l.b16 %v1377
        %v1936 = vunpack.c.h.b16 %v1377
        %v1937 = vunpack.c.l.b16 %v1378
        %v1938 = vunpack.c.h.b16 %v1378
        %v1939 = vunpack.c.l.b16 %v1379
        %v1940 = vunpack.c.h.b16 %v1379
        %v1941 = vunpack.c.l.b16 %v1380
        %v1942 = vunpack.c.h.b16 %v1380
        %v1943 = vunpack.c.l.b16 %v1381
        %v1944 = vunpack.c.h.b16 %v1381
        %v1945 = vunpack.c.l.b16 %v1382
        %v1946 = vunpack.c.h.b16 %v1382
        %v1947 = vunpack.c.l.b16 %v1383
        %v1948 = vunpack.c.h.b16 %v1383
        %v1949 = vunpack.c.l.b16 %v1384
        %v1950 = vunpack.c.h.b16 %v1384
        %v1951 = vunpack.c.l.b16 %v1385
        %v1952 = vunpack.c.h.b16 %v1385
        %v1953 = vunpack.c.l.b16 %v1386
        %v1954 = vunpack.c.h.b16 %v1386
        %v1955 = vunpack.c.l.b16 %v1387
        %v1956 = vunpack.c.h.b16 %v1387
        %v1957 = vunpack.c.l.b16 %v1388
        %v1958 = vunpack.c.h.b16 %v1388
        %v1959 = vunpack.c.l.b16 %v1389
        %v1960 = vunpack.c.h.b16 %v1389
        %v1961 = vunpack.c.l.b16 %v1390
        %v1962 = vunpack.c.h.b16 %v1390
        %v1963 = vunpack.c.l.b16 %v1391
        %v1964 = vunpack.c.h.b16 %v1391
        %v1965 = vunpack.c.l.b16 %v1392
        %v1966 = vunpack.c.h.b16 %v1392
        %v1967 = vunpack.c.l.b16 %v1393
        %v1968 = vunpack.c.h.b16 %v1393
        %v1969 = vunpack.c.l.b16 %v1394
        %v1970 = vunpack.c.h.b16 %v1394
        %v1971 = vunpack.c.l.b16 %v1395
        %v1972 = vunpack.c.h.b16 %v1395
        %v1973 = vunpack.c.l.b16 %v1396
        %v1974 = vunpack.c.h.b16 %v1396
        %v1975 = vunpack.c.l.b16 %v1397
        %v1976 = vunpack.c.h.b16 %v1397
        %v1977 = vunpack.c.l.b16 %v1398
        %v1978 = vunpack.c.h.b16 %v1398
        %v1979 = vunpack.c.l.b16 %v1399
        %v1980 = vunpack.c.h.b16 %v1399
        %v1981 = vunpack.c.l.b16 %v1400
        %v1982 = vunpack.c.h.b16 %v1400
        %v1983 = vunpack.c.l.b16 %v1401
        %v1984 = vunpack.c.h.b16 %v1401
        %v1985 = vunpack.c.l.b16 %v1402
        %v1986 = vunpack.c.h.b16 %v1402
        %v1987 = vunpack.c.l.b16 %v1403
        %v1988 = vunpack.c.h.b16 %v1403
        %v1989 = vunpack.c.l.b16 %v1404
        %v1990 = vunpack.c.h.b16 %v1404
        %v1991 = vunpack.c.l.b16 %v1405
        %v1992 = vunpack.c.h.b16 %v1405
        %v1993 = vunpack.c.l.b16 %v1406
        %v1994 = vunpack.c.h.b16 %v1406
        %v1995 = vunpack.c.l.b16 %v1407
        %v1996 = vunpack.c.h.b16 %v1407
        %v1997 = vunpack.c.l.b16 %v1408
        %v1998 = vunpack.c.h.b16 %v1408
        %v1999 = vunpack.c.l.b16 %v1409
        %v2000 = vunpack.c.h.b16 %v1409
        %v2001 = vunpack.c.l.b16 %v1410
        %v2002 = vunpack.c.h.b16 %v1410
        %v2003 = vunpack.c.l.b16 %v1411
        %v2004 = vunpack.c.h.b16 %v1411
        %v2005 = vunpack.c.l.b16 %v1412
        %v2006 = vunpack.c.h.b16 %v1412
        %v2007 = vunpack.c.l.b16 %v1413
        %v2008 = vunpack.c.h.b16 %v1413
        %v2009 = vunpack.c.l.b16 %v1414
        %v2010 = vunpack.c.h.b16 %v1414
        %v2011 = vunpack.c.l.b16 %v1415
        %v2012 = vunpack.c.h.b16 %v1415
        %v2013 = vunpack.c.l.b16 %v1416
        %v2014 = vunpack.c.h.b16 %v1416
        %v2015 = vunpack.c.l.b16 %v1417
        %v2016 = vunpack.c.h.b16 %v1417
        %v2017 = vunpack.c.l.b16 %v1418
        %v2018 = vunpack.c.h.b16 %v1418
        %v2019 = vunpack.c.l.b16 %v1419
        %v2020 = vunpack.c.h.b16 %v1419
        %v2021 = vunpack.c.l.b16 %v1420
        %v2022 = vunpack.c.h.b16 %v1420
        %v2023 = vunpack.c.l.b16 %v1421
        %v2024 = vunpack.c.h.b16 %v1421
        %v2025 = vunpack.c.l.b16 %v1422
        %v2026 = vunpack.c.h.b16 %v1422
        %v2027 = vunpack.c.l.b16 %v1423
        %v2028 = vunpack.c.h.b16 %v1423
        %v2029 = vunpack.c.l.b16 %v1424
        %v2030 = vunpack.c.h.b16 %v1424
        %v2031 = vunpack.c.l.b16 %v1425
        %v2032 = vunpack.c.h.b16 %v1425
        %v2033 = vunpack.c.l.b16 %v1426
        %v2034 = vunpack.c.h.b16 %v1426
        %v2035 = vunpack.c.l.b16 %v1427
        %v2036 = vunpack.c.h.b16 %v1427
        %v2037 = vunpack.c.l.b16 %v1428
        %v2038 = vunpack.c.h.b16 %v1428
        %v2039 = vunpack.c.l.b16 %v1429
        %v2040 = vunpack.c.h.b16 %v1429
        %v2041 = vunpack.c.l.b16 %v1430
        %v2042 = vunpack.c.h.b16 %v1430
        %v2043 = vunpack.c.l.b16 %v1431
        %v2044 = vunpack.c.h.b16 %v1431
        %v2045 = vunpack.c.l.b16 %v1432
        %v2046 = vunpack.c.h.b16 %v1432
        %v2047 = vunpack.c.l.b16 %v1433
        %v2048 = vunpack.c.h.b16 %v1433
        %v2049 = vunpack.c.l.b16 %v1434
        %v2050 = vunpack.c.h.b16 %v1434
        %v2051 = vunpack.c.l.b16 %v1435
        %v2052 = vunpack.c.h.b16 %v1435
        %v2053 = vunpack.c.l.b16 %v1436
        %v2054 = vunpack.c.h.b16 %v1436
        %v2055 = vunpack.c.l.b16 %v1437
        %v2056 = vunpack.c.h.b16 %v1437
        %v2057 = vunpack.c.l.b16 %v1438
        %v2058 = vunpack.c.h.b16 %v1438
        %v2059 = vunpack.c.l.b16 %v1439
        %v2060 = vunpack.c.h.b16 %v1439
        %v2061 = vunpack.c.l.b16 %v1440
        %v2062 = vunpack.c.h.b16 %v1440
        %v2063 = vunpack.c.l.b16 %v1441
        %v2064 = vunpack.c.h.b16 %v1441
        %v2065 = vunpack.c.l.b16 %v1442
        %v2066 = vunpack.c.h.b16 %v1442
        %v2067 = vunpack.c.l.b16 %v1443
        %v2068 = vunpack.c.h.b16 %v1443
        %v2069 = vunpack.c.l.b16 %v1444
        %v2070 = vunpack.c.h.b16 %v1444
        %v2071 = vunpack.c.l.b16 %v1445
        %v2072 = vunpack.c.h.b16 %v1445
        %v2073 = vunpack.c.l.b16 %v1446
        %v2074 = vunpack.c.h.b16 %v1446
        %v2075 = vunpack.c.l.b16 %v1447
        %v2076 = vunpack.c.h.b16 %v1447
        %v2077 = vunpack.c.l.b16 %v1448
        %v2078 = vunpack.c.h.b16 %v1448
        %v2079 = vunpack.c.l.b16 %v1449
        %v2080 = vunpack.c.h.b16 %v1449
        %v2081 = vunpack.c.l.b16 %v1450
        %v2082 = vunpack.c.h.b16 %v1450
        %v2083 = vunpack.c.l.b16 %v1451
        %v2084 = vunpack.c.h.b16 %v1451
        %v2085 = vunpack.c.l.b16 %v1452
        %v2086 = vunpack.c.h.b16 %v1452
        %v2087 = vunpack.c.l.b16 %v1453
        %v2088 = vunpack.c.h.b16 %v1453
        %v2089 = vunpack.c.l.b16 %v1454
        %v2090 = vunpack.c.h.b16 %v1454
        %v2091 = vunpack.c.l.b16 %v1455
        %v2092 = vunpack.c.h.b16 %v1455
        %v2093 = vunpack.c.l.b16 %v1456
        %v2094 = vunpack.c.h.b16 %v1456
        %v2095 = vunpack.c.l.b16 %v1457
        %v2096 = vunpack.c.h.b16 %v1457
        %v2097 = vunpack.c.l.b16 %v1458
        %v2098 = vunpack.c.h.b16 %v1458
        %v2099 = vunpack.c.l.b16 %v1459
        %v2100 = vunpack.c.h.b16 %v1459
        %v2101 = vunpack.c.l.b16 %v1460
        %v2102 = vunpack.c.h.b16 %v1460
        %v2103 = vunpack.c.l.b16 %v1461
        %v2104 = vunpack.c.h.b16 %v1461
        %v2105 = vunpack.c.l.b16 %v1462
        %v2106 = vunpack.c.h.b16 %v1462
        %v2107 = vunpack.c.l.b16 %v1463
        %v2108 = vunpack.c.h.b16 %v1463
        %v2109 = vunpack.c.l.b16 %v1464
        %v2110 = vunpack.c.h.b16 %v1464
        %v2111 = vunpack.c.l.b16 %v1465
        %v2112 = vunpack.c.h.b16 %v1465
        %v2113 = vunpack.c.l.b16 %v1466
        %v2114 = vunpack.c.h.b16 %v1466
        %v2115 = vunpack.c.l.b16 %v1467
        %v2116 = vunpack.c.h.b16 %v1467
        %v2117 = vunpack.c.l.b16 %v1468
        %v2118 = vunpack.c.h.b16 %v1468
        %v2119 = vunpack.c.l.b16 %v1469
        %v2120 = vunpack.c.h.b16 %v1469
        %v2121 = vunpack.c.l.b16 %v1470
        %v2122 = vunpack.c.h.b16 %v1470
        %v2123 = vunpack.c.l.b16 %v1471
        %v2124 = vunpack.c.h.b16 %v1471
        %v2125 = vunpack.c.l.b16 %v1472
        %v2126 = vunpack.c.h.b16 %v1472
        %v2127 = vunpack.c.l.b16 %v1473
        %v2128 = vunpack.c.h.b16 %v1473
        %v2129 = vunpack.c.l.b16 %v1474
        %v2130 = vunpack.c.h.b16 %v1474
        %v2131 = vunpack.c.l.b16 %v1475
        %v2132 = vunpack.c.h.b16 %v1475
        %v2133 = vunpack.c.l.b16 %v1476
        %v2134 = vunpack.c.h.b16 %v1476
        %v2135 = vunpack.c.l.b16 %v1477
        %v2136 = vunpack.c.h.b16 %v1477
        %v2137 = vunpack.c.l.b16 %v1478
        %v2138 = vunpack.c.h.b16 %v1478
        %v2139 = vunpack.c.l.b16 %v1479
        %v2140 = vunpack.c.h.b16 %v1479
        %v2141 = vunpack.c.l.b16 %v1480
        %v2142 = vunpack.c.h.b16 %v1480
        %v2143 = vunpack.c.l.b16 %v1481
        %v2144 = vunpack.c.h.b16 %v1481
        %v2145 = vunpack.c.l.b16 %v1482
        %v2146 = vunpack.c.h.b16 %v1482
        %v2147 = vunpack.c.l.b16 %v1483
        %v2148 = vunpack.c.h.b16 %v1483
        %v2149 = vunpack.c.l.b16 %v1484
        %v2150 = vunpack.c.h.b16 %v1484
        %v2151 = vunpack.c.l.b16 %v1485
        %v2152 = vunpack.c.h.b16 %v1485
        %v2153 = vunpack.c.l.b16 %v1486
        %v2154 = vunpack.c.h.b16 %v1486
        %v2155 = vunpack.c.l.b16 %v1487
        %v2156 = vunpack.c.h.b16 %v1487
        %v2157 = vunpack.c.l.b16 %v1488
        %v2158 = vunpack.c.h.b16 %v1488
        %v2159 = vunpack.c.l.b16 %v1489
        %v2160 = vunpack.c.h.b16 %v1489
        %v2161 = vunpack.c.l.b16 %v1490
        %v2162 = vunpack.c.h.b16 %v1490
        %v2163 = vunpack.c.l.b16 %v1491
        %v2164 = vunpack.c.h.b16 %v1491
        %v2165 = vunpack.c.l.b16 %v1492
        %v2166 = vunpack.c.h.b16 %v1492
        %v2167 = vunpack.c.l.b16 %v1493
        %v2168 = vunpack.c.h.b16 %v1493
        %v2169 = vunpack.c.l.b16 %v1494
        %v2170 = vunpack.c.h.b16 %v1494
        %v2171 = vunpack.c.l.b16 %v1495
        %v2172 = vunpack.c.h.b16 %v1495
        %v2173 = vunpack.c.l.b16 %v1496
        %v2174 = vunpack.c.h.b16 %v1496
        %v2175 = vunpack.c.l.b16 %v1497
        %v2176 = vunpack.c.h.b16 %v1497
        %v2177 = vunpack.c.l.b16 %v1498
        %v2178 = vunpack.c.h.b16 %v1498
        %v2179 = vunpack.c.l.b16 %v1499
        %v2180 = vunpack.c.h.b16 %v1499
        %v2181 = vunpack.c.l.b16 %v1500
        %v2182 = vunpack.c.h.b16 %v1500
        %v2183 = vunpack.c.l.b16 %v1501
        %v2184 = vunpack.c.h.b16 %v1501
        %v2185 = vunpack.c.l.b16 %v1502
        %v2186 = vunpack.c.h.b16 %v1502
        %v2187 = vunpack.c.l.b16 %v1503
        %v2188 = vunpack.c.h.b16 %v1503
        %v2189 = vunpack.c.l.b16 %v1504
        %v2190 = vunpack.c.h.b16 %v1504
        %v2191 = vunpack.c.l.b16 %v1505
        %v2192 = vunpack.c.h.b16 %v1505
        %v2193 = vunpack.c.l.b16 %v1506
        %v2194 = vunpack.c.h.b16 %v1506
        %v2195 = vunpack.c.l.b16 %v1507
        %v2196 = vunpack.c.h.b16 %v1507
        %v2197 = vunpack.c.l.b16 %v1508
        %v2198 = vunpack.c.h.b16 %v1508
        %v2199 = vunpack.c.l.b16 %v1509
        %v2200 = vunpack.c.h.b16 %v1509
        %v2201 = vunpack.c.l.b16 %v1510
        %v2202 = vunpack.c.h.b16 %v1510
        %v2203 = vunpack.c.l.b16 %v1511
        %v2204 = vunpack.c.h.b16 %v1511
        %v2205 = vunpack.c.l.b16 %v1512
        %v2206 = vunpack.c.h.b16 %v1512
        %v2207 = vunpack.c.l.b16 %v1513
        %v2208 = vunpack.c.h.b16 %v1513
        %v2209 = vunpack.c.l.b16 %v1514
        %v2210 = vunpack.c.h.b16 %v1514
        %v2211 = vunpack.c.l.b16 %v1515
        %v2212 = vunpack.c.h.b16 %v1515
        %v2213 = vunpack.c.l.b16 %v1516
        %v2214 = vunpack.c.h.b16 %v1516
        %v2215 = vunpack.c.l.b16 %v1517
        %v2216 = vunpack.c.h.b16 %v1517
        %v2217 = vunpack.c.l.b16 %v1518
        %v2218 = vunpack.c.h.b16 %v1518
        %v2219 = vunpack.c.l.b16 %v1519
        %v2220 = vunpack.c.h.b16 %v1519
        %v2221 = vunpack.c.l.b16 %v1520
        %v2222 = vunpack.c.h.b16 %v1520
        %v2223 = vunpack.c.l.b16 %v1521
        %v2224 = vunpack.c.h.b16 %v1521
        %v2225 = vunpack.c.l.b16 %v1522
        %v2226 = vunpack.c.h.b16 %v1522
        %v2227 = vunpack.c.l.b16 %v1523
        %v2228 = vunpack.c.h.b16 %v1523
        %v2229 = vunpack.c.l.b16 %v1524
        %v2230 = vunpack.c.h.b16 %v1524
        %v2231 = vunpack.c.l.b16 %v1525
        %v2232 = vunpack.c.h.b16 %v1525
        %v2233 = vunpack.c.l.b16 %v1526
        %v2234 = vunpack.c.h.b16 %v1526
        %v2235 = vunpack.c.l.b16 %v1527
        %v2236 = vunpack.c.h.b16 %v1527
        %v2237 = vunpack.c.l.b16 %v1528
        %v2238 = vunpack.c.h.b16 %v1528
        %v2239 = vunpack.c.l.b16 %v1529
        %v2240 = vunpack.c.h.b16 %v1529
        %v2241 = vunpack.c.l.b16 %v1530
        %v2242 = vunpack.c.h.b16 %v1530
        %v2243 = vunpack.c.l.b16 %v1531
        %v2244 = vunpack.c.h.b16 %v1531
        %v2245 = vunpack.c.l.b16 %v1532
        %v2246 = vunpack.c.h.b16 %v1532
        %v2247 = vunpack.c.l.b16 %v1533
        %v2248 = vunpack.c.h.b16 %v1533
        %v2249 = vunpack.c.l.b16 %v1534
        %v2250 = vunpack.c.h.b16 %v1534
        %v2251 = vunpack.c.l.b16 %v1535
        %v2252 = vunpack.c.h.b16 %v1535
        %v2253 = vunpack.c.l.b16 %v1536
        %v2254 = vunpack.c.h.b16 %v1536
        %v2255 = vunpack.c.l.b16 %v1537
        %v2256 = vunpack.c.h.b16 %v1537
        %v2257 = vunpack.c.l.b16 %v1538
        %v2258 = vunpack.c.h.b16 %v1538
        %v2259 = vunpack.c.l.b16 %v1539
        %v2260 = vunpack.c.h.b16 %v1539
        %v2261 = vunpack.c.l.b16 %v1540
        %v2262 = vunpack.c.h.b16 %v1540
        %v2263 = vunpack.c.l.b16 %v1541
        %v2264 = vunpack.c.h.b16 %v1541
        %v2265 = vunpack.c.l.b16 %v1542
        %v2266 = vunpack.c.h.b16 %v1542
        %v2267 = vunpack.c.l.b16 %v1543
        %v2268 = vunpack.c.h.b16 %v1543
        %v2269 = vunpack.c.l.b16 %v1544
        %v2270 = vunpack.c.h.b16 %v1544
        %v2271 = vunpack.c.l.b16 %v1545
        %v2272 = vunpack.c.h.b16 %v1545
        %v2273 = vunpack.c.l.b16 %v1546
        %v2274 = vunpack.c.h.b16 %v1546
        %v2275 = vunpack.c.l.b16 %v1547
        %v2276 = vunpack.c.h.b16 %v1547
        %v2277 = vunpack.c.l.b16 %v1548
        %v2278 = vunpack.c.h.b16 %v1548
        %v2279 = vunpack.c.l.b16 %v1549
        %v2280 = vunpack.c.h.b16 %v1549
        %v2281 = vunpack.c.l.b16 %v1550
        %v2282 = vunpack.c.h.b16 %v1550
        %v2283 = vunpack.c.l.b16 %v1551
        %v2284 = vunpack.c.h.b16 %v1551
        %v2285 = vunpack.c.l.b16 %v1552
        %v2286 = vunpack.c.h.b16 %v1552
        %v2287 = vunpack.c.l.b16 %v1553
        %v2288 = vunpack.c.h.b16 %v1553
        %v2289 = vunpack.c.l.b16 %v1554
        %v2290 = vunpack.c.h.b16 %v1554
        %v2291 = vunpack.c.l.b16 %v1555
        %v2292 = vunpack.c.h.b16 %v1555
        %v2293 = vunpack.c.l.b16 %v1556
        %v2294 = vunpack.c.h.b16 %v1556
        %v2295 = vunpack.c.l.b16 %v1557
        %v2296 = vunpack.c.h.b16 %v1557
        %v2297 = vunpack.c.l.b16 %v1558
        %v2298 = vunpack.c.h.b16 %v1558
        %v2299 = vunpack.c.l.b16 %v1559
        %v2300 = vunpack.c.h.b16 %v1559
        %v2301 = vunpack.c.l.b16 %v1560
        %v2302 = vunpack.c.h.b16 %v1560
        %v2303 = vunpack.c.l.b16 %v1561
        %v2304 = vunpack.c.h.b16 %v1561
        %v2305 = vunpack.c.l.b16 %v1562
        %v2306 = vunpack.c.h.b16 %v1562
        %v2307 = vunpack.c.l.b16 %v1563
        %v2308 = vunpack.c.h.b16 %v1563
        %v2309 = vunpack.c.l.b16 %v1564
        %v2310 = vunpack.c.h.b16 %v1564
        %v2311 = vunpack.c.l.b16 %v1565
        %v2312 = vunpack.c.h.b16 %v1565
        %v2313 = vunpack.c.l.b16 %v1566
        %v2314 = vunpack.c.h.b16 %v1566
        %v2315 = vunpack.c.l.b16 %v1567
        %v2316 = vunpack.c.h.b16 %v1567
        %v2317 = vunpack.c.l.b16 %v1568
        %v2318 = vunpack.c.h.b16 %v1568
        %v2319 = vunpack.c.l.b16 %v1569
        %v2320 = vunpack.c.h.b16 %v1569
        %v2321 = vunpack.c.l.b16 %v1570
        %v2322 = vunpack.c.h.b16 %v1570
        %v2323 = vunpack.c.l.b16 %v1571
        %v2324 = vunpack.c.h.b16 %v1571
        %v2325 = vunpack.c.l.b16 %v1572
        %v2326 = vunpack.c.h.b16 %v1572
        %v2327 = vunpack.c.l.b16 %v1573
        %v2328 = vunpack.c.h.b16 %v1573
        %v2329 = vunpack.c.l.b16 %v1574
        %v2330 = vunpack.c.h.b16 %v1574
        %v2331 = vunpack.c.l.b16 %v1575
        %v2332 = vunpack.c.h.b16 %v1575
        %v2333 = vunpack.c.l.b16 %v1576
        %v2334 = vunpack.c.h.b16 %v1576
        %v2335 = vunpack.c.l.b16 %v1577
        %v2336 = vunpack.c.h.b16 %v1577
        %v2337 = vunpack.c.l.b16 %v1578
        %v2338 = vunpack.c.h.b16 %v1578
        %v2339 = vunpack.c.l.b16 %v1579
        %v2340 = vunpack.c.h.b16 %v1579
        %v2341 = vunpack.c.l.b16 %v1580
        %v2342 = vunpack.c.h.b16 %v1580
        %v2343 = vunpack.c.l.b16 %v1581
        %v2344 = vunpack.c.h.b16 %v1581
        %v2345 = vunpack.c.l.b16 %v1582
        %v2346 = vunpack.c.h.b16 %v1582
        %v2347 = vunpack.c.l.b16 %v1583
        %v2348 = vunpack.c.h.b16 %v1583
        %v2349 = vunpack.c.l.b16 %v1584
        %v2350 = vunpack.c.h.b16 %v1584
        %v2351 = vunpack.c.l.b16 %v1585
        %v2352 = vunpack.c.h.b16 %v1585
        %v2353 = vunpack.c.l.b16 %v1586
        %v2354 = vunpack.c.h.b16 %v1586
        %v2355 = vunpack.c.l.b16 %v1587
        %v2356 = vunpack.c.h.b16 %v1587
        %v2357 = vunpack.c.l.b16 %v1588
        %v2358 = vunpack.c.h.b16 %v1588
        %v2359 = vunpack.c.l.b16 %v1589
        %v2360 = vunpack.c.h.b16 %v1589
        %v2361 = vunpack.c.l.b16 %v1590
        %v2362 = vunpack.c.h.b16 %v1590
        %v2363 = vunpack.c.l.b16 %v1591
        %v2364 = vunpack.c.h.b16 %v1591
        %v2365 = vunpack.c.l.b16 %v1592
        %v2366 = vunpack.c.h.b16 %v1592
        %v2367 = vunpack.c.l.b16 %v1593
        %v2368 = vunpack.c.h.b16 %v1593
        %v2369 = vunpack.c.l.b16 %v1594
        %v2370 = vunpack.c.h.b16 %v1594
        %v2371 = vunpack.c.l.b16 %v1595
        %v2372 = vunpack.c.h.b16 %v1595
        %v2373 = vunpack.c.l.b16 %v1596
        %v2374 = vunpack.c.h.b16 %v1596
        %v2375 = vunpack.c.l.b16 %v1597
        %v2376 = vunpack.c.h.b16 %v1597
        %v2377 = vunpack.c.l.b16 %v1598
        %v2378 = vunpack.c.h.b16 %v1598
        %v2379 = vunpack.c.l.b16 %v1599
        %v2380 = vunpack.c.h.b16 %v1599
        %v2381 = vunpack.c.l.b16 %v1600
        %v2382 = vunpack.c.h.b16 %v1600
        %v2383 = vunpack.c.l.b16 %v1601
        %v2384 = vunpack.c.h.b16 %v1601
        %v2385 = vunpack.c.l.b16 %v1602
        %v2386 = vunpack.c.h.b16 %v1602
        %v2387 = vunpack.c.l.b16 %v1603
        %v2388 = vunpack.c.h.b16 %v1603
        %v2389 = vunpack.c.l.b16 %v1604
        %v2390 = vunpack.c.h.b16 %v1604
        %v2391 = vpack.c.b16 %v1887, %v1879
        %v2392 = vpack.c.b16 %v1888, %v1880
        %v2393 = vpack.c.b16 %v1889, %v1881
        %v2394 = vpack.c.b16 %v1890, %v1882
        %v2395 = vpack.c.b16 %v1891, %v1883
        %v2396 = vpack.c.b16 %v1892, %v1884
        %v2397 = vpack.c.b16 %v1893, %v1885
        %v2398 = vpack.c.b16 %v1894, %v1886
        %v2399 = vpack.c.b16 %v1903, %v1895
        %v2400 = vpack.c.b16 %v1904, %v1896
        %v2401 = vpack.c.b16 %v1905, %v1897
        %v2402 = vpack.c.b16 %v1906, %v1898
        %v2403 = vpack.c.b16 %v1907, %v1899
        %v2404 = vpack.c.b16 %v1908, %v1900
        %v2405 = vpack.c.b16 %v1909, %v1901
        %v2406 = vpack.c.b16 %v1910, %v1902
        %v2407 = vpack.c.b16 %v1919, %v1911
        %v2408 = vpack.c.b16 %v1920, %v1912
        %v2409 = vpack.c.b16 %v1921, %v1913
        %v2410 = vpack.c.b16 %v1922, %v1914
        %v2411 = vpack.c.b16 %v1923, %v1915
        %v2412 = vpack.c.b16 %v1924, %v1916
        %v2413 = vpack.c.b16 %v1925, %v1917
        %v2414 = vpack.c.b16 %v1926, %v1918
        %v2415 = vpack.c.b16 %v1935, %v1927
        %v2416 = vpack.c.b16 %v1936, %v1928
        %v2417 = vpack.c.b16 %v1937, %v1929
        %v2418 = vpack.c.b16 %v1938, %v1930
        %v2419 = vpack.c.b16 %v1939, %v1931
        %v2420 = vpack.c.b16 %v1940, %v1932
        %v2421 = vpack.c.b16 %v1941, %v1933
        %v2422 = vpack.c.b16 %v1942, %v1934
        %v2423 = vpack.c.b16 %v1951, %v1943
        %v2424 = vpack.c.b16 %v1952, %v1944
        %v2425 = vpack.c.b16 %v1953, %v1945
        %v2426 = vpack.c.b16 %v1954, %v1946
        %v2427 = vpack.c.b16 %v1955, %v1947
        %v2428 = vpack.c.b16 %v1956, %v1948
        %v2429 = vpack.c.b16 %v1957, %v1949
        %v2430 = vpack.c.b16 %v1958, %v1950
        %v2431 = vpack.c.b16 %v1967, %v1959
        %v2432 = vpack.c.b16 %v1968, %v1960
        %v2433 = vpack.c.b16 %v1969, %v1961
        %v2434 = vpack.c.b16 %v1970, %v1962
        %v2435 = vpack.c.b16 %v1971, %v1963
        %v2436 = vpack.c.b16 %v1972, %v1964
        %v2437 = vpack.c.b16 %v1973, %v1965
        %v2438 = vpack.c.b16 %v1974, %v1966
        %v2439 = vpack.c.b16 %v1983, %v1975
        %v2440 = vpack.c.b16 %v1984, %v1976
        %v2441 = vpack.c.b16 %v1985, %v1977
        %v2442 = vpack.c.b16 %v1986, %v1978
        %v2443 = vpack.c.b16 %v1987, %v1979
        %v2444 = vpack.c.b16 %v1988, %v1980
        %v2445 = vpack.c.b16 %v1989, %v1981
        %v2446 = vpack.c.b16 %v1990, %v1982
        %v2447 = vpack.c.b16 %v1999, %v1991
        %v2448 = vpack.c.b16 %v2000, %v1992
        %v2449 = vpack.c.b16 %v2001, %v1993
        %v2450 = vpack.c.b16 %v2002, %v1994
        %v2451 = vpack.c.b16 %v2003, %v1995
        %v2452 = vpack.c.b16 %v2004, %v1996
        %v2453 = vpack.c.b16 %v2005, %v1997
        %v2454 = vpack.c.b16 %v2006, %v1998
        %v2455 = vpack.c.b16 %v2015, %v2007
        %v2456 = vpack.c.b16 %v2016, %v2008
        %v2457 = vpack.c.b16 %v2017, %v2009
        %v2458 = vpack.c.b16 %v2018, %v2010
        %v2459 = vpack.c.b16 %v2019, %v2011
        %v2460 = vpack.c.b16 %v2020, %v2012
        %v2461 = vpack.c.b16 %v2021, %v2013
        %v2462 = vpack.c.b16 %v2022, %v2014
        %v2463 = vpack.c.b16 %v2031, %v2023
        %v2464 = vpack.c.b16 %v2032, %v2024
        %v2465 = vpack.c.b16 %v2033, %v2025
        %v2466 = vpack.c.b16 %v2034, %v2026
        %v2467 = vpack.c.b16 %v2035, %v2027
        %v2468 = vpack.c.b16 %v2036, %v2028
        %v2469 = vpack.c.b16 %v2037, %v2029
        %v2470 = vpack.c.b16 %v2038, %v2030
        %v2471 = vpack.c.b16 %v2047, %v2039
        %v2472 = vpack.c.b16 %v2048, %v2040
        %v2473 = vpack.c.b16 %v2049, %v2041
        %v2474 = vpack.c.b16 %v2050, %v2042
        %v2475 = vpack.c.b16 %v2051, %v2043
        %v2476 = vpack.c.b16 %v2052, %v2044
        %v2477 = vpack.c.b16 %v2053, %v2045
        %v2478 = vpack.c.b16 %v2054, %v2046
        %v2479 = vpack.c.b16 %v2063, %v2055
        %v2480 = vpack.c.b16 %v2064, %v2056
        %v2481 = vpack.c.b16 %v2065, %v2057
        %v2482 = vpack.c.b16 %v2066, %v2058
        %v2483 = vpack.c.b16 %v2067, %v2059
        %v2484 = vpack.c.b16 %v2068, %v2060
        %v2485 = vpack.c.b16 %v2069, %v2061
        %v2486 = vpack.c.b16 %v2070, %v2062
        %v2487 = vpack.c.b16 %v2079, %v2071
        %v2488 = vpack.c.b16 %v2080, %v2072
        %v2489 = vpack.c.b16 %v2081, %v2073
        %v2490 = vpack.c.b16 %v2082, %v2074
        %v2491 = vpack.c.b16 %v2083, %v2075
        %v2492 = vpack.c.b16 %v2084, %v2076
        %v2493 = vpack.c.b16 %v2085, %v2077
        %v2494 = vpack.c.b16 %v2086, %v2078
        %v2495 = vpack.c.b16 %v2095, %v2087
        %v2496 = vpack.c.b16 %v2096, %v2088
        %v2497 = vpack.c.b16 %v2097, %v2089
        %v2498 = vpack.c.b16 %v2098, %v2090
        %v2499 = vpack.c.b16 %v2099, %v2091
        %v2500 = vpack.c.b16 %v2100, %v2092
        %v2501 = vpack.c.b16 %v2101, %v2093
        %v2502 = vpack.c.b16 %v2102, %v2094
        %v2503 = vpack.c.b16 %v2111, %v2103
        %v2504 = vpack.c.b16 %v2112, %v2104
        %v2505 = vpack.c.b16 %v2113, %v2105
        %v2506 = vpack.c.b16 %v2114, %v2106
        %v2507 = vpack.c.b16 %v2115, %v2107
        %v2508 = vpack.c.b16 %v2116, %v2108
        %v2509 = vpack.c.b16 %v2117, %v2109
        %v2510 = vpack.c.b16 %v2118, %v2110
        %v2511 = vpack.c.b16 %v2127, %v2119
        %v2512 = vpack.c.b16 %v2128, %v2120
        %v2513 = vpack.c.b16 %v2129, %v2121
        %v2514 = vpack.c.b16 %v2130, %v2122
        %v2515 = vpack.c.b16 %v2131, %v2123
        %v2516 = vpack.c.b16 %v2132, %v2124
        %v2517 = vpack.c.b16 %v2133, %v2125
        %v2518 = vpack.c.b16 %v2134, %v2126
        %v2519 = vpack.c.b16 %v2143, %v2135
        %v2520 = vpack.c.b16 %v2144, %v2136
        %v2521 = vpack.c.b16 %v2145, %v2137
        %v2522 = vpack.c.b16 %v2146, %v2138
        %v2523 = vpack.c.b16 %v2147, %v2139
        %v2524 = vpack.c.b16 %v2148, %v2140
        %v2525 = vpack.c.b16 %v2149, %v2141
        %v2526 = vpack.c.b16 %v2150, %v2142
        %v2527 = vpack.c.b16 %v2159, %v2151
        %v2528 = vpack.c.b16 %v2160, %v2152
        %v2529 = vpack.c.b16 %v2161, %v2153
        %v2530 = vpack.c.b16 %v2162, %v2154
        %v2531 = vpack.c.b16 %v2163, %v2155
        %v2532 = vpack.c.b16 %v2164, %v2156
        %v2533 = vpack.c.b16 %v2165, %v2157
        %v2534 = vpack.c.b16 %v2166, %v2158
        %v2535 = vpack.c.b16 %v2175, %v2167
        %v2536 = vpack.c.b16 %v2176, %v2168
        %v2537 = vpack.c.b16 %v2177, %v2169
        %v2538 = vpack.c.b16 %v2178, %v2170
        %v2539 = vpack.c.b16 %v2179, %v2171
        %v2540 = vpack.c.b16 %v2180, %v2172
        %v2541 = vpack.c.b16 %v2181, %v2173
        %v2542 = vpack.c.b16 %v2182, %v2174
        %v2543 = vpack.c.b16 %v2191, %v2183
        %v2544 = vpack.c.b16 %v2192, %v2184
        %v2545 = vpack.c.b16 %v2193, %v2185
        %v2546 = vpack.c.b16 %v2194, %v2186
        %v2547 = vpack.c.b16 %v2195, %v2187
        %v2548 = vpack.c.b16 %v2196, %v2188
        %v2549 = vpack.c.b16 %v2197, %v2189
        %v2550 = vpack.c.b16 %v2198, %v2190
        %v2551 = vpack.c.b16 %v2207, %v2199
        %v2552 = vpack.c.b16 %v2208, %v2200
        %v2553 = vpack.c.b16 %v2209, %v2201
        %v2554 = vpack.c.b16 %v2210, %v2202
        %v2555 = vpack.c.b16 %v2211, %v2203
        %v2556 = vpack.c.b16 %v2212, %v2204
        %v2557 = vpack.c.b16 %v2213, %v2205
        %v2558 = vpack.c.b16 %v2214, %v2206
        %v2559 = vpack.c.b16 %v2223, %v2215
        %v2560 = vpack.c.b16 %v2224, %v2216
        %v2561 = vpack.c.b16 %v2225, %v2217
        %v2562 = vpack.c.b16 %v2226, %v2218
        %v2563 = vpack.c.b16 %v2227, %v2219
        %v2564 = vpack.c.b16 %v2228, %v2220
        %v2565 = vpack.c.b16 %v2229, %v2221
        %v2566 = vpack.c.b16 %v2230, %v2222
        %v2567 = vpack.c.b16 %v2239, %v2231
        %v2568 = vpack.c.b16 %v2240, %v2232
        %v2569 = vpack.c.b16 %v2241, %v2233
        %v2570 = vpack.c.b16 %v2242, %v2234
        %v2571 = vpack.c.b16 %v2243, %v2235
        %v2572 = vpack.c.b16 %v2244, %v2236
        %v2573 = vpack.c.b16 %v2245, %v2237
        %v2574 = vpack.c.b16 %v2246, %v2238
        %v2575 = vpack.c.b16 %v2255, %v2247
        %v2576 = vpack.c.b16 %v2256, %v2248
        %v2577 = vpack.c.b16 %v2257, %v2249
        %v2578 = vpack.c.b16 %v2258, %v2250
        %v2579 = vpack.c.b16 %v2259, %v2251
        %v2580 = vpack.c.b16 %v2260, %v2252
        %v2581 = vpack.c.b16 %v2261, %v2253
        %v2582 = vpack.c.b16 %v2262, %v2254
        %v2583 = vpack.c.b16 %v2271, %v2263
        %v2584 = vpack.c.b16 %v2272, %v2264
        %v2585 = vpack.c.b16 %v2273, %v2265
        %v2586 = vpack.c.b16 %v2274, %v2266
        %v2587 = vpack.c.b16 %v2275, %v2267
        %v2588 = vpack.c.b16 %v2276, %v2268
        %v2589 = vpack.c.b16 %v2277, %v2269
        %v2590 = vpack.c.b16 %v2278, %v2270
        %v2591 = vpack.c.b16 %v2287, %v2279
        %v2592 = vpack.c.b16 %v2288, %v2280
        %v2593 = vpack.c.b16 %v2289, %v2281
        %v2594 = vpack.c.b16 %v2290, %v2282
        %v2595 = vpack.c.b16 %v2291, %v2283
        %v2596 = vpack.c.b16 %v2292, %v2284
        %v2597 = vpack.c.b16 %v2293, %v2285
        %v2598 = vpack.c.b16 %v2294, %v2286
        %v2599 = vpack.c.b16 %v2303, %v2295
        %v2600 = vpack.c.b16 %v2304, %v2296
        %v2601 = vpack.c.b16 %v2305, %v2297
        %v2602 = vpack.c.b16 %v2306, %v2298
        %v2603 = vpack.c.b16 %v2307, %v2299
        %v2604 = vpack.c.b16 %v2308, %v2300
        %v2605 = vpack.c.b16 %v2309, %v2301
        %v2606 = vpack.c.b16 %v2310, %v2302
        %v2607 = vpack.c.b16 %v2319, %v2311
        %v2608 = vpack.c.b16 %v2320, %v2312
        %v2609 = vpack.c.b16 %v2321, %v2313
        %v2610 = vpack.c.b16 %v2322, %v2314
        %v2611 = vpack.c.b16 %v2323, %v2315
        %v2612 = vpack.c.b16 %v2324, %v2316
        %v2613 = vpack.c.b16 %v2325, %v2317
        %v2614 = vpack.c.b16 %v2326, %v2318
        %v2615 = vpack.c.b16 %v2335, %v2327
        %v2616 = vpack.c.b16 %v2336, %v2328
        %v2617 = vpack.c.b16 %v2337, %v2329
        %v2618 = vpack.c.b16 %v2338, %v2330
        %v2619 = vpack.c.b16 %v2339, %v2331
        %v2620 = vpack.c.b16 %v2340, %v2332
        %v2621 = vpack.c.b16 %v2341, %v2333
        %v2622 = vpack.c.b16 %v2342, %v2334
        %v2623 = vpack.c.b16 %v2351, %v2343
        %v2624 = vpack.c.b16 %v2352, %v2344
        %v2625 = vpack.c.b16 %v2353, %v2345
        %v2626 = vpack.c.b16 %v2354, %v2346
        %v2627 = vpack.c.b16 %v2355, %v2347
        %v2628 = vpack.c.b16 %v2356, %v2348
        %v2629 = vpack.c.b16 %v2357, %v2349
        %v2630 = vpack.c.b16 %v2358, %v2350
        %v2631 = vpack.c.b16 %v2367, %v2359
        %v2632 = vpack.c.b16 %v2368, %v2360
        %v2633 = vpack.c.b16 %v2369, %v2361
        %v2634 = vpack.c.b16 %v2370, %v2362
        %v2635 = vpack.c.b16 %v2371, %v2363
        %v2636 = vpack.c.b16 %v2372, %v2364
        %v2637 = vpack.c.b16 %v2373, %v2365
        %v2638 = vpack.c.b16 %v2374, %v2366
        %v2639 = vpack.c.b16 %v2383, %v2375
        %v2640 = vpack.c.b16 %v2384, %v2376
        %v2641 = vpack.c.b16 %v2385, %v2377
        %v2642 = vpack.c.b16 %v2386, %v2378
        %v2643 = vpack.c.b16 %v2387, %v2379
        %v2644 = vpack.c.b16 %v2388, %v2380
        %v2645 = vpack.c.b16 %v2389, %v2381
        %v2646 = vpack.c.b16 %v2390, %v2382
        %2903 = vmatpush.bf16.msra.mxu0 %v2447
        %2904 = vmatpush.bf16.msra.mxu0 %v2439
        %2905 = vmatpush.bf16.msra.mxu0 %v2431
        %2906 = vmatpush.bf16.msra.mxu0 %v2423
        %2907 = vmatpush.bf16.msra.mxu0 %v2415
        %2908 = vmatpush.bf16.msra.mxu0 %v2407
        %2909 = vmatpush.bf16.msra.mxu0 %v2399
        %2910 = vmatpush.bf16.msra.mxu0 %v2391
        %2911 = vmatmul.bf16.gmra.mxu0 %v1345
        %v2912 = vpop.f32.mrf.mxu0
        %v2913 = vadd.f32 %v1607, %v2912
        %v2914 = vpop.f32.mrf.mxu0
        %v2915 = vadd.f32 %v1607, %v2914
        %2916 = vdwg.mxu0
        %2917 = vmatpush.bf16.msra.mxu0 %v2511
        %2918 = vmatpush.bf16.msra.mxu0 %v2503
        %2919 = vmatpush.bf16.msra.mxu0 %v2495
        %2920 = vmatpush.bf16.msra.mxu0 %v2487
        %2921 = vmatpush.bf16.msra.mxu0 %v2479
        %2922 = vmatpush.bf16.msra.mxu0 %v2471
        %2923 = vmatpush.bf16.msra.mxu0 %v2463
        %2924 = vmatpush.bf16.msra.mxu0 %v2455
        %2925 = vmatmul.bf16.gmra.mxu0 %v1346
        %v2926 = vpop.f32.mrf.mxu0
        %v2927 = vadd.f32 %v2913, %v2926
        %v2928 = vpop.f32.mrf.mxu0
        %v2929 = vadd.f32 %v2915, %v2928
        %2930 = vdwg.mxu0
        %2931 = vmatpush.bf16.msra.mxu0 %v2575
        %2932 = vmatpush.bf16.msra.mxu0 %v2567
        %2933 = vmatpush.bf16.msra.mxu0 %v2559
        %2934 = vmatpush.bf16.msra.mxu0 %v2551
        %2935 = vmatpush.bf16.msra.mxu0 %v2543
        %2936 = vmatpush.bf16.msra.mxu0 %v2535
        %2937 = vmatpush.bf16.msra.mxu0 %v2527
        %2938 = vmatpush.bf16.msra.mxu0 %v2519
        %2939 = vmatmul.bf16.gmra.mxu0 %v1347
        %v2940 = vpop.f32.mrf.mxu0
        %v2941 = vadd.f32 %v2927, %v2940
        %v2942 = vpop.f32.mrf.mxu0
        %v2943 = vadd.f32 %v2929, %v2942
        %2944 = vdwg.mxu0
        %2945 = vmatpush.bf16.msra.mxu0 %v2639
        %2946 = vmatpush.bf16.msra.mxu0 %v2631
        %2947 = vmatpush.bf16.msra.mxu0 %v2623
        %2948 = vmatpush.bf16.msra.mxu0 %v2615
        %2949 = vmatpush.bf16.msra.mxu0 %v2607
        %2950 = vmatpush.bf16.msra.mxu0 %v2599
        %2951 = vmatpush.bf16.msra.mxu0 %v2591
        %2952 = vmatpush.bf16.msra.mxu0 %v2583
        %2953 = vmatmul.bf16.gmra.mxu0 %v1348
        %v2954 = vpop.f32.mrf.mxu0
        %v2955 = vadd.f32 %v2941, %v2954
        %v2956 = vpop.f32.mrf.mxu0
        %v2957 = vadd.f32 %v2943, %v2956
        %2958 = vdwg.mxu0
        %2959 = vmatpush.bf16.msra.mxu0 %v2448
        %2960 = vmatpush.bf16.msra.mxu0 %v2440
        %2961 = vmatpush.bf16.msra.mxu0 %v2432
        %2962 = vmatpush.bf16.msra.mxu0 %v2424
        %2963 = vmatpush.bf16.msra.mxu0 %v2416
        %2964 = vmatpush.bf16.msra.mxu0 %v2408
        %2965 = vmatpush.bf16.msra.mxu0 %v2400
        %2966 = vmatpush.bf16.msra.mxu0 %v2392
        %2967 = vmatmul.bf16.gmra.mxu0 %v1345
        %v2968 = vpop.f32.mrf.mxu0
        %v2969 = vadd.f32 %v1608, %v2968
        %v2970 = vpop.f32.mrf.mxu0
        %v2971 = vadd.f32 %v1608, %v2970
        %2972 = vdwg.mxu0
        %2973 = vmatpush.bf16.msra.mxu0 %v2512
        %2974 = vmatpush.bf16.msra.mxu0 %v2504
        %2975 = vmatpush.bf16.msra.mxu0 %v2496
        %2976 = vmatpush.bf16.msra.mxu0 %v2488
        %2977 = vmatpush.bf16.msra.mxu0 %v2480
        %2978 = vmatpush.bf16.msra.mxu0 %v2472
        %2979 = vmatpush.bf16.msra.mxu0 %v2464
        %2980 = vmatpush.bf16.msra.mxu0 %v2456
        %2981 = vmatmul.bf16.gmra.mxu0 %v1346
        %v2982 = vpop.f32.mrf.mxu0
        %v2983 = vadd.f32 %v2969, %v2982
        %v2984 = vpop.f32.mrf.mxu0
        %v2985 = vadd.f32 %v2971, %v2984
        %2986 = vdwg.mxu0
        %2987 = vmatpush.bf16.msra.mxu0 %v2576
        %2988 = vmatpush.bf16.msra.mxu0 %v2568
        %2989 = vmatpush.bf16.msra.mxu0 %v2560
        %2990 = vmatpush.bf16.msra.mxu0 %v2552
        %2991 = vmatpush.bf16.msra.mxu0 %v2544
        %2992 = vmatpush.bf16.msra.mxu0 %v2536
        %2993 = vmatpush.bf16.msra.mxu0 %v2528
        %2994 = vmatpush.bf16.msra.mxu0 %v2520
        %2995 = vmatmul.bf16.gmra.mxu0 %v1347
        %v2996 = vpop.f32.mrf.mxu0
        %v2997 = vadd.f32 %v2983, %v2996
        %v2998 = vpop.f32.mrf.mxu0
        %v2999 = vadd.f32 %v2985, %v2998
        %3000 = vdwg.mxu0
        %3001 = vmatpush.bf16.msra.mxu0 %v2640
        %3002 = vmatpush.bf16.msra.mxu0 %v2632
        %3003 = vmatpush.bf16.msra.mxu0 %v2624
        %3004 = vmatpush.bf16.msra.mxu0 %v2616
        %3005 = vmatpush.bf16.msra.mxu0 %v2608
        %3006 = vmatpush.bf16.msra.mxu0 %v2600
        %3007 = vmatpush.bf16.msra.mxu0 %v2592
        %3008 = vmatpush.bf16.msra.mxu0 %v2584
        %3009 = vmatmul.bf16.gmra.mxu0 %v1348
        %v3010 = vpop.f32.mrf.mxu0
        %v3011 = vadd.f32 %v2997, %v3010
        %v3012 = vpop.f32.mrf.mxu0
        %v3013 = vadd.f32 %v2999, %v3012
        %3014 = vdwg.mxu0
        %3015 = vmatpush.bf16.msra.mxu0 %v2449
        %3016 = vmatpush.bf16.msra.mxu0 %v2441
        %3017 = vmatpush.bf16.msra.mxu0 %v2433
        %3018 = vmatpush.bf16.msra.mxu0 %v2425
        %3019 = vmatpush.bf16.msra.mxu0 %v2417
        %3020 = vmatpush.bf16.msra.mxu0 %v2409
        %3021 = vmatpush.bf16.msra.mxu0 %v2401
        %3022 = vmatpush.bf16.msra.mxu0 %v2393
        %3023 = vmatmul.bf16.gmra.mxu0 %v1345
        %v3024 = vpop.f32.mrf.mxu0
        %v3025 = vadd.f32 %v1609, %v3024
        %v3026 = vpop.f32.mrf.mxu0
        %v3027 = vadd.f32 %v1609, %v3026
        %3028 = vdwg.mxu0
        %3029 = vmatpush.bf16.msra.mxu0 %v2513
        %3030 = vmatpush.bf16.msra.mxu0 %v2505
        %3031 = vmatpush.bf16.msra.mxu0 %v2497
        %3032 = vmatpush.bf16.msra.mxu0 %v2489
        %3033 = vmatpush.bf16.msra.mxu0 %v2481
        %3034 = vmatpush.bf16.msra.mxu0 %v2473
        %3035 = vmatpush.bf16.msra.mxu0 %v2465
        %3036 = vmatpush.bf16.msra.mxu0 %v2457
        %3037 = vmatmul.bf16.gmra.mxu0 %v1346
        %v3038 = vpop.f32.mrf.mxu0
        %v3039 = vadd.f32 %v3025, %v3038
        %v3040 = vpop.f32.mrf.mxu0
        %v3041 = vadd.f32 %v3027, %v3040
        %3042 = vdwg.mxu0
        %3043 = vmatpush.bf16.msra.mxu0 %v2577
        %3044 = vmatpush.bf16.msra.mxu0 %v2569
        %3045 = vmatpush.bf16.msra.mxu0 %v2561
        %3046 = vmatpush.bf16.msra.mxu0 %v2553
        %3047 = vmatpush.bf16.msra.mxu0 %v2545
        %3048 = vmatpush.bf16.msra.mxu0 %v2537
        %3049 = vmatpush.bf16.msra.mxu0 %v2529
        %3050 = vmatpush.bf16.msra.mxu0 %v2521
        %3051 = vmatmul.bf16.gmra.mxu0 %v1347
        %v3052 = vpop.f32.mrf.mxu0
        %v3053 = vadd.f32 %v3039, %v3052
        %v3054 = vpop.f32.mrf.mxu0
        %v3055 = vadd.f32 %v3041, %v3054
        %3056 = vdwg.mxu0
        %3057 = vmatpush.bf16.msra.mxu0 %v2641
        %3058 = vmatpush.bf16.msra.mxu0 %v2633
        %3059 = vmatpush.bf16.msra.mxu0 %v2625
        %3060 = vmatpush.bf16.msra.mxu0 %v2617
        %3061 = vmatpush.bf16.msra.mxu0 %v2609
        %3062 = vmatpush.bf16.msra.mxu0 %v2601
        %3063 = vmatpush.bf16.msra.mxu0 %v2593
        %3064 = vmatpush.bf16.msra.mxu0 %v2585
        %3065 = vmatmul.bf16.gmra.mxu0 %v1348
        %v3066 = vpop.f32.mrf.mxu0
        %v3067 = vadd.f32 %v3053, %v3066
        %v3068 = vpop.f32.mrf.mxu0
        %v3069 = vadd.f32 %v3055, %v3068
        %3070 = vdwg.mxu0
        %3071 = vmatpush.bf16.msra.mxu0 %v2450
        %3072 = vmatpush.bf16.msra.mxu0 %v2442
        %3073 = vmatpush.bf16.msra.mxu0 %v2434
        %3074 = vmatpush.bf16.msra.mxu0 %v2426
        %3075 = vmatpush.bf16.msra.mxu0 %v2418
        %3076 = vmatpush.bf16.msra.mxu0 %v2410
        %3077 = vmatpush.bf16.msra.mxu0 %v2402
        %3078 = vmatpush.bf16.msra.mxu0 %v2394
        %3079 = vmatmul.bf16.gmra.mxu0 %v1345
        %v3080 = vpop.f32.mrf.mxu0
        %v3081 = vadd.f32 %v1610, %v3080
        %v3082 = vpop.f32.mrf.mxu0
        %v3083 = vadd.f32 %v1610, %v3082
        %3084 = vdwg.mxu0
        %3085 = vmatpush.bf16.msra.mxu0 %v2514
        %3086 = vmatpush.bf16.msra.mxu0 %v2506
        %3087 = vmatpush.bf16.msra.mxu0 %v2498
        %3088 = vmatpush.bf16.msra.mxu0 %v2490
        %3089 = vmatpush.bf16.msra.mxu0 %v2482
        %3090 = vmatpush.bf16.msra.mxu0 %v2474
        %3091 = vmatpush.bf16.msra.mxu0 %v2466
        %3092 = vmatpush.bf16.msra.mxu0 %v2458
        %3093 = vmatmul.bf16.gmra.mxu0 %v1346
        %v3094 = vpop.f32.mrf.mxu0
        %v3095 = vadd.f32 %v3081, %v3094
        %v3096 = vpop.f32.mrf.mxu0
        %v3097 = vadd.f32 %v3083, %v3096
        %3098 = vdwg.mxu0
        %3099 = vmatpush.bf16.msra.mxu0 %v2578
        %3100 = vmatpush.bf16.msra.mxu0 %v2570
        %3101 = vmatpush.bf16.msra.mxu0 %v2562
        %3102 = vmatpush.bf16.msra.mxu0 %v2554
        %3103 = vmatpush.bf16.msra.mxu0 %v2546
        %3104 = vmatpush.bf16.msra.mxu0 %v2538
        %3105 = vmatpush.bf16.msra.mxu0 %v2530
        %3106 = vmatpush.bf16.msra.mxu0 %v2522
        %3107 = vmatmul.bf16.gmra.mxu0 %v1347
        %v3108 = vpop.f32.mrf.mxu0
        %v3109 = vadd.f32 %v3095, %v3108
        %v3110 = vpop.f32.mrf.mxu0
        %v3111 = vadd.f32 %v3097, %v3110
        %3112 = vdwg.mxu0
        %3113 = vmatpush.bf16.msra.mxu0 %v2642
        %3114 = vmatpush.bf16.msra.mxu0 %v2634
        %3115 = vmatpush.bf16.msra.mxu0 %v2626
        %3116 = vmatpush.bf16.msra.mxu0 %v2618
        %3117 = vmatpush.bf16.msra.mxu0 %v2610
        %3118 = vmatpush.bf16.msra.mxu0 %v2602
        %3119 = vmatpush.bf16.msra.mxu0 %v2594
        %3120 = vmatpush.bf16.msra.mxu0 %v2586
        %3121 = vmatmul.bf16.gmra.mxu0 %v1348
        %v3122 = vpop.f32.mrf.mxu0
        %v3123 = vadd.f32 %v3109, %v3122
        %v3124 = vpop.f32.mrf.mxu0
        %v3125 = vadd.f32 %v3111, %v3124
        %3126 = vdwg.mxu0
        %3127 = vmatpush.bf16.msra.mxu0 %v2451
        %3128 = vmatpush.bf16.msra.mxu0 %v2443
        %3129 = vmatpush.bf16.msra.mxu0 %v2435
        %3130 = vmatpush.bf16.msra.mxu0 %v2427
        %3131 = vmatpush.bf16.msra.mxu0 %v2419
        %3132 = vmatpush.bf16.msra.mxu0 %v2411
        %3133 = vmatpush.bf16.msra.mxu0 %v2403
        %3134 = vmatpush.bf16.msra.mxu0 %v2395
        %3135 = vmatmul.bf16.gmra.mxu0 %v1345
        %v3136 = vpop.f32.mrf.mxu0
        %v3137 = vadd.f32 %v1611, %v3136
        %v3138 = vpop.f32.mrf.mxu0
        %v3139 = vadd.f32 %v1611, %v3138
        %3140 = vdwg.mxu0
        %3141 = vmatpush.bf16.msra.mxu0 %v2515
        %3142 = vmatpush.bf16.msra.mxu0 %v2507
        %3143 = vmatpush.bf16.msra.mxu0 %v2499
        %3144 = vmatpush.bf16.msra.mxu0 %v2491
        %3145 = vmatpush.bf16.msra.mxu0 %v2483
        %3146 = vmatpush.bf16.msra.mxu0 %v2475
        %3147 = vmatpush.bf16.msra.mxu0 %v2467
        %3148 = vmatpush.bf16.msra.mxu0 %v2459
        %3149 = vmatmul.bf16.gmra.mxu0 %v1346
        %v3150 = vpop.f32.mrf.mxu0
        %v3151 = vadd.f32 %v3137, %v3150
        %v3152 = vpop.f32.mrf.mxu0
        %v3153 = vadd.f32 %v3139, %v3152
        %3154 = vdwg.mxu0
        %3155 = vmatpush.bf16.msra.mxu0 %v2579
        %3156 = vmatpush.bf16.msra.mxu0 %v2571
        %3157 = vmatpush.bf16.msra.mxu0 %v2563
        %3158 = vmatpush.bf16.msra.mxu0 %v2555
        %3159 = vmatpush.bf16.msra.mxu0 %v2547
        %3160 = vmatpush.bf16.msra.mxu0 %v2539
        %3161 = vmatpush.bf16.msra.mxu0 %v2531
        %3162 = vmatpush.bf16.msra.mxu0 %v2523
        %3163 = vmatmul.bf16.gmra.mxu0 %v1347
        %v3164 = vpop.f32.mrf.mxu0
        %v3165 = vadd.f32 %v3151, %v3164
        %v3166 = vpop.f32.mrf.mxu0
        %v3167 = vadd.f32 %v3153, %v3166
        %3168 = vdwg.mxu0
        %3169 = vmatpush.bf16.msra.mxu0 %v2643
        %3170 = vmatpush.bf16.msra.mxu0 %v2635
        %3171 = vmatpush.bf16.msra.mxu0 %v2627
        %3172 = vmatpush.bf16.msra.mxu0 %v2619
        %3173 = vmatpush.bf16.msra.mxu0 %v2611
        %3174 = vmatpush.bf16.msra.mxu0 %v2603
        %3175 = vmatpush.bf16.msra.mxu0 %v2595
        %3176 = vmatpush.bf16.msra.mxu0 %v2587
        %3177 = vmatmul.bf16.gmra.mxu0 %v1348
        %v3178 = vpop.f32.mrf.mxu0
        %v3179 = vadd.f32 %v3165, %v3178
        %v3180 = vpop.f32.mrf.mxu0
        %v3181 = vadd.f32 %v3167, %v3180
        %3182 = vdwg.mxu0
        %3183 = vmatpush.bf16.msra.mxu0 %v2452
        %3184 = vmatpush.bf16.msra.mxu0 %v2444
        %3185 = vmatpush.bf16.msra.mxu0 %v2436
        %3186 = vmatpush.bf16.msra.mxu0 %v2428
        %3187 = vmatpush.bf16.msra.mxu0 %v2420
        %3188 = vmatpush.bf16.msra.mxu0 %v2412
        %3189 = vmatpush.bf16.msra.mxu0 %v2404
        %3190 = vmatpush.bf16.msra.mxu0 %v2396
        %3191 = vmatmul.bf16.gmra.mxu0 %v1345
        %v3192 = vpop.f32.mrf.mxu0
        %v3193 = vadd.f32 %v1612, %v3192
        %v3194 = vpop.f32.mrf.mxu0
        %v3195 = vadd.f32 %v1612, %v3194
        %3196 = vdwg.mxu0
        %3197 = vmatpush.bf16.msra.mxu0 %v2516
        %3198 = vmatpush.bf16.msra.mxu0 %v2508
        %3199 = vmatpush.bf16.msra.mxu0 %v2500
        %3200 = vmatpush.bf16.msra.mxu0 %v2492
        %3201 = vmatpush.bf16.msra.mxu0 %v2484
        %3202 = vmatpush.bf16.msra.mxu0 %v2476
        %3203 = vmatpush.bf16.msra.mxu0 %v2468
        %3204 = vmatpush.bf16.msra.mxu0 %v2460
        %3205 = vmatmul.bf16.gmra.mxu0 %v1346
        %v3206 = vpop.f32.mrf.mxu0
        %v3207 = vadd.f32 %v3193, %v3206
        %v3208 = vpop.f32.mrf.mxu0
        %v3209 = vadd.f32 %v3195, %v3208
        %3210 = vdwg.mxu0
        %3211 = vmatpush.bf16.msra.mxu0 %v2580
        %3212 = vmatpush.bf16.msra.mxu0 %v2572
        %3213 = vmatpush.bf16.msra.mxu0 %v2564
        %3214 = vmatpush.bf16.msra.mxu0 %v2556
        %3215 = vmatpush.bf16.msra.mxu0 %v2548
        %3216 = vmatpush.bf16.msra.mxu0 %v2540
        %3217 = vmatpush.bf16.msra.mxu0 %v2532
        %3218 = vmatpush.bf16.msra.mxu0 %v2524
        %3219 = vmatmul.bf16.gmra.mxu0 %v1347
        %v3220 = vpop.f32.mrf.mxu0
        %v3221 = vadd.f32 %v3207, %v3220
        %v3222 = vpop.f32.mrf.mxu0
        %v3223 = vadd.f32 %v3209, %v3222
        %3224 = vdwg.mxu0
        %3225 = vmatpush.bf16.msra.mxu0 %v2644
        %3226 = vmatpush.bf16.msra.mxu0 %v2636
        %3227 = vmatpush.bf16.msra.mxu0 %v2628
        %3228 = vmatpush.bf16.msra.mxu0 %v2620
        %3229 = vmatpush.bf16.msra.mxu0 %v2612
        %3230 = vmatpush.bf16.msra.mxu0 %v2604
        %3231 = vmatpush.bf16.msra.mxu0 %v2596
        %3232 = vmatpush.bf16.msra.mxu0 %v2588
        %3233 = vmatmul.bf16.gmra.mxu0 %v1348
        %v3234 = vpop.f32.mrf.mxu0
        %v3235 = vadd.f32 %v3221, %v3234
        %v3236 = vpop.f32.mrf.mxu0
        %v3237 = vadd.f32 %v3223, %v3236
        %3238 = vdwg.mxu0
        %3239 = vmatpush.bf16.msra.mxu0 %v2453
        %3240 = vmatpush.bf16.msra.mxu0 %v2445
        %3241 = vmatpush.bf16.msra.mxu0 %v2437
        %3242 = vmatpush.bf16.msra.mxu0 %v2429
        %3243 = vmatpush.bf16.msra.mxu0 %v2421
        %3244 = vmatpush.bf16.msra.mxu0 %v2413
        %3245 = vmatpush.bf16.msra.mxu0 %v2405
        %3246 = vmatpush.bf16.msra.mxu0 %v2397
        %3247 = vmatmul.bf16.gmra.mxu0 %v1345
        %v3248 = vpop.f32.mrf.mxu0
        %v3249 = vadd.f32 %v1613, %v3248
        %v3250 = vpop.f32.mrf.mxu0
        %v3251 = vadd.f32 %v1613, %v3250
        %3252 = vdwg.mxu0
        %3253 = vmatpush.bf16.msra.mxu0 %v2517
        %3254 = vmatpush.bf16.msra.mxu0 %v2509
        %3255 = vmatpush.bf16.msra.mxu0 %v2501
        %3256 = vmatpush.bf16.msra.mxu0 %v2493
        %3257 = vmatpush.bf16.msra.mxu0 %v2485
        %3258 = vmatpush.bf16.msra.mxu0 %v2477
        %3259 = vmatpush.bf16.msra.mxu0 %v2469
        %3260 = vmatpush.bf16.msra.mxu0 %v2461
        %3261 = vmatmul.bf16.gmra.mxu0 %v1346
        %v3262 = vpop.f32.mrf.mxu0
        %v3263 = vadd.f32 %v3249, %v3262
        %v3264 = vpop.f32.mrf.mxu0
        %v3265 = vadd.f32 %v3251, %v3264
        %3266 = vdwg.mxu0
        %3267 = vmatpush.bf16.msra.mxu0 %v2581
        %3268 = vmatpush.bf16.msra.mxu0 %v2573
        %3269 = vmatpush.bf16.msra.mxu0 %v2565
        %3270 = vmatpush.bf16.msra.mxu0 %v2557
        %3271 = vmatpush.bf16.msra.mxu0 %v2549
        %3272 = vmatpush.bf16.msra.mxu0 %v2541
        %3273 = vmatpush.bf16.msra.mxu0 %v2533
        %3274 = vmatpush.bf16.msra.mxu0 %v2525
        %3275 = vmatmul.bf16.gmra.mxu0 %v1347
        %v3276 = vpop.f32.mrf.mxu0
        %v3277 = vadd.f32 %v3263, %v3276
        %v3278 = vpop.f32.mrf.mxu0
        %v3279 = vadd.f32 %v3265, %v3278
        %3280 = vdwg.mxu0
        %3281 = vmatpush.bf16.msra.mxu0 %v2645
        %3282 = vmatpush.bf16.msra.mxu0 %v2637
        %3283 = vmatpush.bf16.msra.mxu0 %v2629
        %3284 = vmatpush.bf16.msra.mxu0 %v2621
        %3285 = vmatpush.bf16.msra.mxu0 %v2613
        %3286 = vmatpush.bf16.msra.mxu0 %v2605
        %3287 = vmatpush.bf16.msra.mxu0 %v2597
        %3288 = vmatpush.bf16.msra.mxu0 %v2589
        %3289 = vmatmul.bf16.gmra.mxu0 %v1348
        %v3290 = vpop.f32.mrf.mxu0
        %v3291 = vadd.f32 %v3277, %v3290
        %v3292 = vpop.f32.mrf.mxu0
        %v3293 = vadd.f32 %v3279, %v3292
        %3294 = vdwg.mxu0
        %3295 = vmatpush.bf16.msra.mxu0 %v2454
        %3296 = vmatpush.bf16.msra.mxu0 %v2446
        %3297 = vmatpush.bf16.msra.mxu0 %v2438
        %3298 = vmatpush.bf16.msra.mxu0 %v2430
        %3299 = vmatpush.bf16.msra.mxu0 %v2422
        %3300 = vmatpush.bf16.msra.mxu0 %v2414
        %3301 = vmatpush.bf16.msra.mxu0 %v2406
        %3302 = vmatpush.bf16.msra.mxu0 %v2398
        %3303 = vmatmul.bf16.gmra.mxu0 %v1345
        %v3304 = vpop.f32.mrf.mxu0
        %v3305 = vadd.f32 %v1614, %v3304
        %v3306 = vpop.f32.mrf.mxu0
        %v3307 = vadd.f32 %v1614, %v3306
        %3308 = vdwg.mxu0
        %3309 = vmatpush.bf16.msra.mxu0 %v2518
        %3310 = vmatpush.bf16.msra.mxu0 %v2510
        %3311 = vmatpush.bf16.msra.mxu0 %v2502
        %3312 = vmatpush.bf16.msra.mxu0 %v2494
        %3313 = vmatpush.bf16.msra.mxu0 %v2486
        %3314 = vmatpush.bf16.msra.mxu0 %v2478
        %3315 = vmatpush.bf16.msra.mxu0 %v2470
        %3316 = vmatpush.bf16.msra.mxu0 %v2462
        %3317 = vmatmul.bf16.gmra.mxu0 %v1346
        %v3318 = vpop.f32.mrf.mxu0
        %v3319 = vadd.f32 %v3305, %v3318
        %v3320 = vpop.f32.mrf.mxu0
        %v3321 = vadd.f32 %v3307, %v3320
        %3322 = vdwg.mxu0
        %3323 = vmatpush.bf16.msra.mxu0 %v2582
        %3324 = vmatpush.bf16.msra.mxu0 %v2574
        %3325 = vmatpush.bf16.msra.mxu0 %v2566
        %3326 = vmatpush.bf16.msra.mxu0 %v2558
        %3327 = vmatpush.bf16.msra.mxu0 %v2550
        %3328 = vmatpush.bf16.msra.mxu0 %v2542
        %3329 = vmatpush.bf16.msra.mxu0 %v2534
        %3330 = vmatpush.bf16.msra.mxu0 %v2526
        %3331 = vmatmul.bf16.gmra.mxu0 %v1347
        %v3332 = vpop.f32.mrf.mxu0
        %v3333 = vadd.f32 %v3319, %v3332
        %v3334 = vpop.f32.mrf.mxu0
        %v3335 = vadd.f32 %v3321, %v3334
        %3336 = vdwg.mxu0
        %3337 = vmatpush.bf16.msra.mxu0 %v2646
        %3338 = vmatpush.bf16.msra.mxu0 %v2638
        %3339 = vmatpush.bf16.msra.mxu0 %v2630
        %3340 = vmatpush.bf16.msra.mxu0 %v2622
        %3341 = vmatpush.bf16.msra.mxu0 %v2614
        %3342 = vmatpush.bf16.msra.mxu0 %v2606
        %3343 = vmatpush.bf16.msra.mxu0 %v2598
        %3344 = vmatpush.bf16.msra.mxu0 %v2590
        %3345 = vmatmul.bf16.gmra.mxu0 %v1348
        %v3346 = vpop.f32.mrf.mxu0
        %v3347 = vadd.f32 %v3333, %v3346
        %v3348 = vpop.f32.mrf.mxu0
        %v3349 = vadd.f32 %v3335, %v3348
        %3350 = vdwg.mxu0
        %v3351 = vadd.f32 %v2955, %v3011
        %v3352 = vadd.f32 %v3351, %v3067
        %v3353 = vadd.f32 %v3352, %v3123
        %v3354 = vadd.f32 %v3353, %v3179
        %v3355 = vadd.f32 %v3354, %v3235
        %v3356 = vadd.f32 %v3355, %v3291
        %v3357 = vadd.f32 %v3356, %v3347
        %3358 = vadd.xlane.f32.xlu0 %v3357
        %v3359 = vpop.xlane.xlu0 %3358
        %v3360 = vadd.f32 %v2957, %v3013
        %v3361 = vadd.f32 %v3360, %v3069
        %v3362 = vadd.f32 %v3361, %v3125
        %v3363 = vadd.f32 %v3362, %v3181
        %v3364 = vadd.f32 %v3363, %v3237
        %v3365 = vadd.f32 %v3364, %v3293
        %v3366 = vadd.f32 %v3365, %v3349
        %3367 = vadd.xlane.f32.xlu0 %v3366
        %v3368 = vpop.xlane.xlu0 %3367
        %v3369 = vmul.f32 %v2955, %v2955
        %v3370 = vmul.f32 %v3011, %v3011
        %v3371 = vmul.f32 %v3067, %v3067
        %v3372 = vmul.f32 %v3123, %v3123
        %v3373 = vmul.f32 %v3179, %v3179
        %v3374 = vmul.f32 %v3235, %v3235
        %v3375 = vmul.f32 %v3291, %v3291
        %v3376 = vmul.f32 %v3347, %v3347
        %v3377 = vmul.f32 %v2957, %v2957
        %v3378 = vmul.f32 %v3013, %v3013
        %v3379 = vmul.f32 %v3069, %v3069
        %v3380 = vmul.f32 %v3125, %v3125
        %v3381 = vmul.f32 %v3181, %v3181
        %v3382 = vmul.f32 %v3237, %v3237
        %v3383 = vmul.f32 %v3293, %v3293
        %v3384 = vmul.f32 %v3349, %v3349
        %v3385 = vadd.f32 %v3369, %v3370
        %v3386 = vadd.f32 %v3385, %v3371
        %v3387 = vadd.f32 %v3386, %v3372
        %v3388 = vadd.f32 %v3387, %v3373
        %v3389 = vadd.f32 %v3388, %v3374
        %v3390 = vadd.f32 %v3389, %v3375
        %v3391 = vadd.f32 %v3390, %v3376
        %3392 = vadd.xlane.f32.xlu0 %v3391
        %v3393 = vpop.xlane.xlu0 %3392
        %v3394 = vadd.f32 %v3377, %v3378
        %v3395 = vadd.f32 %v3394, %v3379
        %v3396 = vadd.f32 %v3395, %v3380
        %v3397 = vadd.f32 %v3396, %v3381
        %v3398 = vadd.f32 %v3397, %v3382
        %v3399 = vadd.f32 %v3398, %v3383
        %v3400 = vadd.f32 %v3399, %v3384
        %3401 = vadd.xlane.f32.xlu0 %v3400
        %v3402 = vpop.xlane.xlu0 %3401
        %v3403 = vmul.f32 %v3359, 0.0010224949
        %v3404 = vmul.f32 %v3368, 0.0010224949
        %v3405 = vmul.f32 %v3393, 0.0010224949
        %v3406 = vmul.f32 %v3402, 0.0010224949
        %v3407 = vmul.f32 %v3403, %v3403
        %v3408 = vmul.f32 %v3404, %v3404
        %v3409 = vsub.f32 %v3405, %v3407
        %v3410 = vsub.f32 %v3406, %v3408
        %v3411 = vsub.f32 %v2955, %v3403
        %v3412 = vsub.f32 %v3011, %v3403
        %v3413 = vsub.f32 %v3067, %v3403
        %v3414 = vsub.f32 %v3123, %v3403
        %v3415 = vsub.f32 %v3179, %v3403
        %v3416 = vsub.f32 %v3235, %v3403
        %v3417 = vsub.f32 %v3291, %v3403
        %v3418 = vsub.f32 %v3347, %v3403
        %v3419 = vsub.f32 %v2957, %v3404
        %v3420 = vsub.f32 %v3013, %v3404
        %v3421 = vsub.f32 %v3069, %v3404
        %v3422 = vsub.f32 %v3125, %v3404
        %v3423 = vsub.f32 %v3181, %v3404
        %v3424 = vsub.f32 %v3237, %v3404
        %v3425 = vsub.f32 %v3293, %v3404
        %v3426 = vsub.f32 %v3349, %v3404
        %v3427 = vadd.f32 %v3409, 1e-05
        %v3428 = vadd.f32 %v3410, 1e-05
        %v3429 = vrsqrt.pop %v3427
        %v3430 = vmul.f32 %v3429, %v3427
        %v3431 = vmul.f32 %v3430, %v3429
        %v3432 = vmul.f32 0.5, %v3431
        %v3433 = vsub.f32 1.5, %v3432
        %v3434 = vmul.f32 %v3429, %v3433
        %vm3435 = vweird.f32 %v3427
        %vm3436 = vweird.f32 %v3429
        %vm3437 = vmor %vm3435, %vm3436
        %v3438 = vsel %vm3437, %v3429, %v3434
        %v3439 = vrsqrt.pop %v3428
        %v3440 = vmul.f32 %v3439, %v3428
        %v3441 = vmul.f32 %v3440, %v3439
        %v3442 = vmul.f32 0.5, %v3441
        %v3443 = vsub.f32 1.5, %v3442
        %v3444 = vmul.f32 %v3439, %v3443
        %vm3445 = vweird.f32 %v3428
        %vm3446 = vweird.f32 %v3439
        %vm3447 = vmor %vm3445, %vm3446
        %v3448 = vsel %vm3447, %v3439, %v3444
        %v3449 = vmul.f32 %v3411, %v3438
        %v3450 = vmul.f32 %v3412, %v3438
        %v3451 = vmul.f32 %v3413, %v3438
        %v3452 = vmul.f32 %v3414, %v3438
        %v3453 = vmul.f32 %v3415, %v3438
        %v3454 = vmul.f32 %v3416, %v3438
        %v3455 = vmul.f32 %v3417, %v3438
        %v3456 = vmul.f32 %v3418, %v3438
        %v3457 = vmul.f32 %v3419, %v3448
        %v3458 = vmul.f32 %v3420, %v3448
        %v3459 = vmul.f32 %v3421, %v3448
        %v3460 = vmul.f32 %v3422, %v3448
        %v3461 = vmul.f32 %v3423, %v3448
        %v3462 = vmul.f32 %v3424, %v3448
        %v3463 = vmul.f32 %v3425, %v3448
        %v3464 = vmul.f32 %v3426, %v3448
        %v3465 = vld [vmem:[%s11] sm:$0xff]
        %v3467 = vperm.slane %v3465, 0
        %v3468 = vperm.slane %v3465, 1
        %v3469 = vperm.slane %v3465, 2
        %v3470 = vperm.slane %v3465, 3
        %v3471 = vperm.slane %v3465, 4
        %v3472 = vperm.slane %v3465, 5
        %v3473 = vperm.slane %v3465, 6
        %v3474 = vperm.slane %v3465, 7
        %v3483 = vmul.f32 %v3449, %v3467
        %v3484 = vmul.f32 %v3450, %v3468
        %v3485 = vmul.f32 %v3451, %v3469
        %v3486 = vmul.f32 %v3452, %v3470
        %v3487 = vmul.f32 %v3453, %v3471
        %v3488 = vmul.f32 %v3454, %v3472
        %v3489 = vmul.f32 %v3455, %v3473
        %v3490 = vmul.f32 %v3456, %v3474
        %v3491 = vmul.f32 %v3457, %v3467
        %v3492 = vmul.f32 %v3458, %v3468
        %v3493 = vmul.f32 %v3459, %v3469
        %v3494 = vmul.f32 %v3460, %v3470
        %v3495 = vmul.f32 %v3461, %v3471
        %v3496 = vmul.f32 %v3462, %v3472
        %v3497 = vmul.f32 %v3463, %v3473
        %v3498 = vmul.f32 %v3464, %v3474
        %v3499 = vld [vmem:[%s12] sm:$0xff]
        %v3501 = vperm.slane %v3499, 0
        %v3502 = vperm.slane %v3499, 1
        %v3503 = vperm.slane %v3499, 2
        %v3504 = vperm.slane %v3499, 3
        %v3505 = vperm.slane %v3499, 4
        %v3506 = vperm.slane %v3499, 5
        %v3507 = vperm.slane %v3499, 6
        %v3508 = vperm.slane %v3499, 7
        %v3517 = vadd.f32 %v3483, %v3501
        %v3518 = vadd.f32 %v3484, %v3502
        %v3519 = vadd.f32 %v3485, %v3503
        %v3520 = vadd.f32 %v3486, %v3504
        %v3521 = vadd.f32 %v3487, %v3505
        %v3522 = vadd.f32 %v3488, %v3506
        %v3523 = vadd.f32 %v3489, %v3507
        %v3524 = vadd.f32 %v3490, %v3508
        %v3525 = vadd.f32 %v3491, %v3501
        %v3526 = vadd.f32 %v3492, %v3502
        %v3527 = vadd.f32 %v3493, %v3503
        %v3528 = vadd.f32 %v3494, %v3504
        %v3529 = vadd.f32 %v3495, %v3505
        %v3530 = vadd.f32 %v3496, %v3506
        %v3531 = vadd.f32 %v3497, %v3507
        %v3532 = vadd.f32 %v3498, %v3508
        %v3533 = vmul.f32 %v3517, 0.01
        %v3534 = vmul.f32 %v3518, 0.01
        %v3535 = vmul.f32 %v3519, 0.01
        %v3536 = vmul.f32 %v3520, 0.01
        %v3537 = vmul.f32 %v3521, 0.01
        %v3538 = vmul.f32 %v3522, 0.01
        %v3539 = vmul.f32 %v3523, 0.01
        %v3540 = vmul.f32 %v3524, 0.01
        %v3541 = vmul.f32 %v3525, 0.01
        %v3542 = vmul.f32 %v3526, 0.01
        %v3543 = vmul.f32 %v3527, 0.01
        %v3544 = vmul.f32 %v3528, 0.01
        %v3545 = vmul.f32 %v3529, 0.01
        %v3546 = vmul.f32 %v3530, 0.01
        %v3547 = vmul.f32 %v3531, 0.01
        %v3548 = vmul.f32 %v3532, 0.01
        %v3549 = vmax.f32 %v3517, %v3533
        %v3550 = vmax.f32 %v3518, %v3534
        %v3551 = vmax.f32 %v3519, %v3535
        %v3552 = vmax.f32 %v3520, %v3536
        %v3553 = vmax.f32 %v3521, %v3537
        %v3554 = vmax.f32 %v3522, %v3538
        %v3555 = vmax.f32 %v3523, %v3539
        %v3556 = vmax.f32 %v3524, %v3540
        %v3557 = vmax.f32 %v3525, %v3541
        %v3558 = vmax.f32 %v3526, %v3542
        %v3559 = vmax.f32 %v3527, %v3543
        %v3560 = vmax.f32 %v3528, %v3544
        %v3561 = vmax.f32 %v3529, %v3545
        %v3562 = vmax.f32 %v3530, %v3546
        %v3563 = vmax.f32 %v3531, %v3547
        %v3564 = vmax.f32 %v3532, %v3548
        %3565 = vst [vmem:[%s494] sm:$0xff] %v3549
        %3566 = vst [vmem:[%s494 + $0x8] sm:$0xff] %v3550
        %3567 = vst [vmem:[%s494 + $0x10] sm:$0xff] %v3551
        %3568 = vst [vmem:[%s494 + $0x18] sm:$0xff] %v3552
        %3569 = vst [vmem:[%s494 + $0x20] sm:$0xff] %v3553
        %3570 = vst [vmem:[%s494 + $0x28] sm:$0xff] %v3554
        %3571 = vst [vmem:[%s494 + $0x30] sm:$0xff] %v3555
        %3572 = vst [vmem:[%s494 + $0x38] sm:$0xff] %v3556
        %3573 = vst [vmem:[%s494 + $0x40] sm:$0xff] %v3557
        %3574 = vst [vmem:[%s494 + $0x48] sm:$0xff] %v3558
        %3575 = vst [vmem:[%s494 + $0x50] sm:$0xff] %v3559
        %3576 = vst [vmem:[%s494 + $0x58] sm:$0xff] %v3560
        %3577 = vst [vmem:[%s494 + $0x60] sm:$0xff] %v3561
        %3578 = vst [vmem:[%s494 + $0x68] sm:$0xff] %v3562
        %3579 = vst [vmem:[%s494 + $0x70] sm:$0xff] %v3563
        %3580 = vst [vmem:[%s494 + $0x78] sm:$0xff] %v3564
        %s3581 = smul.u32 2, %s26
        %p3582 = scmp.lt.s32.totalorder %s3581, 3
        %s3583 = scalar_select %p3582, %s3581, 3
        %s3584 = smul.addr %s3583, 8
        %s3585 = smul.addr %s3584, 8
        %s3586 = scalar_lea.vmem %s13, %s3585
        // Predicated region
        $region85: #{mlp_forward.1} parent=71 // pred_check
          %p3587 = pneg %p322
        $region86: #{mlp_forward.1} parent=71 // pred_check_branch
          %3589 = sbr.rel (%p3587) target = $region88
        $region87: #{mlp_forward.1} parent=71 // pred_region
          %s3590 = smul.u32 2, %s26
        $region88: #{mlp_forward.1} parent=71 // pred_fallthru
          _
      $region72: #{mlp_forward.1} parent=5 // pred_fallthru
        _
      %p3591 = scmp.le.s32.totalorder 2, %s21
      // Predicated region
      $region89: #{mlp_forward.1} parent=5 // pred_check
        %p3592 = pneg %p3591
      $region90: #{mlp_forward.1} parent=5 // pred_check_branch
        %3594 = sbr.rel (%p3592) target = $region92
      $region91: #{mlp_forward.1} parent=5 // pred_region
        %s3595 = ssub.s32 %s21, 2
        // Predicated region
        $region93: #{mlp_forward.1} parent=91 // pred_check
          %p3596 = pneg %p328
        $region94: #{mlp_forward.1} parent=91 // pred_check_branch
          %3598 = sbr.rel (%p3596) target = $region96
        $region95: #{mlp_forward.1} parent=91 // pred_region
          %s3599 = smul.u32 2, %s27
          %p3600 = scmp.lt.s32.totalorder %s3599, 3
          %s3601 = scalar_select %p3600, %s3599, 3
          %s3602 = smul.addr %s3601, 8
          %s3603 = smul.addr %s3602, 8
          %s3604 = scalar_lea.vmem %s13, %s3603
        $region96: #{mlp_forward.1} parent=91 // pred_fallthru
          _
      $region92: #{mlp_forward.1} parent=5 // pred_fallthru
        _
    $region6: #{mlp_forward.1} parent=1 // loop_footer
      %s25 = sadd.s32 1, %s21
    $region7: #{mlp_forward.1} parent=1 // loop_footer_branch
      %20 = sbr.rel target = $region3
    $region8: #{mlp_forward.1} parent=1 // loop_exit
      _
    %3605 = vsyncpa [#allocation3], 1
    %s3606 = scalar_lea.sflag [#allocation3], 1
    %3607 = vsyncpa %s3606, 1
    %3608 = vsyncpa [#allocation5], 1

</llo_original>
